<compile_context>
chip_gen: v7x
topology: tpu7x:2x2x1
jax: 0.10.0
libtpu: 0.0.40
codegen_flags: <defaults>
</compile_context>

<pallas_src>
import functools
import math

import jax
import jax.numpy as jnp
import numpy as np
from jax.experimental import pallas as pl
from jax.experimental.pallas import tpu as pltpu


# ----------------------------------------------------------------------------
# Fused forward kernel: grid = (batch_blocks, layers)
# ----------------------------------------------------------------------------
def _vit_kernel(
    patches_ref, pepb_ref, pw_ref,
    wqkv_ref, bqkv_ref, wo_ref, bo_ref, ln1g_ref, ln1b_ref,
    w1_ref, b1_ref, w2_ref, b2_ref, ln2g_ref, ln2b_ref,
    fcw_ref, fcb_ref,
    out_ref,
    x_ref,
    *, num_layers, num_heads, d_model, num_patches, batch_block, eps, mxu_dtype,
):
    D = d_model
    H = num_heads
    Dh = D // H
    P = num_patches
    B = batch_block
    l = pl.program_id(1)

    def mm(a, w):
        # MXU matmul: bf16 operands (weights pre-cast host-side), f32 accum.
        w = w if w.dtype == mxu_dtype else w.astype(mxu_dtype)
        return jnp.dot(a.astype(mxu_dtype), w, preferred_element_type=jnp.float32)

    def bmm(a, w):
        # Batched (leading dim) MXU matmul, f32 accumulation.
        return jax.lax.dot_general(
            a.astype(mxu_dtype), w.astype(mxu_dtype),
            (((2,), (1,)), ((0,), (0,))),
            preferred_element_type=jnp.float32)

    def layer_norm(y, g, b):
        mu = jnp.mean(y, axis=-1, keepdims=True)
        var = jnp.mean(jnp.square(y - mu), axis=-1, keepdims=True)
        return (y - mu) * jax.lax.rsqrt(var + eps) * g + b

    # --- patch embedding + positional encoding (first layer step only) ------
    @pl.when(l == 0)
    def _():
        patches = patches_ref[...].reshape(B * P, -1)           # (B*P, 3*p*p)
        emb = mm(patches, pw_ref[...])                          # (B*P, D)
        # pepb = positional encoding + patch-embed bias (folded host-side).
        x_ref[...] = emb + jnp.tile(pepb_ref[...], (B, 1))
        # TODO(synk): reference forward() discards the CLS-token concat
        # (output is re-assigned to positional_encoding(patches_embedded));
        # reproduced intentionally, so no CLS row is prepended here.

    x = x_ref[...]                                              # (B*P, D) f32

    # --- fused QKV projection over the whole batch block ---------------------
    # 1/sqrt(Dh) is already folded into the Q third of wqkv/bqkv.
    qkv = mm(x, wqkv_ref[0]) + bqkv_ref[0]                      # (B*P, 3D)
    wo_l = wo_ref[0]                                            # (H, Dh, D) bf16

    # --- per-image attention, all heads in one batched dot_general ----------
    attn_rows = []
    for b in range(B):                                          # static unroll
        r0 = b * P
        q = qkv[r0:r0 + P, 0 * D:1 * D]
        k = qkv[r0:r0 + P, 1 * D:2 * D]
        v = qkv[r0:r0 + P, 2 * D:3 * D]
        qh = jnp.stack([q[:, h * Dh:(h + 1) * Dh] for h in range(H)])  # (H,P,Dh)
        kh = jnp.stack([k[:, h * Dh:(h + 1) * Dh] for h in range(H)])
        vh = jnp.stack([v[:, h * Dh:(h + 1) * Dh] for h in range(H)])
        # scores: contract Dh, batch over heads (mask is all-ones -> none)
        s = jax.lax.dot_general(
            qh.astype(mxu_dtype), kh.astype(mxu_dtype),
            (((2,), (2,)), ((0,), (0,))),
            preferred_element_type=jnp.float32)                 # (H, P, P)
        m = jnp.max(s, axis=-1, keepdims=True)
        e = jnp.exp(s - m)
        prob = e * pl.reciprocal(jnp.sum(e, axis=-1, keepdims=True), approx=True)
        ctx = bmm(prob, vh)                                     # (H, P, Dh)
        # Out-projection with Wo pre-split per head -> no lane-dim concat.
        attn_rows.append(jnp.sum(bmm(ctx, wo_l), axis=0))       # (P, D)
    o = jnp.concatenate(attn_rows, axis=0) + bo_ref[0]          # (B*P, D)

    x = layer_norm(o + x, ln1g_ref[0], ln1b_ref[0])

    # --- FFN (Linear-ReLU-Linear) + residual + post-LN -----------------------
    hid = jnp.maximum(mm(x, w1_ref[0]) + b1_ref[0], 0.0)
    f = mm(hid, w2_ref[0]) + b2_ref[0]
    x = layer_norm(f + x, ln2g_ref[0], ln2b_ref[0])
    x_ref[...] = x

    # --- classification head on token 0 of every image (last layer only) ----
    @pl.when(l == num_layers - 1)
    def _():
        cls = jnp.concatenate([x[b * P:b * P + 1, :] for b in range(B)], axis=0)
        out_ref[0] = mm(cls, fcw_ref[...]) + fcb_ref[...]       # (B, Cpad) lane-dense


# ----------------------------------------------------------------------------
# Plain-JAX glue: patchify, PE table, parameter init / packing
# ----------------------------------------------------------------------------
def patchify(images, patch_dim, num_patches):
    """(N, 3, H, W) -> (N, num_patches, 3*p*p), matching torch unfold order."""
    N, C, Himg, Wimg = images.shape
    p = patch_dim
    nh, nw = Himg // p, Wimg // p
    x = images.reshape(N, C, nh, p, nw, p)
    x = x.transpose(0, 1, 2, 4, 3, 5)          # (N, C, nh, nw, p, p)
    x = x.reshape(N, C, num_patches, p * p)
    x = x.transpose(0, 2, 1, 3)                # (N, P, C, p*p)
    return x.reshape(N, num_patches, C * p * p)


def sinusoidal_pe(seq_len, d_model):
    pos = np.arange(seq_len, dtype=np.float32)[:, None]
    div = np.exp(
        np.arange(0, d_model, 2, dtype=np.float32) * (-math.log(10000.0) / d_model)
    )
    pe = np.zeros((seq_len, d_model), dtype=np.float32)
    pe[:, 0::2] = np.sin(pos * div)
    pe[:, 1::2] = np.cos(pos * div)
    return jnp.asarray(pe)


def init_params(key, patch_in, d_model, d_ff, num_layers, num_classes):
    std = 0.02
    L, D = num_layers, d_model

    def nrm(k, shape):
        return std * jax.random.normal(k, shape, dtype=jnp.float32)

    ks = jax.random.split(key, 6)
    return {
        "patch_w": nrm(ks[0], (patch_in, D)),
        "patch_b": jnp.zeros((1, D), jnp.float32),
        "fc_w": nrm(ks[1], (D, num_classes)),
        "fc_b": jnp.zeros((1, num_classes), jnp.float32),
        "cls_token": jnp.zeros((1, 1, D), jnp.float32),  # unused (fwd bug reproduced)
        # per-layer weights stacked along a leading L axis (streamed per layer)
        "wqkv": nrm(ks[2], (L, D, 3 * D)),
        "bqkv": jnp.zeros((L, 1, 3 * D), jnp.float32),
        "wo": nrm(ks[3], (L, D, D)),
        "bo": jnp.zeros((L, 1, D), jnp.float32),
        "ln1_g": jnp.ones((L, 1, D), jnp.float32),
        "ln1_b": jnp.zeros((L, 1, D), jnp.float32),
        "w1": nrm(ks[4], (L, D, d_ff)),
        "b1": jnp.zeros((L, 1, d_ff), jnp.float32),
        "w2": nrm(ks[5], (L, d_ff, D)),
        "b2": jnp.zeros((L, 1, D), jnp.float32),
        "ln2_g": jnp.ones((L, 1, D), jnp.float32),
        "ln2_b": jnp.zeros((L, 1, D), jnp.float32),
    }


def _pack_params(params, pe, *, d_model, num_heads, num_classes, cpad, mxu_dtype):
    """Fold scales/biases, split Wo per head, pad the head, cast weights to bf16."""
    D, H = d_model, num_heads
    Dh = D // H
    L = params["wqkv"].shape[0]
    scale = 1.0 / math.sqrt(Dh)

    # Fold 1/sqrt(Dh) into the Q third of the QKV weights/bias.
    qkv_scale = jnp.concatenate(
        [jnp.full((D,), scale, jnp.float32), jnp.ones((2 * D,), jnp.float32)])
    wqkv = (params["wqkv"] * qkv_scale).astype(mxu_dtype)       # (L, D, 3D)
    bqkv = params["bqkv"] * qkv_scale                           # (L, 1, 3D) f32

    # Out-projection pre-split per head: (L, D, D) -> (L, H, Dh, D).
    wo = params["wo"].reshape(L, H, Dh, D).astype(mxu_dtype)

    # Lane-dense classification head: zero-pad classes to a multiple of 128.
    fc_w = jnp.zeros((D, cpad), jnp.float32).at[:, :num_classes].set(params["fc_w"])
    fc_b = jnp.zeros((1, cpad), jnp.float32).at[:, :num_classes].set(params["fc_b"])

    return dict(
        pepb=pe + params["patch_b"],                            # PE + patch bias, f32
        patch_w=params["patch_w"].astype(mxu_dtype),
        wqkv=wqkv, bqkv=bqkv, wo=wo, bo=params["bo"],
        ln1_g=params["ln1_g"], ln1_b=params["ln1_b"],
        w1=params["w1"].astype(mxu_dtype), b1=params["b1"],
        w2=params["w2"].astype(mxu_dtype), b2=params["b2"],
        ln2_g=params["ln2_g"], ln2_b=params["ln2_b"],
        fc_w=fc_w.astype(mxu_dtype), fc_b=fc_b,
    )


def vit_forward(images, params, *, patch_dim, d_model, d_ff, num_heads,
                num_layers, num_patches, num_classes,
                batch_block=None, mxu_dtype=jnp.bfloat16):
    N = images.shape[0]
    P, D, L = num_patches, d_model, num_layers
    Dh = D // num_heads
    patch_in = 3 * patch_dim * patch_dim
    cpad = ((num_classes + 127) // 128) * 128                   # lane-dense logits

    # Pick the largest batch block that keeps >=2 parallel grid steps
    # (so a v7x megacore has work for both TensorCores) and a modest M.
    if batch_block is None:
        batch_block = 1
        for d in range(1, N + 1):
            if N % d == 0 and N // d >= 2 and d * P <= 1024:
                batch_block = d
    assert N % batch_block == 0
    n_blocks = N // batch_block

    patches = patchify(images, patch_dim, P)                    # (N, P, 3*p*p)
    pe = sinusoidal_pe(P, D)                                    # (P, D)
    packed = _pack_params(params, pe, d_model=D, num_heads=num_heads,
                          num_classes=num_classes, cpad=cpad, mxu_dtype=mxu_dtype)

    def const_spec(shape):                                      # whole array, resident
        r = len(shape)
        return pl.BlockSpec(shape, lambda b, l, _r=r: (0,) * _r)

    def layer_spec(shape):                                      # streamed per layer
        r = len(shape)
        return pl.BlockSpec((1,) + shape, lambda b, l, _r=r: (l,) + (0,) * _r)

    kernel = functools.partial(
        _vit_kernel,
        num_layers=L, num_heads=num_heads, d_model=D, num_patches=P,
        batch_block=batch_block, eps=1e-5, mxu_dtype=mxu_dtype,
    )
    # TODO(synk): d_model=32 uses 32/128 lanes of every vreg; padding d_model
    # to 128 would need masked LayerNorm statistics, so the toy config accepts
    # the lane waste (see perf review, v6e note).

    logits_padded = pl.pallas_call(
        kernel,
        out_shape=jax.ShapeDtypeStruct((n_blocks, batch_block, cpad), jnp.float32),
        grid=(n_blocks, L),
        in_specs=[
            pl.BlockSpec((batch_block, P, patch_in), lambda b, l: (b, 0, 0)),
            const_spec((P, D)),                                  # PE + patch bias
            const_spec((patch_in, D)),                           # patch embed W (bf16)
            layer_spec((D, 3 * D)), layer_spec((1, 3 * D)),      # QKV (scale folded)
            layer_spec((num_heads, Dh, D)), layer_spec((1, D)),  # out proj (per head)
            layer_spec((1, D)), layer_spec((1, D)),              # ln1
            layer_spec((D, d_ff)), layer_spec((1, d_ff)),        # ffn w1
            layer_spec((d_ff, D)), layer_spec((1, D)),           # ffn w2
            layer_spec((1, D)), layer_spec((1, D)),              # ln2
            const_spec((D, cpad)), const_spec((1, cpad)),        # fc head (padded)
        ],
        out_specs=pl.BlockSpec((1, batch_block, cpad), lambda b, l: (b, 0, 0)),
        scratch_shapes=[pltpu.VMEM((batch_block * P, D), jnp.float32)],
        compiler_params=pltpu.CompilerParams(
            dimension_semantics=("parallel", "arbitrary"),
            vmem_limit_bytes=32 * 1024 * 1024,
        ),
    )(
        patches, packed["pepb"], packed["patch_w"],
        packed["wqkv"], packed["bqkv"], packed["wo"], packed["bo"],
        packed["ln1_g"], packed["ln1_b"],
        packed["w1"], packed["b1"], packed["w2"], packed["b2"],
        packed["ln2_g"], packed["ln2_b"],
        packed["fc_w"], packed["fc_b"],
    )
    return logits_padded.reshape(N, cpad)[:, :num_classes]


if __name__ == "__main__":
    # Small shapes consistent with the module (batch chosen so batch-blocking
    # is exercised: batch_block=4 -> grid = (2, num_layers)).
    batch = 8
    img_hw = 16
    patch_dim = 4
    num_patches = (img_hw // patch_dim) ** 2      # 16
    d_model = 32
    d_ff = 64
    num_heads = 4
    num_layers = 2
    num_classes = 10
    patch_in = 3 * patch_dim * patch_dim          # 48

    key = jax.random.PRNGKey(0)
    k_img, k_par = jax.random.split(key)
    images = jax.random.normal(k_img, (batch, 3, img_hw, img_hw), dtype=jnp.float32)
    params = init_params(k_par, patch_in, d_model, d_ff, num_layers, num_classes)

    logits = vit_forward(
        images,
        params,
        patch_dim=patch_dim,
        d_model=d_model,
        d_ff=d_ff,
        num_heads=num_heads,
        num_layers=num_layers,
        num_patches=num_patches,
        num_classes=num_classes,
    )
    logits = jax.block_until_ready(logits)
    assert logits.shape == (batch, num_classes)
    assert bool(jnp.all(jnp.isfinite(logits)))
    print("KERNEL_OK")
</pallas_src>

<mosaic_0001>
module attributes {stable_mosaic.version = 11 : i64} {
  func.func @_vit_kernel(%arg0: i32, %arg1: i32, %arg2: memref<4x16x48xf32, #tpu.memory_space<vmem>>, %arg3: memref<16x32xf32, #tpu.memory_space<vmem>>, %arg4: memref<48x32xbf16, #tpu.memory_space<vmem>>, %arg5: memref<1x32x96xbf16, #tpu.memory_space<vmem>>, %arg6: memref<1x1x96xf32, #tpu.memory_space<vmem>>, %arg7: memref<1x4x8x32xbf16, #tpu.memory_space<vmem>>, %arg8: memref<1x1x32xf32, #tpu.memory_space<vmem>>, %arg9: memref<1x1x32xf32, #tpu.memory_space<vmem>>, %arg10: memref<1x1x32xf32, #tpu.memory_space<vmem>>, %arg11: memref<1x32x64xbf16, #tpu.memory_space<vmem>>, %arg12: memref<1x1x64xf32, #tpu.memory_space<vmem>>, %arg13: memref<1x64x32xbf16, #tpu.memory_space<vmem>>, %arg14: memref<1x1x32xf32, #tpu.memory_space<vmem>>, %arg15: memref<1x1x32xf32, #tpu.memory_space<vmem>>, %arg16: memref<1x1x32xf32, #tpu.memory_space<vmem>>, %arg17: memref<32x128xbf16, #tpu.memory_space<vmem>>, %arg18: memref<1x128xf32, #tpu.memory_space<vmem>>, %arg19: memref<1x4x128xf32, #tpu.memory_space<vmem>>, %arg20: memref<64x32xf32, #tpu.memory_space<vmem>>) attributes {dimension_semantics = [#tpu.dimension_semantics<parallel>, #tpu.dimension_semantics<arbitrary>], iteration_bounds = array<i64: 2, 2>, scalar_prefetch = 0 : i64, scratch_operands = 1 : i64, tpu.core_type = #tpu.core_type<tc>, window_params = [{transform_indices = @transform_0, window_bounds = array<i64: 4, 16, 48>}, {pipeline_mode = #tpu.pipeline_mode<synchronous>, transform_indices = @transform_1, window_bounds = array<i64: 16, 32>}, {pipeline_mode = #tpu.pipeline_mode<synchronous>, transform_indices = @transform_2, window_bounds = array<i64: 48, 32>}, {transform_indices = @transform_3, window_bounds = array<i64: 1, 32, 96>}, {transform_indices = @transform_4, window_bounds = array<i64: 1, 1, 96>}, {transform_indices = @transform_5, window_bounds = array<i64: 1, 4, 8, 32>}, {transform_indices = @transform_6, window_bounds = array<i64: 1, 1, 32>}, {transform_indices = @transform_7, window_bounds = array<i64: 1, 1, 32>}, {transform_indices = @transform_8, window_bounds = array<i64: 1, 1, 32>}, {transform_indices = @transform_9, window_bounds = array<i64: 1, 32, 64>}, {transform_indices = @transform_10, window_bounds = array<i64: 1, 1, 64>}, {transform_indices = @transform_11, window_bounds = array<i64: 1, 64, 32>}, {transform_indices = @transform_12, window_bounds = array<i64: 1, 1, 32>}, {transform_indices = @transform_13, window_bounds = array<i64: 1, 1, 32>}, {transform_indices = @transform_14, window_bounds = array<i64: 1, 1, 32>}, {pipeline_mode = #tpu.pipeline_mode<synchronous>, transform_indices = @transform_15, window_bounds = array<i64: 32, 128>}, {pipeline_mode = #tpu.pipeline_mode<synchronous>, transform_indices = @transform_16, window_bounds = array<i64: 1, 128>}, {transform_indices = @transform_17, window_bounds = array<i64: 1, 4, 128>}]} {
    %c0_i32 = arith.constant 0 : i32
    %0 = arith.cmpi eq, %arg1, %c0_i32 : i32
    %1 = arith.extui %0 : i1 to i32
    %c0_i32_0 = arith.constant 0 : i32
    %2 = arith.cmpi ne, %1, %c0_i32_0 : i32
    scf.if %2 {
      %c0_79 = arith.constant 0 : index
      %c0_80 = arith.constant 0 : index
      %c0_81 = arith.constant 0 : index
      %291 = vector.load %arg2[%c0_79, %c0_80, %c0_81] : memref<4x16x48xf32, #tpu.memory_space<vmem>>, vector<4x16x48xf32>
      %292 = vector.shape_cast %291 : vector<4x16x48xf32> to vector<64x48xf32>
      %c0_82 = arith.constant 0 : index
      %c0_83 = arith.constant 0 : index
      %293 = vector.load %arg4[%c0_82, %c0_83] : memref<48x32xbf16, #tpu.memory_space<vmem>>, vector<48x32xbf16>
      %294 = arith.truncf %292 : vector<64x48xf32> to vector<64x48xbf16>
      %cst_84 = arith.constant dense<0.000000e+00> : vector<64x32xf32>
      %295 = tpu.matmul %294, %293, %cst_84 {dimension_numbers = #tpu.dot_dimension_numbers<[1], [0], [0], [1], [0, 0, 1, 1], [], []>} : vector<64x48xbf16>, vector<48x32xbf16>, vector<64x32xf32> -> vector<64x32xf32>
      %c0_85 = arith.constant 0 : index
      %c0_86 = arith.constant 0 : index
      %296 = vector.load %arg3[%c0_85, %c0_86] : memref<16x32xf32, #tpu.memory_space<vmem>>, vector<16x32xf32>
      %297 = tpu.concatenate %296, %296, %296, %296 in 0 : vector<16x32xf32>, vector<16x32xf32>, vector<16x32xf32>, vector<16x32xf32> -> vector<64x32xf32>
      %298 = arith.addf %295, %297 : vector<64x32xf32>
      %c0_87 = arith.constant 0 : index
      %c0_88 = arith.constant 0 : index
      %299 = vector.load %arg20[%c0_87, %c0_88] : memref<64x32xf32, #tpu.memory_space<vmem>>, vector<64x32xf32>
      tpu.vector_store %arg20[%c0_87, %c0_88], %298 {strides = array<i32>} : memref<64x32xf32, #tpu.memory_space<vmem>>, vector<64x32xf32>,
    } else {
    }
    %c0 = arith.constant 0 : index
    %c0_1 = arith.constant 0 : index
    %3 = vector.load %arg20[%c0, %c0_1] : memref<64x32xf32, #tpu.memory_space<vmem>>, vector<64x32xf32>
    %c0_2 = arith.constant 0 : index
    %c0_3 = arith.constant 0 : index
    %c0_4 = arith.constant 0 : index
    %4 = vector.load %arg5[%c0_2, %c0_3, %c0_4] : memref<1x32x96xbf16, #tpu.memory_space<vmem>>, vector<1x32x96xbf16>
    %5 = vector.shape_cast %4 : vector<1x32x96xbf16> to vector<32x96xbf16>
    %6 = arith.truncf %3 : vector<64x32xf32> to vector<64x32xbf16>
    %cst = arith.constant dense<0.000000e+00> : vector<64x96xf32>
    %7 = tpu.matmul %6, %5, %cst {dimension_numbers = #tpu.dot_dimension_numbers<[1], [0], [0], [1], [0, 0, 1, 1], [], []>} : vector<64x32xbf16>, vector<32x96xbf16>, vector<64x96xf32> -> vector<64x96xf32>
    %c0_5 = arith.constant 0 : index
    %c0_6 = arith.constant 0 : index
    %c0_7 = arith.constant 0 : index
    %8 = vector.load %arg6[%c0_5, %c0_6, %c0_7] : memref<1x1x96xf32, #tpu.memory_space<vmem>>, vector<1x1x96xf32>
    %9 = vector.shape_cast %8 : vector<1x1x96xf32> to vector<1x96xf32>
    %10 = vector.broadcast %9 : vector<1x96xf32> to vector<64x96xf32>
    %11 = arith.addf %7, %10 : vector<64x96xf32>
    %c0_8 = arith.constant 0 : index
    %c0_9 = arith.constant 0 : index
    %c0_10 = arith.constant 0 : index
    %c0_11 = arith.constant 0 : index
    %12 = vector.load %arg7[%c0_8, %c0_9, %c0_10, %c0_11] : memref<1x4x8x32xbf16, #tpu.memory_space<vmem>>, vector<1x4x8x32xbf16>
    %13 = vector.shape_cast %12 : vector<1x4x8x32xbf16> to vector<4x8x32xbf16>
    %14 = vector.extract_strided_slice %11 {offsets = [0, 0], sizes = [16, 32], strides = [1, 1]} : vector<64x96xf32> to vector<16x32xf32>
    %15 = vector.extract_strided_slice %11 {offsets = [0, 32], sizes = [16, 32], strides = [1, 1]} : vector<64x96xf32> to vector<16x32xf32>
    %16 = vector.extract_strided_slice %11 {offsets = [0, 64], sizes = [16, 32], strides = [1, 1]} : vector<64x96xf32> to vector<16x32xf32>
    %17 = vector.extract_strided_slice %14 {offsets = [0, 0], sizes = [16, 8], strides = [1, 1]} : vector<16x32xf32> to vector<16x8xf32>
    %18 = vector.extract_strided_slice %14 {offsets = [0, 8], sizes = [16, 8], strides = [1, 1]} : vector<16x32xf32> to vector<16x8xf32>
    %19 = vector.extract_strided_slice %14 {offsets = [0, 16], sizes = [16, 8], strides = [1, 1]} : vector<16x32xf32> to vector<16x8xf32>
    %20 = vector.extract_strided_slice %14 {offsets = [0, 24], sizes = [16, 8], strides = [1, 1]} : vector<16x32xf32> to vector<16x8xf32>
    %21 = vector.shape_cast %17 : vector<16x8xf32> to vector<1x16x8xf32>
    %22 = vector.shape_cast %18 : vector<16x8xf32> to vector<1x16x8xf32>
    %23 = vector.shape_cast %19 : vector<16x8xf32> to vector<1x16x8xf32>
    %24 = vector.shape_cast %20 : vector<16x8xf32> to vector<1x16x8xf32>
    %25 = tpu.concatenate %21, %22, %23, %24 in 0 : vector<1x16x8xf32>, vector<1x16x8xf32>, vector<1x16x8xf32>, vector<1x16x8xf32> -> vector<4x16x8xf32>
    %26 = vector.extract_strided_slice %15 {offsets = [0, 0], sizes = [16, 8], strides = [1, 1]} : vector<16x32xf32> to vector<16x8xf32>
    %27 = vector.extract_strided_slice %15 {offsets = [0, 8], sizes = [16, 8], strides = [1, 1]} : vector<16x32xf32> to vector<16x8xf32>
    %28 = vector.extract_strided_slice %15 {offsets = [0, 16], sizes = [16, 8], strides = [1, 1]} : vector<16x32xf32> to vector<16x8xf32>
    %29 = vector.extract_strided_slice %15 {offsets = [0, 24], sizes = [16, 8], strides = [1, 1]} : vector<16x32xf32> to vector<16x8xf32>
    %30 = vector.shape_cast %26 : vector<16x8xf32> to vector<1x16x8xf32>
    %31 = vector.shape_cast %27 : vector<16x8xf32> to vector<1x16x8xf32>
    %32 = vector.shape_cast %28 : vector<16x8xf32> to vector<1x16x8xf32>
    %33 = vector.shape_cast %29 : vector<16x8xf32> to vector<1x16x8xf32>
    %34 = tpu.concatenate %30, %31, %32, %33 in 0 : vector<1x16x8xf32>, vector<1x16x8xf32>, vector<1x16x8xf32>, vector<1x16x8xf32> -> vector<4x16x8xf32>
    %35 = vector.extract_strided_slice %16 {offsets = [0, 0], sizes = [16, 8], strides = [1, 1]} : vector<16x32xf32> to vector<16x8xf32>
    %36 = vector.extract_strided_slice %16 {offsets = [0, 8], sizes = [16, 8], strides = [1, 1]} : vector<16x32xf32> to vector<16x8xf32>
    %37 = vector.extract_strided_slice %16 {offsets = [0, 16], sizes = [16, 8], strides = [1, 1]} : vector<16x32xf32> to vector<16x8xf32>
    %38 = vector.extract_strided_slice %16 {offsets = [0, 24], sizes = [16, 8], strides = [1, 1]} : vector<16x32xf32> to vector<16x8xf32>
    %39 = vector.shape_cast %35 : vector<16x8xf32> to vector<1x16x8xf32>
    %40 = vector.shape_cast %36 : vector<16x8xf32> to vector<1x16x8xf32>
    %41 = vector.shape_cast %37 : vector<16x8xf32> to vector<1x16x8xf32>
    %42 = vector.shape_cast %38 : vector<16x8xf32> to vector<1x16x8xf32>
    %43 = tpu.concatenate %39, %40, %41, %42 in 0 : vector<1x16x8xf32>, vector<1x16x8xf32>, vector<1x16x8xf32>, vector<1x16x8xf32> -> vector<4x16x8xf32>
    %44 = arith.truncf %25 : vector<4x16x8xf32> to vector<4x16x8xbf16>
    %45 = arith.truncf %34 : vector<4x16x8xf32> to vector<4x16x8xbf16>
    %cst_12 = arith.constant dense<0.000000e+00> : vector<4x16x16xf32>
    %46 = tpu.matmul %44, %45, %cst_12 {dimension_numbers = #tpu.dot_dimension_numbers<[2], [2], [1], [1], [0, 0, 0, 1, 1, 1], [0], [0]>} : vector<4x16x8xbf16>, vector<4x16x8xbf16>, vector<4x16x16xf32> -> vector<4x16x16xf32>
    %cst_13 = arith.constant dense<0xFF800000> : vector<4x16xf32>
    %47 = vector.multi_reduction <maximumf>, %46, %cst_13 [2] : vector<4x16x16xf32> to vector<4x16xf32>
    %48 = vector.shape_cast %47 : vector<4x16xf32> to vector<4x16x1xf32>
    %49 = vector.broadcast %48 : vector<4x16x1xf32> to vector<4x16x16xf32>
    %50 = arith.subf %46, %49 : vector<4x16x16xf32>
    %51 = math.exp %50 : vector<4x16x16xf32>
    %cst_14 = arith.constant dense<0.000000e+00> : vector<4x16xf32>
    %52 = vector.multi_reduction <add>, %51, %cst_14 [2] : vector<4x16x16xf32> to vector<4x16xf32>
    %53 = vector.shape_cast %52 : vector<4x16xf32> to vector<4x16x1xf32>
    %54 = tpu.reciprocal %53 {approx = true} : vector<4x16x1xf32> -> vector<4x16x1xf32>
    %55 = vector.broadcast %54 : vector<4x16x1xf32> to vector<4x16x16xf32>
    %56 = arith.mulf %51, %55 : vector<4x16x16xf32>
    %57 = arith.truncf %56 : vector<4x16x16xf32> to vector<4x16x16xbf16>
    %58 = arith.truncf %43 : vector<4x16x8xf32> to vector<4x16x8xbf16>
    %cst_15 = arith.constant dense<0.000000e+00> : vector<4x16x8xf32>
    %59 = tpu.matmul %57, %58, %cst_15 {dimension_numbers = #tpu.dot_dimension_numbers<[2], [1], [1], [2], [0, 0, 0, 1, 1, 2], [0], [0]>} : vector<4x16x16xbf16>, vector<4x16x8xbf16>, vector<4x16x8xf32> -> vector<4x16x8xf32>
    %60 = arith.truncf %59 : vector<4x16x8xf32> to vector<4x16x8xbf16>
    %cst_16 = arith.constant dense<0.000000e+00> : vector<4x16x32xf32>
    %61 = tpu.matmul %60, %13, %cst_16 {dimension_numbers = #tpu.dot_dimension_numbers<[2], [1], [1], [2], [0, 0, 0, 1, 1, 2], [0], [0]>} : vector<4x16x8xbf16>, vector<4x8x32xbf16>, vector<4x16x32xf32> -> vector<4x16x32xf32>
    %cst_17 = arith.constant dense<0.000000e+00> : vector<16x32xf32>
    %62 = vector.multi_reduction <add>, %61, %cst_17 [0] : vector<4x16x32xf32> to vector<16x32xf32>
    %63 = vector.extract_strided_slice %11 {offsets = [16, 0], sizes = [16, 32], strides = [1, 1]} : vector<64x96xf32> to vector<16x32xf32>
    %64 = vector.extract_strided_slice %11 {offsets = [16, 32], sizes = [16, 32], strides = [1, 1]} : vector<64x96xf32> to vector<16x32xf32>
    %65 = vector.extract_strided_slice %11 {offsets = [16, 64], sizes = [16, 32], strides = [1, 1]} : vector<64x96xf32> to vector<16x32xf32>
    %66 = vector.extract_strided_slice %63 {offsets = [0, 0], sizes = [16, 8], strides = [1, 1]} : vector<16x32xf32> to vector<16x8xf32>
    %67 = vector.extract_strided_slice %63 {offsets = [0, 8], sizes = [16, 8], strides = [1, 1]} : vector<16x32xf32> to vector<16x8xf32>
    %68 = vector.extract_strided_slice %63 {offsets = [0, 16], sizes = [16, 8], strides = [1, 1]} : vector<16x32xf32> to vector<16x8xf32>
    %69 = vector.extract_strided_slice %63 {offsets = [0, 24], sizes = [16, 8], strides = [1, 1]} : vector<16x32xf32> to vector<16x8xf32>
    %70 = vector.shape_cast %66 : vector<16x8xf32> to vector<1x16x8xf32>
    %71 = vector.shape_cast %67 : vector<16x8xf32> to vector<1x16x8xf32>
    %72 = vector.shape_cast %68 : vector<16x8xf32> to vector<1x16x8xf32>
    %73 = vector.shape_cast %69 : vector<16x8xf32> to vector<1x16x8xf32>
    %74 = tpu.concatenate %70, %71, %72, %73 in 0 : vector<1x16x8xf32>, vector<1x16x8xf32>, vector<1x16x8xf32>, vector<1x16x8xf32> -> vector<4x16x8xf32>
    %75 = vector.extract_strided_slice %64 {offsets = [0, 0], sizes = [16, 8], strides = [1, 1]} : vector<16x32xf32> to vector<16x8xf32>
    %76 = vector.extract_strided_slice %64 {offsets = [0, 8], sizes = [16, 8], strides = [1, 1]} : vector<16x32xf32> to vector<16x8xf32>
    %77 = vector.extract_strided_slice %64 {offsets = [0, 16], sizes = [16, 8], strides = [1, 1]} : vector<16x32xf32> to vector<16x8xf32>
    %78 = vector.extract_strided_slice %64 {offsets = [0, 24], sizes = [16, 8], strides = [1, 1]} : vector<16x32xf32> to vector<16x8xf32>
    %79 = vector.shape_cast %75 : vector<16x8xf32> to vector<1x16x8xf32>
    %80 = vector.shape_cast %76 : vector<16x8xf32> to vector<1x16x8xf32>
    %81 = vector.shape_cast %77 : vector<16x8xf32> to vector<1x16x8xf32>
    %82 = vector.shape_cast %78 : vector<16x8xf32> to vector<1x16x8xf32>
    %83 = tpu.concatenate %79, %80, %81, %82 in 0 : vector<1x16x8xf32>, vector<1x16x8xf32>, vector<1x16x8xf32>, vector<1x16x8xf32> -> vector<4x16x8xf32>
    %84 = vector.extract_strided_slice %65 {offsets = [0, 0], sizes = [16, 8], strides = [1, 1]} : vector<16x32xf32> to vector<16x8xf32>
    %85 = vector.extract_strided_slice %65 {offsets = [0, 8], sizes = [16, 8], strides = [1, 1]} : vector<16x32xf32> to vector<16x8xf32>
    %86 = vector.extract_strided_slice %65 {offsets = [0, 16], sizes = [16, 8], strides = [1, 1]} : vector<16x32xf32> to vector<16x8xf32>
    %87 = vector.extract_strided_slice %65 {offsets = [0, 24], sizes = [16, 8], strides = [1, 1]} : vector<16x32xf32> to vector<16x8xf32>
    %88 = vector.shape_cast %84 : vector<16x8xf32> to vector<1x16x8xf32>
    %89 = vector.shape_cast %85 : vector<16x8xf32> to vector<1x16x8xf32>
    %90 = vector.shape_cast %86 : vector<16x8xf32> to vector<1x16x8xf32>
    %91 = vector.shape_cast %87 : vector<16x8xf32> to vector<1x16x8xf32>
    %92 = tpu.concatenate %88, %89, %90, %91 in 0 : vector<1x16x8xf32>, vector<1x16x8xf32>, vector<1x16x8xf32>, vector<1x16x8xf32> -> vector<4x16x8xf32>
    %93 = arith.truncf %74 : vector<4x16x8xf32> to vector<4x16x8xbf16>
    %94 = arith.truncf %83 : vector<4x16x8xf32> to vector<4x16x8xbf16>
    %cst_18 = arith.constant dense<0.000000e+00> : vector<4x16x16xf32>
    %95 = tpu.matmul %93, %94, %cst_18 {dimension_numbers = #tpu.dot_dimension_numbers<[2], [2], [1], [1], [0, 0, 0, 1, 1, 1], [0], [0]>} : vector<4x16x8xbf16>, vector<4x16x8xbf16>, vector<4x16x16xf32> -> vector<4x16x16xf32>
    %cst_19 = arith.constant dense<0xFF800000> : vector<4x16xf32>
    %96 = vector.multi_reduction <maximumf>, %95, %cst_19 [2] : vector<4x16x16xf32> to vector<4x16xf32>
    %97 = vector.shape_cast %96 : vector<4x16xf32> to vector<4x16x1xf32>
    %98 = vector.broadcast %97 : vector<4x16x1xf32> to vector<4x16x16xf32>
    %99 = arith.subf %95, %98 : vector<4x16x16xf32>
    %100 = math.exp %99 : vector<4x16x16xf32>
    %cst_20 = arith.constant dense<0.000000e+00> : vector<4x16xf32>
    %101 = vector.multi_reduction <add>, %100, %cst_20 [2] : vector<4x16x16xf32> to vector<4x16xf32>
    %102 = vector.shape_cast %101 : vector<4x16xf32> to vector<4x16x1xf32>
    %103 = tpu.reciprocal %102 {approx = true} : vector<4x16x1xf32> -> vector<4x16x1xf32>
    %104 = vector.broadcast %103 : vector<4x16x1xf32> to vector<4x16x16xf32>
    %105 = arith.mulf %100, %104 : vector<4x16x16xf32>
    %106 = arith.truncf %105 : vector<4x16x16xf32> to vector<4x16x16xbf16>
    %107 = arith.truncf %92 : vector<4x16x8xf32> to vector<4x16x8xbf16>
    %cst_21 = arith.constant dense<0.000000e+00> : vector<4x16x8xf32>
    %108 = tpu.matmul %106, %107, %cst_21 {dimension_numbers = #tpu.dot_dimension_numbers<[2], [1], [1], [2], [0, 0, 0, 1, 1, 2], [0], [0]>} : vector<4x16x16xbf16>, vector<4x16x8xbf16>, vector<4x16x8xf32> -> vector<4x16x8xf32>
    %109 = arith.truncf %108 : vector<4x16x8xf32> to vector<4x16x8xbf16>
    %cst_22 = arith.constant dense<0.000000e+00> : vector<4x16x32xf32>
    %110 = tpu.matmul %109, %13, %cst_22 {dimension_numbers = #tpu.dot_dimension_numbers<[2], [1], [1], [2], [0, 0, 0, 1, 1, 2], [0], [0]>} : vector<4x16x8xbf16>, vector<4x8x32xbf16>, vector<4x16x32xf32> -> vector<4x16x32xf32>
    %cst_23 = arith.constant dense<0.000000e+00> : vector<16x32xf32>
    %111 = vector.multi_reduction <add>, %110, %cst_23 [0] : vector<4x16x32xf32> to vector<16x32xf32>
    %112 = vector.extract_strided_slice %11 {offsets = [32, 0], sizes = [16, 32], strides = [1, 1]} : vector<64x96xf32> to vector<16x32xf32>
    %113 = vector.extract_strided_slice %11 {offsets = [32, 32], sizes = [16, 32], strides = [1, 1]} : vector<64x96xf32> to vector<16x32xf32>
    %114 = vector.extract_strided_slice %11 {offsets = [32, 64], sizes = [16, 32], strides = [1, 1]} : vector<64x96xf32> to vector<16x32xf32>
    %115 = vector.extract_strided_slice %112 {offsets = [0, 0], sizes = [16, 8], strides = [1, 1]} : vector<16x32xf32> to vector<16x8xf32>
    %116 = vector.extract_strided_slice %112 {offsets = [0, 8], sizes = [16, 8], strides = [1, 1]} : vector<16x32xf32> to vector<16x8xf32>
    %117 = vector.extract_strided_slice %112 {offsets = [0, 16], sizes = [16, 8], strides = [1, 1]} : vector<16x32xf32> to vector<16x8xf32>
    %118 = vector.extract_strided_slice %112 {offsets = [0, 24], sizes = [16, 8], strides = [1, 1]} : vector<16x32xf32> to vector<16x8xf32>
    %119 = vector.shape_cast %115 : vector<16x8xf32> to vector<1x16x8xf32>
    %120 = vector.shape_cast %116 : vector<16x8xf32> to vector<1x16x8xf32>
    %121 = vector.shape_cast %117 : vector<16x8xf32> to vector<1x16x8xf32>
    %122 = vector.shape_cast %118 : vector<16x8xf32> to vector<1x16x8xf32>
    %123 = tpu.concatenate %119, %120, %121, %122 in 0 : vector<1x16x8xf32>, vector<1x16x8xf32>, vector<1x16x8xf32>, vector<1x16x8xf32> -> vector<4x16x8xf32>
    %124 = vector.extract_strided_slice %113 {offsets = [0, 0], sizes = [16, 8], strides = [1, 1]} : vector<16x32xf32> to vector<16x8xf32>
    %125 = vector.extract_strided_slice %113 {offsets = [0, 8], sizes = [16, 8], strides = [1, 1]} : vector<16x32xf32> to vector<16x8xf32>
    %126 = vector.extract_strided_slice %113 {offsets = [0, 16], sizes = [16, 8], strides = [1, 1]} : vector<16x32xf32> to vector<16x8xf32>
    %127 = vector.extract_strided_slice %113 {offsets = [0, 24], sizes = [16, 8], strides = [1, 1]} : vector<16x32xf32> to vector<16x8xf32>
    %128 = vector.shape_cast %124 : vector<16x8xf32> to vector<1x16x8xf32>
    %129 = vector.shape_cast %125 : vector<16x8xf32> to vector<1x16x8xf32>
    %130 = vector.shape_cast %126 : vector<16x8xf32> to vector<1x16x8xf32>
    %131 = vector.shape_cast %127 : vector<16x8xf32> to vector<1x16x8xf32>
    %132 = tpu.concatenate %128, %129, %130, %131 in 0 : vector<1x16x8xf32>, vector<1x16x8xf32>, vector<1x16x8xf32>, vector<1x16x8xf32> -> vector<4x16x8xf32>
    %133 = vector.extract_strided_slice %114 {offsets = [0, 0], sizes = [16, 8], strides = [1, 1]} : vector<16x32xf32> to vector<16x8xf32>
    %134 = vector.extract_strided_slice %114 {offsets = [0, 8], sizes = [16, 8], strides = [1, 1]} : vector<16x32xf32> to vector<16x8xf32>
    %135 = vector.extract_strided_slice %114 {offsets = [0, 16], sizes = [16, 8], strides = [1, 1]} : vector<16x32xf32> to vector<16x8xf32>
    %136 = vector.extract_strided_slice %114 {offsets = [0, 24], sizes = [16, 8], strides = [1, 1]} : vector<16x32xf32> to vector<16x8xf32>
    %137 = vector.shape_cast %133 : vector<16x8xf32> to vector<1x16x8xf32>
    %138 = vector.shape_cast %134 : vector<16x8xf32> to vector<1x16x8xf32>
    %139 = vector.shape_cast %135 : vector<16x8xf32> to vector<1x16x8xf32>
    %140 = vector.shape_cast %136 : vector<16x8xf32> to vector<1x16x8xf32>
    %141 = tpu.concatenate %137, %138, %139, %140 in 0 : vector<1x16x8xf32>, vector<1x16x8xf32>, vector<1x16x8xf32>, vector<1x16x8xf32> -> vector<4x16x8xf32>
    %142 = arith.truncf %123 : vector<4x16x8xf32> to vector<4x16x8xbf16>
    %143 = arith.truncf %132 : vector<4x16x8xf32> to vector<4x16x8xbf16>
    %cst_24 = arith.constant dense<0.000000e+00> : vector<4x16x16xf32>
    %144 = tpu.matmul %142, %143, %cst_24 {dimension_numbers = #tpu.dot_dimension_numbers<[2], [2], [1], [1], [0, 0, 0, 1, 1, 1], [0], [0]>} : vector<4x16x8xbf16>, vector<4x16x8xbf16>, vector<4x16x16xf32> -> vector<4x16x16xf32>
    %cst_25 = arith.constant dense<0xFF800000> : vector<4x16xf32>
    %145 = vector.multi_reduction <maximumf>, %144, %cst_25 [2] : vector<4x16x16xf32> to vector<4x16xf32>
    %146 = vector.shape_cast %145 : vector<4x16xf32> to vector<4x16x1xf32>
    %147 = vector.broadcast %146 : vector<4x16x1xf32> to vector<4x16x16xf32>
    %148 = arith.subf %144, %147 : vector<4x16x16xf32>
    %149 = math.exp %148 : vector<4x16x16xf32>
    %cst_26 = arith.constant dense<0.000000e+00> : vector<4x16xf32>
    %150 = vector.multi_reduction <add>, %149, %cst_26 [2] : vector<4x16x16xf32> to vector<4x16xf32>
    %151 = vector.shape_cast %150 : vector<4x16xf32> to vector<4x16x1xf32>
    %152 = tpu.reciprocal %151 {approx = true} : vector<4x16x1xf32> -> vector<4x16x1xf32>
    %153 = vector.broadcast %152 : vector<4x16x1xf32> to vector<4x16x16xf32>
    %154 = arith.mulf %149, %153 : vector<4x16x16xf32>
    %155 = arith.truncf %154 : vector<4x16x16xf32> to vector<4x16x16xbf16>
    %156 = arith.truncf %141 : vector<4x16x8xf32> to vector<4x16x8xbf16>
    %cst_27 = arith.constant dense<0.000000e+00> : vector<4x16x8xf32>
    %157 = tpu.matmul %155, %156, %cst_27 {dimension_numbers = #tpu.dot_dimension_numbers<[2], [1], [1], [2], [0, 0, 0, 1, 1, 2], [0], [0]>} : vector<4x16x16xbf16>, vector<4x16x8xbf16>, vector<4x16x8xf32> -> vector<4x16x8xf32>
    %158 = arith.truncf %157 : vector<4x16x8xf32> to vector<4x16x8xbf16>
    %cst_28 = arith.constant dense<0.000000e+00> : vector<4x16x32xf32>
    %159 = tpu.matmul %158, %13, %cst_28 {dimension_numbers = #tpu.dot_dimension_numbers<[2], [1], [1], [2], [0, 0, 0, 1, 1, 2], [0], [0]>} : vector<4x16x8xbf16>, vector<4x8x32xbf16>, vector<4x16x32xf32> -> vector<4x16x32xf32>
    %cst_29 = arith.constant dense<0.000000e+00> : vector<16x32xf32>
    %160 = vector.multi_reduction <add>, %159, %cst_29 [0] : vector<4x16x32xf32> to vector<16x32xf32>
    %161 = vector.extract_strided_slice %11 {offsets = [48, 0], sizes = [16, 32], strides = [1, 1]} : vector<64x96xf32> to vector<16x32xf32>
    %162 = vector.extract_strided_slice %11 {offsets = [48, 32], sizes = [16, 32], strides = [1, 1]} : vector<64x96xf32> to vector<16x32xf32>
    %163 = vector.extract_strided_slice %11 {offsets = [48, 64], sizes = [16, 32], strides = [1, 1]} : vector<64x96xf32> to vector<16x32xf32>
    %164 = vector.extract_strided_slice %161 {offsets = [0, 0], sizes = [16, 8], strides = [1, 1]} : vector<16x32xf32> to vector<16x8xf32>
    %165 = vector.extract_strided_slice %161 {offsets = [0, 8], sizes = [16, 8], strides = [1, 1]} : vector<16x32xf32> to vector<16x8xf32>
    %166 = vector.extract_strided_slice %161 {offsets = [0, 16], sizes = [16, 8], strides = [1, 1]} : vector<16x32xf32> to vector<16x8xf32>
    %167 = vector.extract_strided_slice %161 {offsets = [0, 24], sizes = [16, 8], strides = [1, 1]} : vector<16x32xf32> to vector<16x8xf32>
    %168 = vector.shape_cast %164 : vector<16x8xf32> to vector<1x16x8xf32>
    %169 = vector.shape_cast %165 : vector<16x8xf32> to vector<1x16x8xf32>
    %170 = vector.shape_cast %166 : vector<16x8xf32> to vector<1x16x8xf32>
    %171 = vector.shape_cast %167 : vector<16x8xf32> to vector<1x16x8xf32>
    %172 = tpu.concatenate %168, %169, %170, %171 in 0 : vector<1x16x8xf32>, vector<1x16x8xf32>, vector<1x16x8xf32>, vector<1x16x8xf32> -> vector<4x16x8xf32>
    %173 = vector.extract_strided_slice %162 {offsets = [0, 0], sizes = [16, 8], strides = [1, 1]} : vector<16x32xf32> to vector<16x8xf32>
    %174 = vector.extract_strided_slice %162 {offsets = [0, 8], sizes = [16, 8], strides = [1, 1]} : vector<16x32xf32> to vector<16x8xf32>
    %175 = vector.extract_strided_slice %162 {offsets = [0, 16], sizes = [16, 8], strides = [1, 1]} : vector<16x32xf32> to vector<16x8xf32>
    %176 = vector.extract_strided_slice %162 {offsets = [0, 24], sizes = [16, 8], strides = [1, 1]} : vector<16x32xf32> to vector<16x8xf32>
    %177 = vector.shape_cast %173 : vector<16x8xf32> to vector<1x16x8xf32>
    %178 = vector.shape_cast %174 : vector<16x8xf32> to vector<1x16x8xf32>
    %179 = vector.shape_cast %175 : vector<16x8xf32> to vector<1x16x8xf32>
    %180 = vector.shape_cast %176 : vector<16x8xf32> to vector<1x16x8xf32>
    %181 = tpu.concatenate %177, %178, %179, %180 in 0 : vector<1x16x8xf32>, vector<1x16x8xf32>, vector<1x16x8xf32>, vector<1x16x8xf32> -> vector<4x16x8xf32>
    %182 = vector.extract_strided_slice %163 {offsets = [0, 0], sizes = [16, 8], strides = [1, 1]} : vector<16x32xf32> to vector<16x8xf32>
    %183 = vector.extract_strided_slice %163 {offsets = [0, 8], sizes = [16, 8], strides = [1, 1]} : vector<16x32xf32> to vector<16x8xf32>
    %184 = vector.extract_strided_slice %163 {offsets = [0, 16], sizes = [16, 8], strides = [1, 1]} : vector<16x32xf32> to vector<16x8xf32>
    %185 = vector.extract_strided_slice %163 {offsets = [0, 24], sizes = [16, 8], strides = [1, 1]} : vector<16x32xf32> to vector<16x8xf32>
    %186 = vector.shape_cast %182 : vector<16x8xf32> to vector<1x16x8xf32>
    %187 = vector.shape_cast %183 : vector<16x8xf32> to vector<1x16x8xf32>
    %188 = vector.shape_cast %184 : vector<16x8xf32> to vector<1x16x8xf32>
    %189 = vector.shape_cast %185 : vector<16x8xf32> to vector<1x16x8xf32>
    %190 = tpu.concatenate %186, %187, %188, %189 in 0 : vector<1x16x8xf32>, vector<1x16x8xf32>, vector<1x16x8xf32>, vector<1x16x8xf32> -> vector<4x16x8xf32>
    %191 = arith.truncf %172 : vector<4x16x8xf32> to vector<4x16x8xbf16>
    %192 = arith.truncf %181 : vector<4x16x8xf32> to vector<4x16x8xbf16>
    %cst_30 = arith.constant dense<0.000000e+00> : vector<4x16x16xf32>
    %193 = tpu.matmul %191, %192, %cst_30 {dimension_numbers = #tpu.dot_dimension_numbers<[2], [2], [1], [1], [0, 0, 0, 1, 1, 1], [0], [0]>} : vector<4x16x8xbf16>, vector<4x16x8xbf16>, vector<4x16x16xf32> -> vector<4x16x16xf32>
    %cst_31 = arith.constant dense<0xFF800000> : vector<4x16xf32>
    %194 = vector.multi_reduction <maximumf>, %193, %cst_31 [2] : vector<4x16x16xf32> to vector<4x16xf32>
    %195 = vector.shape_cast %194 : vector<4x16xf32> to vector<4x16x1xf32>
    %196 = vector.broadcast %195 : vector<4x16x1xf32> to vector<4x16x16xf32>
    %197 = arith.subf %193, %196 : vector<4x16x16xf32>
    %198 = math.exp %197 : vector<4x16x16xf32>
    %cst_32 = arith.constant dense<0.000000e+00> : vector<4x16xf32>
    %199 = vector.multi_reduction <add>, %198, %cst_32 [2] : vector<4x16x16xf32> to vector<4x16xf32>
    %200 = vector.shape_cast %199 : vector<4x16xf32> to vector<4x16x1xf32>
    %201 = tpu.reciprocal %200 {approx = true} : vector<4x16x1xf32> -> vector<4x16x1xf32>
    %202 = vector.broadcast %201 : vector<4x16x1xf32> to vector<4x16x16xf32>
    %203 = arith.mulf %198, %202 : vector<4x16x16xf32>
    %204 = arith.truncf %203 : vector<4x16x16xf32> to vector<4x16x16xbf16>
    %205 = arith.truncf %190 : vector<4x16x8xf32> to vector<4x16x8xbf16>
    %cst_33 = arith.constant dense<0.000000e+00> : vector<4x16x8xf32>
    %206 = tpu.matmul %204, %205, %cst_33 {dimension_numbers = #tpu.dot_dimension_numbers<[2], [1], [1], [2], [0, 0, 0, 1, 1, 2], [0], [0]>} : vector<4x16x16xbf16>, vector<4x16x8xbf16>, vector<4x16x8xf32> -> vector<4x16x8xf32>
    %207 = arith.truncf %206 : vector<4x16x8xf32> to vector<4x16x8xbf16>
    %cst_34 = arith.constant dense<0.000000e+00> : vector<4x16x32xf32>
    %208 = tpu.matmul %207, %13, %cst_34 {dimension_numbers = #tpu.dot_dimension_numbers<[2], [1], [1], [2], [0, 0, 0, 1, 1, 2], [0], [0]>} : vector<4x16x8xbf16>, vector<4x8x32xbf16>, vector<4x16x32xf32> -> vector<4x16x32xf32>
    %cst_35 = arith.constant dense<0.000000e+00> : vector<16x32xf32>
    %209 = vector.multi_reduction <add>, %208, %cst_35 [0] : vector<4x16x32xf32> to vector<16x32xf32>
    %210 = tpu.concatenate %62, %111, %160, %209 in 0 : vector<16x32xf32>, vector<16x32xf32>, vector<16x32xf32>, vector<16x32xf32> -> vector<64x32xf32>
    %c0_36 = arith.constant 0 : index
    %c0_37 = arith.constant 0 : index
    %c0_38 = arith.constant 0 : index
    %211 = vector.load %arg8[%c0_36, %c0_37, %c0_38] : memref<1x1x32xf32, #tpu.memory_space<vmem>>, vector<1x1x32xf32>
    %212 = vector.shape_cast %211 : vector<1x1x32xf32> to vector<1x32xf32>
    %213 = vector.broadcast %212 : vector<1x32xf32> to vector<64x32xf32>
    %214 = arith.addf %210, %213 : vector<64x32xf32>
    %215 = arith.addf %214, %3 : vector<64x32xf32>
    %c0_39 = arith.constant 0 : index
    %c0_40 = arith.constant 0 : index
    %c0_41 = arith.constant 0 : index
    %216 = vector.load %arg9[%c0_39, %c0_40, %c0_41] : memref<1x1x32xf32, #tpu.memory_space<vmem>>, vector<1x1x32xf32>
    %217 = vector.shape_cast %216 : vector<1x1x32xf32> to vector<1x32xf32>
    %c0_42 = arith.constant 0 : index
    %c0_43 = arith.constant 0 : index
    %c0_44 = arith.constant 0 : index
    %218 = vector.load %arg10[%c0_42, %c0_43, %c0_44] : memref<1x1x32xf32, #tpu.memory_space<vmem>>, vector<1x1x32xf32>
    %219 = vector.shape_cast %218 : vector<1x1x32xf32> to vector<1x32xf32>
    %cst_45 = arith.constant dense<0.000000e+00> : vector<64xf32>
    %220 = vector.multi_reduction <add>, %215, %cst_45 [1] : vector<64x32xf32> to vector<64xf32>
    %221 = vector.shape_cast %220 : vector<64xf32> to vector<64x1xf32>
    %cst_46 = arith.constant 3.200000e+01 : f32
    %222 = vector.broadcast %cst_46 : f32 to vector<64x1xf32>
    %223 = arith.divf %221, %222 : vector<64x1xf32>
    %224 = vector.broadcast %223 : vector<64x1xf32> to vector<64x32xf32>
    %225 = arith.subf %215, %224 : vector<64x32xf32>
    %226 = arith.mulf %225, %225 : vector<64x32xf32>
    %cst_47 = arith.constant dense<0.000000e+00> : vector<64xf32>
    %227 = vector.multi_reduction <add>, %226, %cst_47 [1] : vector<64x32xf32> to vector<64xf32>
    %228 = vector.shape_cast %227 : vector<64xf32> to vector<64x1xf32>
    %cst_48 = arith.constant 3.200000e+01 : f32
    %229 = vector.broadcast %cst_48 : f32 to vector<64x1xf32>
    %230 = arith.divf %228, %229 : vector<64x1xf32>
    %231 = vector.broadcast %223 : vector<64x1xf32> to vector<64x32xf32>
    %232 = arith.subf %215, %231 : vector<64x32xf32>
    %cst_49 = arith.constant 9.99999974E-6 : f32
    %233 = vector.broadcast %cst_49 : f32 to vector<64x1xf32>
    %234 = arith.addf %230, %233 : vector<64x1xf32>
    %235 = math.rsqrt %234 : vector<64x1xf32>
    %236 = vector.broadcast %235 : vector<64x1xf32> to vector<64x32xf32>
    %237 = arith.mulf %232, %236 : vector<64x32xf32>
    %238 = vector.broadcast %217 : vector<1x32xf32> to vector<64x32xf32>
    %239 = arith.mulf %237, %238 : vector<64x32xf32>
    %240 = vector.broadcast %219 : vector<1x32xf32> to vector<64x32xf32>
    %241 = arith.addf %239, %240 : vector<64x32xf32>
    %c0_50 = arith.constant 0 : index
    %c0_51 = arith.constant 0 : index
    %c0_52 = arith.constant 0 : index
    %242 = vector.load %arg11[%c0_50, %c0_51, %c0_52] : memref<1x32x64xbf16, #tpu.memory_space<vmem>>, vector<1x32x64xbf16>
    %243 = vector.shape_cast %242 : vector<1x32x64xbf16> to vector<32x64xbf16>
    %244 = arith.truncf %241 : vector<64x32xf32> to vector<64x32xbf16>
    %cst_53 = arith.constant dense<0.000000e+00> : vector<64x64xf32>
    %245 = tpu.matmul %244, %243, %cst_53 {dimension_numbers = #tpu.dot_dimension_numbers<[1], [0], [0], [1], [0, 0, 1, 1], [], []>} : vector<64x32xbf16>, vector<32x64xbf16>, vector<64x64xf32> -> vector<64x64xf32>
    %c0_54 = arith.constant 0 : index
    %c0_55 = arith.constant 0 : index
    %c0_56 = arith.constant 0 : index
    %246 = vector.load %arg12[%c0_54, %c0_55, %c0_56] : memref<1x1x64xf32, #tpu.memory_space<vmem>>, vector<1x1x64xf32>
    %247 = vector.shape_cast %246 : vector<1x1x64xf32> to vector<1x64xf32>
    %248 = vector.broadcast %247 : vector<1x64xf32> to vector<64x64xf32>
    %249 = arith.addf %245, %248 : vector<64x64xf32>
    %cst_57 = arith.constant 0.000000e+00 : f32
    %250 = vector.broadcast %cst_57 : f32 to vector<64x64xf32>
    %251 = arith.maximumf %249, %250 : vector<64x64xf32>
    %c0_58 = arith.constant 0 : index
    %c0_59 = arith.constant 0 : index
    %c0_60 = arith.constant 0 : index
    %252 = vector.load %arg13[%c0_58, %c0_59, %c0_60] : memref<1x64x32xbf16, #tpu.memory_space<vmem>>, vector<1x64x32xbf16>
    %253 = vector.shape_cast %252 : vector<1x64x32xbf16> to vector<64x32xbf16>
    %254 = arith.truncf %251 : vector<64x64xf32> to vector<64x64xbf16>
    %cst_61 = arith.constant dense<0.000000e+00> : vector<64x32xf32>
    %255 = tpu.matmul %254, %253, %cst_61 {dimension_numbers = #tpu.dot_dimension_numbers<[1], [0], [0], [1], [0, 0, 1, 1], [], []>} : vector<64x64xbf16>, vector<64x32xbf16>, vector<64x32xf32> -> vector<64x32xf32>
    %c0_62 = arith.constant 0 : index
    %c0_63 = arith.constant 0 : index
    %c0_64 = arith.constant 0 : index
    %256 = vector.load %arg14[%c0_62, %c0_63, %c0_64] : memref<1x1x32xf32, #tpu.memory_space<vmem>>, vector<1x1x32xf32>
    %257 = vector.shape_cast %256 : vector<1x1x32xf32> to vector<1x32xf32>
    %258 = vector.broadcast %257 : vector<1x32xf32> to vector<64x32xf32>
    %259 = arith.addf %255, %258 : vector<64x32xf32>
    %260 = arith.addf %259, %241 : vector<64x32xf32>
    %c0_65 = arith.constant 0 : index
    %c0_66 = arith.constant 0 : index
    %c0_67 = arith.constant 0 : index
    %261 = vector.load %arg15[%c0_65, %c0_66, %c0_67] : memref<1x1x32xf32, #tpu.memory_space<vmem>>, vector<1x1x32xf32>
    %262 = vector.shape_cast %261 : vector<1x1x32xf32> to vector<1x32xf32>
    %c0_68 = arith.constant 0 : index
    %c0_69 = arith.constant 0 : index
    %c0_70 = arith.constant 0 : index
    %263 = vector.load %arg16[%c0_68, %c0_69, %c0_70] : memref<1x1x32xf32, #tpu.memory_space<vmem>>, vector<1x1x32xf32>
    %264 = vector.shape_cast %263 : vector<1x1x32xf32> to vector<1x32xf32>
    %cst_71 = arith.constant dense<0.000000e+00> : vector<64xf32>
    %265 = vector.multi_reduction <add>, %260, %cst_71 [1] : vector<64x32xf32> to vector<64xf32>
    %266 = vector.shape_cast %265 : vector<64xf32> to vector<64x1xf32>
    %cst_72 = arith.constant 3.200000e+01 : f32
    %267 = vector.broadcast %cst_72 : f32 to vector<64x1xf32>
    %268 = arith.divf %266, %267 : vector<64x1xf32>
    %269 = vector.broadcast %268 : vector<64x1xf32> to vector<64x32xf32>
    %270 = arith.subf %260, %269 : vector<64x32xf32>
    %271 = arith.mulf %270, %270 : vector<64x32xf32>
    %cst_73 = arith.constant dense<0.000000e+00> : vector<64xf32>
    %272 = vector.multi_reduction <add>, %271, %cst_73 [1] : vector<64x32xf32> to vector<64xf32>
    %273 = vector.shape_cast %272 : vector<64xf32> to vector<64x1xf32>
    %cst_74 = arith.constant 3.200000e+01 : f32
    %274 = vector.broadcast %cst_74 : f32 to vector<64x1xf32>
    %275 = arith.divf %273, %274 : vector<64x1xf32>
    %276 = vector.broadcast %268 : vector<64x1xf32> to vector<64x32xf32>
    %277 = arith.subf %260, %276 : vector<64x32xf32>
    %cst_75 = arith.constant 9.99999974E-6 : f32
    %278 = vector.broadcast %cst_75 : f32 to vector<64x1xf32>
    %279 = arith.addf %275, %278 : vector<64x1xf32>
    %280 = math.rsqrt %279 : vector<64x1xf32>
    %281 = vector.broadcast %280 : vector<64x1xf32> to vector<64x32xf32>
    %282 = arith.mulf %277, %281 : vector<64x32xf32>
    %283 = vector.broadcast %262 : vector<1x32xf32> to vector<64x32xf32>
    %284 = arith.mulf %282, %283 : vector<64x32xf32>
    %285 = vector.broadcast %264 : vector<1x32xf32> to vector<64x32xf32>
    %286 = arith.addf %284, %285 : vector<64x32xf32>
    %c0_76 = arith.constant 0 : index
    %c0_77 = arith.constant 0 : index
    %287 = vector.load %arg20[%c0_76, %c0_77] : memref<64x32xf32, #tpu.memory_space<vmem>>, vector<64x32xf32>
    tpu.vector_store %arg20[%c0_76, %c0_77], %286 {strides = array<i32>} : memref<64x32xf32, #tpu.memory_space<vmem>>, vector<64x32xf32>,
    %c1_i32 = arith.constant 1 : i32
    %288 = arith.cmpi eq, %arg1, %c1_i32 : i32
    %289 = arith.extui %288 : i1 to i32
    %c0_i32_78 = arith.constant 0 : i32
    %290 = arith.cmpi ne, %289, %c0_i32_78 : i32
    scf.if %290 {
      %291 = vector.extract_strided_slice %286 {offsets = [0, 0], sizes = [1, 32], strides = [1, 1]} : vector<64x32xf32> to vector<1x32xf32>
      %292 = vector.extract_strided_slice %286 {offsets = [16, 0], sizes = [1, 32], strides = [1, 1]} : vector<64x32xf32> to vector<1x32xf32>
      %293 = vector.extract_strided_slice %286 {offsets = [32, 0], sizes = [1, 32], strides = [1, 1]} : vector<64x32xf32> to vector<1x32xf32>
      %294 = vector.extract_strided_slice %286 {offsets = [48, 0], sizes = [1, 32], strides = [1, 1]} : vector<64x32xf32> to vector<1x32xf32>
      %295 = tpu.concatenate %291, %292, %293, %294 in 0 : vector<1x32xf32>, vector<1x32xf32>, vector<1x32xf32>, vector<1x32xf32> -> vector<4x32xf32>
      %c0_79 = arith.constant 0 : index
      %c0_80 = arith.constant 0 : index
      %296 = vector.load %arg17[%c0_79, %c0_80] : memref<32x128xbf16, #tpu.memory_space<vmem>>, vector<32x128xbf16>
      %297 = arith.truncf %295 : vector<4x32xf32> to vector<4x32xbf16>
      %cst_81 = arith.constant dense<0.000000e+00> : vector<4x128xf32>
      %298 = tpu.matmul %297, %296, %cst_81 {dimension_numbers = #tpu.dot_dimension_numbers<[1], [0], [0], [1], [0, 0, 1, 1], [], []>} : vector<4x32xbf16>, vector<32x128xbf16>, vector<4x128xf32> -> vector<4x128xf32>
      %c0_82 = arith.constant 0 : index
      %c0_83 = arith.constant 0 : index
      %299 = vector.load %arg18[%c0_82, %c0_83] : memref<1x128xf32, #tpu.memory_space<vmem>>, vector<1x128xf32>
      %300 = vector.broadcast %299 : vector<1x128xf32> to vector<4x128xf32>
      %301 = arith.addf %298, %300 : vector<4x128xf32>
      %c0_84 = arith.constant 0 : index
      %c0_85 = arith.constant 0 : index
      %c0_86 = arith.constant 0 : index
      %302 = vector.load %arg19[%c0_84, %c0_85, %c0_86] : memref<1x4x128xf32, #tpu.memory_space<vmem>>, vector<1x4x128xf32>
      %303 = vector.shape_cast %302 : vector<1x4x128xf32> to vector<4x128xf32>
      %304 = vector.shape_cast %301 : vector<4x128xf32> to vector<1x4x128xf32>
      tpu.vector_store %arg19[%c0_84, %c0_85, %c0_86], %304 {strides = array<i32>} : memref<1x4x128xf32, #tpu.memory_space<vmem>>, vector<1x4x128xf32>,
    } else {
    }
    return
  }
  func.func @transform_0(%arg0: i32, %arg1: i32) -> (i32, i32, i32) {
    %c0_i32 = arith.constant 0 : i32
    %c0_i32_0 = arith.constant 0 : i32
    %c0_i32_1 = arith.constant 0 : i32
    return %arg0, %c0_i32, %c0_i32_0 : i32, i32, i32
  }
  func.func @transform_1(%arg0: i32, %arg1: i32) -> (i32, i32) {
    %c0_i32 = arith.constant 0 : i32
    %c0_i32_0 = arith.constant 0 : i32
    %c0_i32_1 = arith.constant 0 : i32
    return %c0_i32, %c0_i32_0 : i32, i32
  }
  func.func @transform_2(%arg0: i32, %arg1: i32) -> (i32, i32) {
    %c0_i32 = arith.constant 0 : i32
    %c0_i32_0 = arith.constant 0 : i32
    %c0_i32_1 = arith.constant 0 : i32
    return %c0_i32, %c0_i32_0 : i32, i32
  }
  func.func @transform_3(%arg0: i32, %arg1: i32) -> (i32, i32, i32) {
    %c0_i32 = arith.constant 0 : i32
    %c0_i32_0 = arith.constant 0 : i32
    %c0_i32_1 = arith.constant 0 : i32
    return %arg1, %c0_i32, %c0_i32_0 : i32, i32, i32
  }
  func.func @transform_4(%arg0: i32, %arg1: i32) -> (i32, i32, i32) {
    %c0_i32 = arith.constant 0 : i32
    %c0_i32_0 = arith.constant 0 : i32
    %c0_i32_1 = arith.constant 0 : i32
    return %arg1, %c0_i32, %c0_i32_0 : i32, i32, i32
  }
  func.func @transform_5(%arg0: i32, %arg1: i32) -> (i32, i32, i32, i32) {
    %c0_i32 = arith.constant 0 : i32
    %c0_i32_0 = arith.constant 0 : i32
    %c0_i32_1 = arith.constant 0 : i32
    %c0_i32_2 = arith.constant 0 : i32
    return %arg1, %c0_i32, %c0_i32_0, %c0_i32_1 : i32, i32, i32, i32
  }
  func.func @transform_6(%arg0: i32, %arg1: i32) -> (i32, i32, i32) {
    %c0_i32 = arith.constant 0 : i32
    %c0_i32_0 = arith.constant 0 : i32
    %c0_i32_1 = arith.constant 0 : i32
    return %arg1, %c0_i32, %c0_i32_0 : i32, i32, i32
  }
  func.func @transform_7(%arg0: i32, %arg1: i32) -> (i32, i32, i32) {
    %c0_i32 = arith.constant 0 : i32
    %c0_i32_0 = arith.constant 0 : i32
    %c0_i32_1 = arith.constant 0 : i32
    return %arg1, %c0_i32, %c0_i32_0 : i32, i32, i32
  }
  func.func @transform_8(%arg0: i32, %arg1: i32) -> (i32, i32, i32) {
    %c0_i32 = arith.constant 0 : i32
    %c0_i32_0 = arith.constant 0 : i32
    %c0_i32_1 = arith.constant 0 : i32
    return %arg1, %c0_i32, %c0_i32_0 : i32, i32, i32
  }
  func.func @transform_9(%arg0: i32, %arg1: i32) -> (i32, i32, i32) {
    %c0_i32 = arith.constant 0 : i32
    %c0_i32_0 = arith.constant 0 : i32
    %c0_i32_1 = arith.constant 0 : i32
    return %arg1, %c0_i32, %c0_i32_0 : i32, i32, i32
  }
  func.func @transform_10(%arg0: i32, %arg1: i32) -> (i32, i32, i32) {
    %c0_i32 = arith.constant 0 : i32
    %c0_i32_0 = arith.constant 0 : i32
    %c0_i32_1 = arith.constant 0 : i32
    return %arg1, %c0_i32, %c0_i32_0 : i32, i32, i32
  }
  func.func @transform_11(%arg0: i32, %arg1: i32) -> (i32, i32, i32) {
    %c0_i32 = arith.constant 0 : i32
    %c0_i32_0 = arith.constant 0 : i32
    %c0_i32_1 = arith.constant 0 : i32
    return %arg1, %c0_i32, %c0_i32_0 : i32, i32, i32
  }
  func.func @transform_12(%arg0: i32, %arg1: i32) -> (i32, i32, i32) {
    %c0_i32 = arith.constant 0 : i32
    %c0_i32_0 = arith.constant 0 : i32
    %c0_i32_1 = arith.constant 0 : i32
    return %arg1, %c0_i32, %c0_i32_0 : i32, i32, i32
  }
  func.func @transform_13(%arg0: i32, %arg1: i32) -> (i32, i32, i32) {
    %c0_i32 = arith.constant 0 : i32
    %c0_i32_0 = arith.constant 0 : i32
    %c0_i32_1 = arith.constant 0 : i32
    return %arg1, %c0_i32, %c0_i32_0 : i32, i32, i32
  }
  func.func @transform_14(%arg0: i32, %arg1: i32) -> (i32, i32, i32) {
    %c0_i32 = arith.constant 0 : i32
    %c0_i32_0 = arith.constant 0 : i32
    %c0_i32_1 = arith.constant 0 : i32
    return %arg1, %c0_i32, %c0_i32_0 : i32, i32, i32
  }
  func.func @transform_15(%arg0: i32, %arg1: i32) -> (i32, i32) {
    %c0_i32 = arith.constant 0 : i32
    %c0_i32_0 = arith.constant 0 : i32
    %c0_i32_1 = arith.constant 0 : i32
    return %c0_i32, %c0_i32_0 : i32, i32
  }
  func.func @transform_16(%arg0: i32, %arg1: i32) -> (i32, i32) {
    %c0_i32 = arith.constant 0 : i32
    %c0_i32_0 = arith.constant 0 : i32
    %c0_i32_1 = arith.constant 0 : i32
    return %c0_i32, %c0_i32_0 : i32, i32
  }
  func.func @transform_17(%arg0: i32, %arg1: i32) -> (i32, i32, i32) {
    %c0_i32 = arith.constant 0 : i32
    %c0_i32_0 = arith.constant 0 : i32
    %c0_i32_1 = arith.constant 0 : i32
    return %arg0, %c0_i32, %c0_i32_0 : i32, i32, i32
  }
}

</mosaic_0001>

<llo_original>
// kernel: tpu_custom_call.1
$region0: #{tpu_custom_call.1}
  #allocation0 [shape = 'u32[]', space=smem, size = 0x4, offset = 0x4, fixed_abs, tag = 'smem constant byte address 0x4 - core index']
  #allocation1 [shape = 'u32[144,128]{1,0:T(1,128)}', space=vmem, size = 0x12000, scoped, tag = 'internal scratch']
  #allocation2 [shape = 'f32[64,32]{1,0:T(8,128)}', space=vmem, size = 0x8000, scoped, tag = 'scratch operand']
  %s0 = inlined_call_operand.vmem [shape: f32[8,16,48], index: 0, kind: input, shape index: {}]
  %s1 = inlined_call_operand.hbm [shape: f32[16,32], index: 1, kind: input, shape index: {}]
  %s2 = inlined_call_operand.vmem [shape: bf16[48,32], index: 2, kind: input, shape index: {}]
  %s3 = inlined_call_operand.hbm [shape: bf16[2,32,96], index: 3, kind: input, shape index: {}]
  %s4 = inlined_call_operand.hbm [shape: f32[2,1,96], index: 4, kind: input, shape index: {}]
  %s5 = inlined_call_operand.hbm [shape: bf16[2,4,8,32], index: 5, kind: input, shape index: {}]
  %s6 = inlined_call_operand.hbm [shape: f32[2,1,32], index: 6, kind: input, shape index: {}]
  %s7 = inlined_call_operand.hbm [shape: f32[2,1,32], index: 7, kind: input, shape index: {}]
  %s8 = inlined_call_operand.hbm [shape: f32[2,1,32], index: 8, kind: input, shape index: {}]
  %s9 = inlined_call_operand.hbm [shape: bf16[2,32,64], index: 9, kind: input, shape index: {}]
  %s10 = inlined_call_operand.hbm [shape: f32[2,1,64], index: 10, kind: input, shape index: {}]
  %s11 = inlined_call_operand.vmem [shape: bf16[2,64,32], index: 11, kind: input, shape index: {}]
  %s12 = inlined_call_operand.vmem [shape: f32[2,1,32], index: 12, kind: input, shape index: {}]
  %s13 = inlined_call_operand.vmem [shape: f32[2,1,32], index: 13, kind: input, shape index: {}]
  %s14 = inlined_call_operand.vmem [shape: f32[2,1,32], index: 14, kind: input, shape index: {}]
  %s15 = inlined_call_operand.vmem [shape: bf16[32,128], index: 15, kind: input, shape index: {}]
  %s16 = inlined_call_operand.vmem [shape: f32[1,128], index: 16, kind: input, shape index: {}]
  %s17 = inlined_call_operand.hbm [shape: f32[2,4,128], index: 17, kind: output, shape index: {}]
  %s18 = sld [smem:[#allocation0]]
  $region145: #{tpu_custom_call.1} parent=0
    _
  %s20 = ssub.s32 1, %s18
  %s21 = scalar_select 0, %s20, %s18
  $region1: #{tpu_custom_call.1} parent=0
    #allocation3 [shape = 'u8[8192]{0}', space=vmem, size = 0x2000, scoped, tag = 'input window, operand 1, single buffered']
    #allocation4 [shape = 's32[2]{0}', space=sflag, size = 0x8, scoped, tag = 'scoped memory for tpu_custom_call.1']
    #allocation5 [shape = 's32[2]{0}', space=sflag, size = 0x8, scoped, tag = 'scoped memory for tpu_custom_call.1']
    #allocation6 [shape = 'u8[16384]{0}', space=vmem, size = 0x4000, scoped, tag = 'input window, operand 3']
    #allocation7 [shape = 's32[2]{0}', space=sflag, size = 0x8, scoped, tag = 'scoped memory for tpu_custom_call.1']
    #allocation8 [shape = 'u8[1024]{0}', space=vmem, size = 0x400, scoped, tag = 'input window, operand 4']
    #allocation9 [shape = 'u8[16384]{0}', space=vmem, size = 0x4000, scoped, tag = 'input window, operand 5']
    #allocation10 [shape = 's32[2]{0}', space=sflag, size = 0x8, scoped, tag = 'scoped memory for tpu_custom_call.1']
    #allocation11 [shape = 'u8[1024]{0}', space=vmem, size = 0x400, scoped, tag = 'input window, operand 6']
    #allocation12 [shape = 'u8[1024]{0}', space=vmem, size = 0x400, scoped, tag = 'input window, operand 7']
    #allocation13 [shape = 's32[2]{0}', space=sflag, size = 0x8, scoped, tag = 'scoped memory for tpu_custom_call.1']
    #allocation14 [shape = 'u8[1024]{0}', space=vmem, size = 0x400, scoped, tag = 'input window, operand 8']
    #allocation15 [shape = 'u8[16384]{0}', space=vmem, size = 0x4000, scoped, tag = 'input window, operand 9']
    #allocation16 [shape = 's32[2]{0}', space=sflag, size = 0x8, scoped, tag = 'scoped memory for tpu_custom_call.1']
    #allocation17 [shape = 'u8[1024]{0}', space=vmem, size = 0x400, scoped, tag = 'input window, operand 10']
    #allocation18 [shape = 'u8[4096]{0}', space=vmem, size = 0x1000, scoped, tag = 'output window, operand 0']
    %22 = vsyncpa [#allocation4], 0
    %23 = vsyncpa [#allocation7], 0
    %s24 = scalar_lea.sflag [#allocation7], 1
    %25 = vsyncpa %s24, 0
    %26 = vsyncpa [#allocation10], 0
    %s27 = scalar_lea.sflag [#allocation10], 1
    %28 = vsyncpa %s27, 0
    %29 = vsyncpa [#allocation13], 0
    %s30 = scalar_lea.sflag [#allocation13], 1
    %31 = vsyncpa %s30, 0
    %32 = vsyncpa [#allocation16], 0
    %s33 = scalar_lea.sflag [#allocation16], 1
    %34 = vsyncpa %s33, 0
    %35 = vsyncpa [#allocation5], 0
    %s36 = scalar_lea.sflag [#allocation5], 1
    %37 = vsyncpa %s36, 0
    loop: start=0, step=1, limit=6
    $region2: #{tpu_custom_call.1} parent=1 // loop_pre_header
      _
    $region3: #{tpu_custom_call.1} parent=1 // loop_header
      %s39 = sphi 0, %s43
      %p40 = scmp.ge.s32.totalorder %s39, 6
      %s46 = sphi 0, %s58
      %s47 = sphi 0, %s54
      %s48 = sphi 0, %s46
      %s49 = sphi 0, %s47
      %s50 = sphi 0, %s48
      %s51 = sphi 0, %s49
      %s61 = sphi 0, %s63
      %s64 = sphi 0, %s61
      %s65 = sphi 0, %s64
      %s81 = sphi 0, %s65
      %s85 = sphi 0, %s85
      %s87 = sphi 0, %s85
      %s88 = sphi 0, %s87
      %s102 = sphi 0, %s88
      %s106 = sphi 0, %s106
      %s108 = sphi 0, %s106
      %s109 = sphi 0, %s108
      %s123 = sphi 0, %s109
      %s129 = sphi 0, %s131
      %s132 = sphi 0, %s129
      %s133 = sphi 0, %s132
      %s149 = sphi 0, %s133
      %s155 = sphi 0, %s157
      %s158 = sphi 0, %s155
      %s159 = sphi 0, %s158
      %s175 = sphi 0, %s159
      %s181 = sphi 0, %s183
      %s184 = sphi 0, %s181
      %s185 = sphi 0, %s184
      %s201 = sphi 0, %s185
      %s207 = sphi 0, %s209
      %s210 = sphi 0, %s207
      %s211 = sphi 0, %s210
      %s227 = sphi 0, %s211
      %s233 = sphi 0, %s235
      %s236 = sphi 0, %s233
      %s237 = sphi 0, %s236
      %s253 = sphi 0, %s237
      %s259 = sphi 0, %s261
      %s262 = sphi 0, %s259
      %s263 = sphi 0, %s262
      %s279 = sphi 0, %s263
      %s285 = sphi 0, %s287
      %s288 = sphi 0, %s285
      %s289 = sphi 0, %s288
      %s305 = sphi 0, %s289
      %s311 = sphi 0, %s313
      %s314 = sphi 0, %s311
      %s315 = sphi 0, %s314
      %s331 = sphi 0, %s315
      %s337 = sphi 0, %s339
      %s340 = sphi 0, %s337
      %s341 = sphi 0, %s340
      %s357 = sphi 0, %s341
      %s363 = sphi 0, %s365
      %s366 = sphi 0, %s363
      %s367 = sphi 0, %s366
      %s383 = sphi 0, %s367
      %s389 = sphi 0, %s391
      %s392 = sphi 0, %s389
      %s393 = sphi 0, %s392
      %s409 = sphi 0, %s393
      %s415 = sphi 0, %s417
      %s418 = sphi 0, %s415
      %s419 = sphi 0, %s418
      %s435 = sphi 0, %s419
      %s439 = sphi 0, %s439
      %s441 = sphi 0, %s439
      %s442 = sphi 0, %s441
      %s456 = sphi 0, %s442
      %s460 = sphi 0, %s460
      %s462 = sphi 0, %s460
      %s463 = sphi 0, %s462
      %s477 = sphi 0, %s463
      %s483 = sphi 0, %s485
      %s486 = sphi 0, %s483
      %s487 = sphi 0, %s486
      %s503 = sphi 0, %s487
    $region4: #{tpu_custom_call.1} parent=1 // loop_header_branch
      %42 = sbr.rel (%p40) target = $region8
    $region5: #{tpu_custom_call.1} parent=1 // loop_body
      %s44 = ssub.s32 %s39, 1
      %s45 = ssub.s32 %s39, 2
      %s52 = sadd.s32 1, %s47
      %p53 = scmp.ge.s32.totalorder %s52, 2
      %s54 = scalar_select %p53, 0, %s52
      %s55 = sadd.s32 1, %s46
      %s56 = scalar_select %p53, %s55, %s46
      %p57 = scmp.ge.s32.totalorder %s56, 2
      %s58 = scalar_select %p57, 0, %s56
      %s59 = ssub.s32 %s46, %s58
      %p60 = scmp.eq.s32.totalorder %s59, 0
      %s62 = sadd.s32 %s61, 1
      %s63 = scalar_select %p60, %s61, %s62
      %p66 = pneg %p60
      %p67 = scmp.eq.s32.totalorder %s39, 3
      %p68 = por %p66, %p67
      %p69 = scmp.ne.s32.totalorder %s61, %s64
      %p70 = scmp.eq.s32.totalorder %s39, 0
      %p71 = por %p69, %p70
      %p72 = scmp.ne.s32.totalorder %s61, %s64
      %p73 = scmp.eq.s32.totalorder %s44, 3
      %p74 = por %p72, %p73
      %p75 = scmp.ne.s32.totalorder %s64, %s65
      %p76 = scmp.eq.s32.totalorder %s44, 0
      %p77 = por %p75, %p76
      %p78 = scmp.ne.s32.totalorder %s64, %s65
      %p79 = scmp.eq.s32.totalorder %s45, 3
      %p80 = por %p78, %p79
      %p82 = scmp.ne.s32.totalorder %s65, %s81
      %p83 = scmp.eq.s32.totalorder %s45, 0
      %p84 = por %p82, %p83
      %s86 = sadd.s32 %s85, 1
      %p89 = scmp.eq.s32.totalorder %s39, 3
      %p90 = scmp.ne.s32.totalorder %s85, %s87
      %p91 = scmp.eq.s32.totalorder %s39, 0
      %p92 = por %p90, %p91
      %p93 = scmp.ne.s32.totalorder %s85, %s87
      %p94 = scmp.eq.s32.totalorder %s44, 3
      %p95 = por %p93, %p94
      %p96 = scmp.ne.s32.totalorder %s87, %s88
      %p97 = scmp.eq.s32.totalorder %s44, 0
      %p98 = por %p96, %p97
      %p99 = scmp.ne.s32.totalorder %s87, %s88
      %p100 = scmp.eq.s32.totalorder %s45, 3
      %p101 = por %p99, %p100
      %p103 = scmp.ne.s32.totalorder %s88, %s102
      %p104 = scmp.eq.s32.totalorder %s45, 0
      %p105 = por %p103, %p104
      %s107 = sadd.s32 %s106, 1
      %p110 = scmp.eq.s32.totalorder %s39, 3
      %p111 = scmp.ne.s32.totalorder %s106, %s108
      %p112 = scmp.eq.s32.totalorder %s39, 0
      %p113 = por %p111, %p112
      %p114 = scmp.ne.s32.totalorder %s106, %s108
      %p115 = scmp.eq.s32.totalorder %s44, 3
      %p116 = por %p114, %p115
      %p117 = scmp.ne.s32.totalorder %s108, %s109
      %p118 = scmp.eq.s32.totalorder %s44, 0
      %p119 = por %p117, %p118
      %p120 = scmp.ne.s32.totalorder %s108, %s109
      %p121 = scmp.eq.s32.totalorder %s45, 3
      %p122 = por %p120, %p121
      %p124 = scmp.ne.s32.totalorder %s109, %s123
      %p125 = scmp.eq.s32.totalorder %s45, 0
      %p126 = por %p124, %p125
      %s127 = ssub.s32 %s47, %s54
      %p128 = scmp.eq.s32.totalorder %s127, 0
      %s130 = sadd.s32 %s129, 1
      %s131 = scalar_select %p128, %s129, %s130
      %p134 = pneg %p128
      %p135 = scmp.eq.s32.totalorder %s39, 3
      %p136 = por %p134, %p135
      %p137 = scmp.ne.s32.totalorder %s129, %s132
      %p138 = scmp.eq.s32.totalorder %s39, 0
      %p139 = por %p137, %p138
      %p140 = scmp.ne.s32.totalorder %s129, %s132
      %p141 = scmp.eq.s32.totalorder %s44, 3
      %p142 = por %p140, %p141
      %p143 = scmp.ne.s32.totalorder %s132, %s133
      %p144 = scmp.eq.s32.totalorder %s44, 0
      %p145 = por %p143, %p144
      %p146 = scmp.ne.s32.totalorder %s132, %s133
      %p147 = scmp.eq.s32.totalorder %s45, 3
      %p148 = por %p146, %p147
      %p150 = scmp.ne.s32.totalorder %s133, %s149
      %p151 = scmp.eq.s32.totalorder %s45, 0
      %p152 = por %p150, %p151
      %s153 = ssub.s32 %s47, %s54
      %p154 = scmp.eq.s32.totalorder %s153, 0
      %s156 = sadd.s32 %s155, 1
      %s157 = scalar_select %p154, %s155, %s156
      %p160 = pneg %p154
      %p161 = scmp.eq.s32.totalorder %s39, 3
      %p162 = por %p160, %p161
      %p163 = scmp.ne.s32.totalorder %s155, %s158
      %p164 = scmp.eq.s32.totalorder %s39, 0
      %p165 = por %p163, %p164
      %p166 = scmp.ne.s32.totalorder %s155, %s158
      %p167 = scmp.eq.s32.totalorder %s44, 3
      %p168 = por %p166, %p167
      %p169 = scmp.ne.s32.totalorder %s158, %s159
      %p170 = scmp.eq.s32.totalorder %s44, 0
      %p171 = por %p169, %p170
      %p172 = scmp.ne.s32.totalorder %s158, %s159
      %p173 = scmp.eq.s32.totalorder %s45, 3
      %p174 = por %p172, %p173
      %p176 = scmp.ne.s32.totalorder %s159, %s175
      %p177 = scmp.eq.s32.totalorder %s45, 0
      %p178 = por %p176, %p177
      %s179 = ssub.s32 %s47, %s54
      %p180 = scmp.eq.s32.totalorder %s179, 0
      %s182 = sadd.s32 %s181, 1
      %s183 = scalar_select %p180, %s181, %s182
      %p186 = pneg %p180
      %p187 = scmp.eq.s32.totalorder %s39, 3
      %p188 = por %p186, %p187
      %p189 = scmp.ne.s32.totalorder %s181, %s184
      %p190 = scmp.eq.s32.totalorder %s39, 0
      %p191 = por %p189, %p190
      %p192 = scmp.ne.s32.totalorder %s181, %s184
      %p193 = scmp.eq.s32.totalorder %s44, 3
      %p194 = por %p192, %p193
      %p195 = scmp.ne.s32.totalorder %s184, %s185
      %p196 = scmp.eq.s32.totalorder %s44, 0
      %p197 = por %p195, %p196
      %p198 = scmp.ne.s32.totalorder %s184, %s185
      %p199 = scmp.eq.s32.totalorder %s45, 3
      %p200 = por %p198, %p199
      %p202 = scmp.ne.s32.totalorder %s185, %s201
      %p203 = scmp.eq.s32.totalorder %s45, 0
      %p204 = por %p202, %p203
      %s205 = ssub.s32 %s47, %s54
      %p206 = scmp.eq.s32.totalorder %s205, 0
      %s208 = sadd.s32 %s207, 1
      %s209 = scalar_select %p206, %s207, %s208
      %p212 = pneg %p206
      %p213 = scmp.eq.s32.totalorder %s39, 3
      %p214 = por %p212, %p213
      %p215 = scmp.ne.s32.totalorder %s207, %s210
      %p216 = scmp.eq.s32.totalorder %s39, 0
      %p217 = por %p215, %p216
      %p218 = scmp.ne.s32.totalorder %s207, %s210
      %p219 = scmp.eq.s32.totalorder %s44, 3
      %p220 = por %p218, %p219
      %p221 = scmp.ne.s32.totalorder %s210, %s211
      %p222 = scmp.eq.s32.totalorder %s44, 0
      %p223 = por %p221, %p222
      %p224 = scmp.ne.s32.totalorder %s210, %s211
      %p225 = scmp.eq.s32.totalorder %s45, 3
      %p226 = por %p224, %p225
      %p228 = scmp.ne.s32.totalorder %s211, %s227
      %p229 = scmp.eq.s32.totalorder %s45, 0
      %p230 = por %p228, %p229
      %s231 = ssub.s32 %s47, %s54
      %p232 = scmp.eq.s32.totalorder %s231, 0
      %s234 = sadd.s32 %s233, 1
      %s235 = scalar_select %p232, %s233, %s234
      %p238 = pneg %p232
      %p239 = scmp.eq.s32.totalorder %s39, 3
      %p240 = por %p238, %p239
      %p241 = scmp.ne.s32.totalorder %s233, %s236
      %p242 = scmp.eq.s32.totalorder %s39, 0
      %p243 = por %p241, %p242
      %p244 = scmp.ne.s32.totalorder %s233, %s236
      %p245 = scmp.eq.s32.totalorder %s44, 3
      %p246 = por %p244, %p245
      %p247 = scmp.ne.s32.totalorder %s236, %s237
      %p248 = scmp.eq.s32.totalorder %s44, 0
      %p249 = por %p247, %p248
      %p250 = scmp.ne.s32.totalorder %s236, %s237
      %p251 = scmp.eq.s32.totalorder %s45, 3
      %p252 = por %p250, %p251
      %p254 = scmp.ne.s32.totalorder %s237, %s253
      %p255 = scmp.eq.s32.totalorder %s45, 0
      %p256 = por %p254, %p255
      %s257 = ssub.s32 %s47, %s54
      %p258 = scmp.eq.s32.totalorder %s257, 0
      %s260 = sadd.s32 %s259, 1
      %s261 = scalar_select %p258, %s259, %s260
      %p264 = pneg %p258
      %p265 = scmp.eq.s32.totalorder %s39, 3
      %p266 = por %p264, %p265
      %p267 = scmp.ne.s32.totalorder %s259, %s262
      %p268 = scmp.eq.s32.totalorder %s39, 0
      %p269 = por %p267, %p268
      %p270 = scmp.ne.s32.totalorder %s259, %s262
      %p271 = scmp.eq.s32.totalorder %s44, 3
      %p272 = por %p270, %p271
      %p273 = scmp.ne.s32.totalorder %s262, %s263
      %p274 = scmp.eq.s32.totalorder %s44, 0
      %p275 = por %p273, %p274
      %p276 = scmp.ne.s32.totalorder %s262, %s263
      %p277 = scmp.eq.s32.totalorder %s45, 3
      %p278 = por %p276, %p277
      %p280 = scmp.ne.s32.totalorder %s263, %s279
      %p281 = scmp.eq.s32.totalorder %s45, 0
      %p282 = por %p280, %p281
      %s283 = ssub.s32 %s47, %s54
      %p284 = scmp.eq.s32.totalorder %s283, 0
      %s286 = sadd.s32 %s285, 1
      %s287 = scalar_select %p284, %s285, %s286
      %p290 = pneg %p284
      %p291 = scmp.eq.s32.totalorder %s39, 3
      %p292 = por %p290, %p291
      %p293 = scmp.ne.s32.totalorder %s285, %s288
      %p294 = scmp.eq.s32.totalorder %s39, 0
      %p295 = por %p293, %p294
      %p296 = scmp.ne.s32.totalorder %s285, %s288
      %p297 = scmp.eq.s32.totalorder %s44, 3
      %p298 = por %p296, %p297
      %p299 = scmp.ne.s32.totalorder %s288, %s289
      %p300 = scmp.eq.s32.totalorder %s44, 0
      %p301 = por %p299, %p300
      %p302 = scmp.ne.s32.totalorder %s288, %s289
      %p303 = scmp.eq.s32.totalorder %s45, 3
      %p304 = por %p302, %p303
      %p306 = scmp.ne.s32.totalorder %s289, %s305
      %p307 = scmp.eq.s32.totalorder %s45, 0
      %p308 = por %p306, %p307
      %s309 = ssub.s32 %s47, %s54
      %p310 = scmp.eq.s32.totalorder %s309, 0
      %s312 = sadd.s32 %s311, 1
      %s313 = scalar_select %p310, %s311, %s312
      %p316 = pneg %p310
      %p317 = scmp.eq.s32.totalorder %s39, 3
      %p318 = por %p316, %p317
      %p319 = scmp.ne.s32.totalorder %s311, %s314
      %p320 = scmp.eq.s32.totalorder %s39, 0
      %p321 = por %p319, %p320
      %p322 = scmp.ne.s32.totalorder %s311, %s314
      %p323 = scmp.eq.s32.totalorder %s44, 3
      %p324 = por %p322, %p323
      %p325 = scmp.ne.s32.totalorder %s314, %s315
      %p326 = scmp.eq.s32.totalorder %s44, 0
      %p327 = por %p325, %p326
      %p328 = scmp.ne.s32.totalorder %s314, %s315
      %p329 = scmp.eq.s32.totalorder %s45, 3
      %p330 = por %p328, %p329
      %p332 = scmp.ne.s32.totalorder %s315, %s331
      %p333 = scmp.eq.s32.totalorder %s45, 0
      %p334 = por %p332, %p333
      %s335 = ssub.s32 %s47, %s54
      %p336 = scmp.eq.s32.totalorder %s335, 0
      %s338 = sadd.s32 %s337, 1
      %s339 = scalar_select %p336, %s337, %s338
      %p342 = pneg %p336
      %p343 = scmp.eq.s32.totalorder %s39, 3
      %p344 = por %p342, %p343
      %p345 = scmp.ne.s32.totalorder %s337, %s340
      %p346 = scmp.eq.s32.totalorder %s39, 0
      %p347 = por %p345, %p346
      %p348 = scmp.ne.s32.totalorder %s337, %s340
      %p349 = scmp.eq.s32.totalorder %s44, 3
      %p350 = por %p348, %p349
      %p351 = scmp.ne.s32.totalorder %s340, %s341
      %p352 = scmp.eq.s32.totalorder %s44, 0
      %p353 = por %p351, %p352
      %p354 = scmp.ne.s32.totalorder %s340, %s341
      %p355 = scmp.eq.s32.totalorder %s45, 3
      %p356 = por %p354, %p355
      %p358 = scmp.ne.s32.totalorder %s341, %s357
      %p359 = scmp.eq.s32.totalorder %s45, 0
      %p360 = por %p358, %p359
      %s361 = ssub.s32 %s47, %s54
      %p362 = scmp.eq.s32.totalorder %s361, 0
      %s364 = sadd.s32 %s363, 1
      %s365 = scalar_select %p362, %s363, %s364
      %p368 = pneg %p362
      %p369 = scmp.eq.s32.totalorder %s39, 3
      %p370 = por %p368, %p369
      %p371 = scmp.ne.s32.totalorder %s363, %s366
      %p372 = scmp.eq.s32.totalorder %s39, 0
      %p373 = por %p371, %p372
      %p374 = scmp.ne.s32.totalorder %s363, %s366
      %p375 = scmp.eq.s32.totalorder %s44, 3
      %p376 = por %p374, %p375
      %p377 = scmp.ne.s32.totalorder %s366, %s367
      %p378 = scmp.eq.s32.totalorder %s44, 0
      %p379 = por %p377, %p378
      %p380 = scmp.ne.s32.totalorder %s366, %s367
      %p381 = scmp.eq.s32.totalorder %s45, 3
      %p382 = por %p380, %p381
      %p384 = scmp.ne.s32.totalorder %s367, %s383
      %p385 = scmp.eq.s32.totalorder %s45, 0
      %p386 = por %p384, %p385
      %s387 = ssub.s32 %s47, %s54
      %p388 = scmp.eq.s32.totalorder %s387, 0
      %s390 = sadd.s32 %s389, 1
      %s391 = scalar_select %p388, %s389, %s390
      %p394 = pneg %p388
      %p395 = scmp.eq.s32.totalorder %s39, 3
      %p396 = por %p394, %p395
      %p397 = scmp.ne.s32.totalorder %s389, %s392
      %p398 = scmp.eq.s32.totalorder %s39, 0
      %p399 = por %p397, %p398
      %p400 = scmp.ne.s32.totalorder %s389, %s392
      %p401 = scmp.eq.s32.totalorder %s44, 3
      %p402 = por %p400, %p401
      %p403 = scmp.ne.s32.totalorder %s392, %s393
      %p404 = scmp.eq.s32.totalorder %s44, 0
      %p405 = por %p403, %p404
      %p406 = scmp.ne.s32.totalorder %s392, %s393
      %p407 = scmp.eq.s32.totalorder %s45, 3
      %p408 = por %p406, %p407
      %p410 = scmp.ne.s32.totalorder %s393, %s409
      %p411 = scmp.eq.s32.totalorder %s45, 0
      %p412 = por %p410, %p411
      %s413 = ssub.s32 %s47, %s54
      %p414 = scmp.eq.s32.totalorder %s413, 0
      %s416 = sadd.s32 %s415, 1
      %s417 = scalar_select %p414, %s415, %s416
      %p420 = pneg %p414
      %p421 = scmp.eq.s32.totalorder %s39, 3
      %p422 = por %p420, %p421
      %p423 = scmp.ne.s32.totalorder %s415, %s418
      %p424 = scmp.eq.s32.totalorder %s39, 0
      %p425 = por %p423, %p424
      %p426 = scmp.ne.s32.totalorder %s415, %s418
      %p427 = scmp.eq.s32.totalorder %s44, 3
      %p428 = por %p426, %p427
      %p429 = scmp.ne.s32.totalorder %s418, %s419
      %p430 = scmp.eq.s32.totalorder %s44, 0
      %p431 = por %p429, %p430
      %p432 = scmp.ne.s32.totalorder %s418, %s419
      %p433 = scmp.eq.s32.totalorder %s45, 3
      %p434 = por %p432, %p433
      %p436 = scmp.ne.s32.totalorder %s419, %s435
      %p437 = scmp.eq.s32.totalorder %s45, 0
      %p438 = por %p436, %p437
      %s440 = sadd.s32 %s439, 1
      %p443 = scmp.eq.s32.totalorder %s39, 3
      %p444 = scmp.ne.s32.totalorder %s439, %s441
      %p445 = scmp.eq.s32.totalorder %s39, 0
      %p446 = por %p444, %p445
      %p447 = scmp.ne.s32.totalorder %s439, %s441
      %p448 = scmp.eq.s32.totalorder %s44, 3
      %p449 = por %p447, %p448
      %p450 = scmp.ne.s32.totalorder %s441, %s442
      %p451 = scmp.eq.s32.totalorder %s44, 0
      %p452 = por %p450, %p451
      %p453 = scmp.ne.s32.totalorder %s441, %s442
      %p454 = scmp.eq.s32.totalorder %s45, 3
      %p455 = por %p453, %p454
      %p457 = scmp.ne.s32.totalorder %s442, %s456
      %p458 = scmp.eq.s32.totalorder %s45, 0
      %p459 = por %p457, %p458
      %s461 = sadd.s32 %s460, 1
      %p464 = scmp.eq.s32.totalorder %s39, 3
      %p465 = scmp.ne.s32.totalorder %s460, %s462
      %p466 = scmp.eq.s32.totalorder %s39, 0
      %p467 = por %p465, %p466
      %p468 = scmp.ne.s32.totalorder %s460, %s462
      %p469 = scmp.eq.s32.totalorder %s44, 3
      %p470 = por %p468, %p469
      %p471 = scmp.ne.s32.totalorder %s462, %s463
      %p472 = scmp.eq.s32.totalorder %s44, 0
      %p473 = por %p471, %p472
      %p474 = scmp.ne.s32.totalorder %s462, %s463
      %p475 = scmp.eq.s32.totalorder %s45, 3
      %p476 = por %p474, %p475
      %p478 = scmp.ne.s32.totalorder %s463, %s477
      %p479 = scmp.eq.s32.totalorder %s45, 0
      %p480 = por %p478, %p479
      %s481 = ssub.s32 %s46, %s58
      %p482 = scmp.eq.s32.totalorder %s481, 0
      %s484 = sadd.s32 %s483, 1
      %s485 = scalar_select %p482, %s483, %s484
      %p488 = pneg %p482
      %p489 = scmp.eq.s32.totalorder %s39, 3
      %p490 = por %p488, %p489
      %p491 = scmp.ne.s32.totalorder %s483, %s486
      %p492 = scmp.eq.s32.totalorder %s39, 0
      %p493 = por %p491, %p492
      %p494 = scmp.ne.s32.totalorder %s483, %s486
      %p495 = scmp.eq.s32.totalorder %s44, 3
      %p496 = por %p494, %p495
      %p497 = scmp.ne.s32.totalorder %s486, %s487
      %p498 = scmp.eq.s32.totalorder %s44, 0
      %p499 = por %p497, %p498
      %p500 = scmp.ne.s32.totalorder %s486, %s487
      %p501 = scmp.eq.s32.totalorder %s45, 3
      %p502 = por %p500, %p501
      %p504 = scmp.ne.s32.totalorder %s487, %s503
      %p505 = scmp.eq.s32.totalorder %s45, 0
      %p506 = por %p504, %p505
      %p507 = scmp.le.s32.totalorder 1, %s39
      %p508 = scmp.lt.s32.totalorder %s39, 5
      %p509 = pnand %p507, %p508
      %p510 = pneg %p509
      // Predicated region
      $region9: #{tpu_custom_call.1} parent=5 // pred_check
        _
      $region10: #{tpu_custom_call.1} parent=5 // pred_check_branch
        %512 = sbr.rel (%p509) target = $region12
      $region11: #{tpu_custom_call.1} parent=5 // pred_region
        %s513 = ssub.s32 %s39, 1
        // Predicated region
        $region13: #{tpu_custom_call.1} parent=11 // pred_check
          %p514 = pneg %p98
        $region14: #{tpu_custom_call.1} parent=11 // pred_check_branch
          %516 = sbr.rel (%p514) target = $region16
        $region15: #{tpu_custom_call.1} parent=11 // pred_region
          %s518 = ssub.s32 256, 256
          %519 = vsyncadd [#allocation4], %s518
          %s520 = sshll.u32 [#allocation3], 4
          %s521 = int_to_ptr.vmem [resolvable:$true] %s520
          %526 = dma.hbm_to_vmem [thread:$0]  %s1, 256, %s521, [#allocation4], 128, 128, 8
        $region16: #{tpu_custom_call.1} parent=11 // pred_fallthru
          _
        // Predicated region
        $region17: #{tpu_custom_call.1} parent=11 // pred_check
          %p527 = pneg %p119
        $region18: #{tpu_custom_call.1} parent=11 // pred_check_branch
          %529 = sbr.rel (%p527) target = $region20
        $region19: #{tpu_custom_call.1} parent=11 // pred_region
          _
        $region20: #{tpu_custom_call.1} parent=11 // pred_fallthru
          _
        // Predicated region
        $region21: #{tpu_custom_call.1} parent=11 // pred_check
          %p530 = pneg %p452
        $region22: #{tpu_custom_call.1} parent=11 // pred_check_branch
          %532 = sbr.rel (%p530) target = $region24
        $region23: #{tpu_custom_call.1} parent=11 // pred_region
          _
        $region24: #{tpu_custom_call.1} parent=11 // pred_fallthru
          _
        // Predicated region
        $region25: #{tpu_custom_call.1} parent=11 // pred_check
          %p533 = pneg %p473
        $region26: #{tpu_custom_call.1} parent=11 // pred_check_branch
          %535 = sbr.rel (%p533) target = $region28
        $region27: #{tpu_custom_call.1} parent=11 // pred_region
          _
        $region28: #{tpu_custom_call.1} parent=11 // pred_fallthru
          _
      $region12: #{tpu_custom_call.1} parent=5 // pred_fallthru
        _
      %p536 = scmp.lt.s32.totalorder %s39, 4
      // Predicated region
      $region29: #{tpu_custom_call.1} parent=5 // pred_check
        %p537 = pneg %p536
      $region30: #{tpu_custom_call.1} parent=5 // pred_check_branch
        %539 = sbr.rel (%p537) target = $region32
      $region31: #{tpu_custom_call.1} parent=5 // pred_region
        // Predicated region
        $region33: #{tpu_custom_call.1} parent=31 // pred_check
          %p540 = pneg %p71
        $region34: #{tpu_custom_call.1} parent=31 // pred_check_branch
          %542 = sbr.rel (%p540) target = $region36
        $region35: #{tpu_custom_call.1} parent=31 // pred_region
          %s543 = smul.u32 4, %s46
          %p544 = scmp.lt.s32.totalorder %s543, 7
          %s545 = scalar_select %p544, %s543, 7
          %s546 = smul.addr %s545, 2
          %s547 = smul.addr %s546, 8
          %s548 = scalar_lea.vmem %s0, %s547
          %s549 = smul.u32 4, %s46
        $region36: #{tpu_custom_call.1} parent=31 // pred_fallthru
          _
        // Predicated region
        $region37: #{tpu_custom_call.1} parent=31 // pred_check
          %p550 = pneg %p139
        $region38: #{tpu_custom_call.1} parent=31 // pred_check_branch
          %552 = sbr.rel (%p550) target = $region40
        $region39: #{tpu_custom_call.1} parent=31 // pred_region
          %s553 = sand.u32 %s39, 1
          %s554 = scalar_lea.sflag [#allocation7], %s553
          %s555 = sand.u32 %s129, 1
          %s556 = smul.addr %s555, 16
          %s557 = scalar_lea.vmem [#allocation6], %s556
          %s559 = ssub.s32 256, 256
          %560 = vsyncadd %s554, %s559
          %s561 = smul.addr %s47, 4
          %s562 = smul.addr %s561, 64
          %s563 = scalar_lea.hbm %s3, %s562
          %s564 = sshll.u32 %s557, 4
          %s565 = int_to_ptr.vmem [resolvable:$true] %s564
          %570 = dma.hbm_to_vmem [thread:$0]  %s563, 256, %s565, %s554, 64, 64, 4
        $region40: #{tpu_custom_call.1} parent=31 // pred_fallthru
          _
        // Predicated region
        $region41: #{tpu_custom_call.1} parent=31 // pred_check
          %p571 = pneg %p165
        $region42: #{tpu_custom_call.1} parent=31 // pred_check_branch
          %573 = sbr.rel (%p571) target = $region44
        $region43: #{tpu_custom_call.1} parent=31 // pred_region
          %s574 = sand.u32 %s39, 1
          %s575 = scalar_lea.sflag [#allocation7], %s574
          %s576 = sand.u32 %s155, 1
          %s577 = scalar_lea.vmem [#allocation8], %s576
          %s579 = ssub.s32 16, 16
          %580 = vsyncadd %s575, %s579
          %s581 = smul.addr %s47, 16
          %s582 = scalar_lea.hbm %s4, %s581
          %s584 = sshll.u32 %s577, 4
          %s585 = int_to_ptr.vmem [resolvable:$true] %s584
          %587 = dma.hbm_to_vmem [thread:$0]  %s582, 16, %s585, %s575
        $region44: #{tpu_custom_call.1} parent=31 // pred_fallthru
          _
        // Predicated region
        $region45: #{tpu_custom_call.1} parent=31 // pred_check
          %p588 = pneg %p191
        $region46: #{tpu_custom_call.1} parent=31 // pred_check_branch
          %590 = sbr.rel (%p588) target = $region48
        $region47: #{tpu_custom_call.1} parent=31 // pred_region
          %s591 = sand.u32 %s39, 1
          %s592 = scalar_lea.sflag [#allocation10], %s591
          %s593 = sand.u32 %s181, 1
          %s594 = smul.addr %s593, 16
          %s595 = scalar_lea.vmem [#allocation9], %s594
          %s597 = ssub.s32 256, 256
          %598 = vsyncadd %s592, %s597
          %s599 = smul.addr %s47, 4
          %s600 = smul.addr %s599, 64
          %s601 = scalar_lea.hbm %s5, %s600
          %s602 = sshll.u32 %s595, 4
          %s603 = int_to_ptr.vmem [resolvable:$true] %s602
          %608 = dma.hbm_to_vmem [thread:$0]  %s601, 256, %s603, %s592, 64, 64, 4
        $region48: #{tpu_custom_call.1} parent=31 // pred_fallthru
          _
        // Predicated region
        $region49: #{tpu_custom_call.1} parent=31 // pred_check
          %p609 = pneg %p217
        $region50: #{tpu_custom_call.1} parent=31 // pred_check_branch
          %611 = sbr.rel (%p609) target = $region52
        $region51: #{tpu_custom_call.1} parent=31 // pred_region
          %s612 = sand.u32 %s39, 1
          %s613 = scalar_lea.sflag [#allocation10], %s612
          %s614 = sand.u32 %s207, 1
          %s615 = scalar_lea.vmem [#allocation11], %s614
          %s617 = ssub.s32 16, 16
          %618 = vsyncadd %s613, %s617
          %s619 = smul.addr %s47, 16
          %s620 = scalar_lea.hbm %s6, %s619
          %s622 = sshll.u32 %s615, 4
          %s623 = int_to_ptr.vmem [resolvable:$true] %s622
          %625 = dma.hbm_to_vmem [thread:$0]  %s620, 16, %s623, %s613
        $region52: #{tpu_custom_call.1} parent=31 // pred_fallthru
          _
        // Predicated region
        $region53: #{tpu_custom_call.1} parent=31 // pred_check
          %p626 = pneg %p243
        $region54: #{tpu_custom_call.1} parent=31 // pred_check_branch
          %628 = sbr.rel (%p626) target = $region56
        $region55: #{tpu_custom_call.1} parent=31 // pred_region
          %s629 = sand.u32 %s39, 1
          %s630 = scalar_lea.sflag [#allocation13], %s629
          %s631 = sand.u32 %s233, 1
          %s632 = scalar_lea.vmem [#allocation12], %s631
          %s634 = ssub.s32 16, 16
          %635 = vsyncadd %s630, %s634
          %s636 = smul.addr %s47, 16
          %s637 = scalar_lea.hbm %s7, %s636
          %s639 = sshll.u32 %s632, 4
          %s640 = int_to_ptr.vmem [resolvable:$true] %s639
          %642 = dma.hbm_to_vmem [thread:$0]  %s637, 16, %s640, %s630
        $region56: #{tpu_custom_call.1} parent=31 // pred_fallthru
          _
        // Predicated region
        $region57: #{tpu_custom_call.1} parent=31 // pred_check
          %p643 = pneg %p269
        $region58: #{tpu_custom_call.1} parent=31 // pred_check_branch
          %645 = sbr.rel (%p643) target = $region60
        $region59: #{tpu_custom_call.1} parent=31 // pred_region
          %s646 = sand.u32 %s39, 1
          %s647 = scalar_lea.sflag [#allocation13], %s646
          %s648 = sand.u32 %s259, 1
          %s649 = scalar_lea.vmem [#allocation14], %s648
          %s651 = ssub.s32 16, 16
          %652 = vsyncadd %s647, %s651
          %s653 = smul.addr %s47, 16
          %s654 = scalar_lea.hbm %s8, %s653
          %s656 = sshll.u32 %s649, 4
          %s657 = int_to_ptr.vmem [resolvable:$true] %s656
          %659 = dma.hbm_to_vmem [thread:$0]  %s654, 16, %s657, %s647
        $region60: #{tpu_custom_call.1} parent=31 // pred_fallthru
          _
        // Predicated region
        $region61: #{tpu_custom_call.1} parent=31 // pred_check
          %p660 = pneg %p295
        $region62: #{tpu_custom_call.1} parent=31 // pred_check_branch
          %662 = sbr.rel (%p660) target = $region64
        $region63: #{tpu_custom_call.1} parent=31 // pred_region
          %s663 = sand.u32 %s39, 1
          %s664 = scalar_lea.sflag [#allocation16], %s663
          %s665 = sand.u32 %s285, 1
          %s666 = smul.addr %s665, 16
          %s667 = scalar_lea.vmem [#allocation15], %s666
          %s669 = ssub.s32 256, 256
          %670 = vsyncadd %s664, %s669
          %s671 = smul.addr %s47, 4
          %s672 = smul.addr %s671, 64
          %s673 = scalar_lea.hbm %s9, %s672
          %s674 = sshll.u32 %s667, 4
          %s675 = int_to_ptr.vmem [resolvable:$true] %s674
          %680 = dma.hbm_to_vmem [thread:$0]  %s673, 256, %s675, %s664, 64, 64, 4
        $region64: #{tpu_custom_call.1} parent=31 // pred_fallthru
          _
        // Predicated region
        $region65: #{tpu_custom_call.1} parent=31 // pred_check
          %p681 = pneg %p321
        $region66: #{tpu_custom_call.1} parent=31 // pred_check_branch
          %683 = sbr.rel (%p681) target = $region68
        $region67: #{tpu_custom_call.1} parent=31 // pred_region
          %s684 = sand.u32 %s39, 1
          %s685 = scalar_lea.sflag [#allocation16], %s684
          %s686 = sand.u32 %s311, 1
          %s687 = scalar_lea.vmem [#allocation17], %s686
          %s689 = ssub.s32 16, 16
          %690 = vsyncadd %s685, %s689
          %s691 = smul.addr %s47, 16
          %s692 = scalar_lea.hbm %s10, %s691
          %s694 = sshll.u32 %s687, 4
          %s695 = int_to_ptr.vmem [resolvable:$true] %s694
          %697 = dma.hbm_to_vmem [thread:$0]  %s692, 16, %s695, %s685
        $region68: #{tpu_custom_call.1} parent=31 // pred_fallthru
          _
        // Predicated region
        $region69: #{tpu_custom_call.1} parent=31 // pred_check
          %p698 = pneg %p347
        $region70: #{tpu_custom_call.1} parent=31 // pred_check_branch
          %700 = sbr.rel (%p698) target = $region72
        $region71: #{tpu_custom_call.1} parent=31 // pred_region
          %p701 = scmp.lt.s32.totalorder %s47, 1
          %s702 = scalar_select %p701, %s47, 1
          %s703 = smul.addr %s702, 8
          %s704 = smul.addr %s703, 4
          %s705 = scalar_lea.vmem %s11, %s704
        $region72: #{tpu_custom_call.1} parent=31 // pred_fallthru
          _
        // Predicated region
        $region73: #{tpu_custom_call.1} parent=31 // pred_check
          %p706 = pneg %p373
        $region74: #{tpu_custom_call.1} parent=31 // pred_check_branch
          %708 = sbr.rel (%p706) target = $region76
        $region75: #{tpu_custom_call.1} parent=31 // pred_region
          %p709 = scmp.lt.s32.totalorder %s47, 1
          %s710 = scalar_select %p709, %s47, 1
          %s711 = scalar_lea.vmem %s12, %s710
        $region76: #{tpu_custom_call.1} parent=31 // pred_fallthru
          _
        // Predicated region
        $region77: #{tpu_custom_call.1} parent=31 // pred_check
          %p712 = pneg %p399
        $region78: #{tpu_custom_call.1} parent=31 // pred_check_branch
          %714 = sbr.rel (%p712) target = $region80
        $region79: #{tpu_custom_call.1} parent=31 // pred_region
          %p715 = scmp.lt.s32.totalorder %s47, 1
          %s716 = scalar_select %p715, %s47, 1
          %s717 = scalar_lea.vmem %s13, %s716
        $region80: #{tpu_custom_call.1} parent=31 // pred_fallthru
          _
        // Predicated region
        $region81: #{tpu_custom_call.1} parent=31 // pred_check
          %p718 = pneg %p425
        $region82: #{tpu_custom_call.1} parent=31 // pred_check_branch
          %720 = sbr.rel (%p718) target = $region84
        $region83: #{tpu_custom_call.1} parent=31 // pred_region
          %p721 = scmp.lt.s32.totalorder %s47, 1
          %s722 = scalar_select %p721, %s47, 1
          %s723 = scalar_lea.vmem %s14, %s722
        $region84: #{tpu_custom_call.1} parent=31 // pred_fallthru
          _
      $region32: #{tpu_custom_call.1} parent=5 // pred_fallthru
        _
      %p724 = scmp.le.s32.totalorder 1, %s39
      %p725 = scmp.lt.s32.totalorder %s39, 5
      %p726 = pnand %p724, %p725
      %p727 = pneg %p726
      // Predicated region
      $region85: #{tpu_custom_call.1} parent=5 // pred_check
        _
      $region86: #{tpu_custom_call.1} parent=5 // pred_check_branch
        %729 = sbr.rel (%p726) target = $region88
      $region87: #{tpu_custom_call.1} parent=5 // pred_region
        %s730 = ssub.s32 %s39, 1
        // Predicated region
        $region89: #{tpu_custom_call.1} parent=87 // pred_check
          %p731 = pneg %p98
        $region90: #{tpu_custom_call.1} parent=87 // pred_check_branch
          %733 = sbr.rel (%p731) target = $region92
        $region91: #{tpu_custom_call.1} parent=87 // pred_region
          %734 = dma.done [#allocation4], 256
        $region92: #{tpu_custom_call.1} parent=87 // pred_fallthru
          _
        %s735 = sand.u32 %s44, 1
        %s736 = scalar_lea.sflag [#allocation7], %s735
        %s737 = sand.u32 %s132, 1
        %s738 = smul.addr %s737, 16
        %s739 = scalar_lea.vmem [#allocation6], %s738
        // Predicated region
        $region93: #{tpu_custom_call.1} parent=87 // pred_check
          %p740 = pneg %p145
        $region94: #{tpu_custom_call.1} parent=87 // pred_check_branch
          %742 = sbr.rel (%p740) target = $region96
        $region95: #{tpu_custom_call.1} parent=87 // pred_region
          %743 = dma.done %s736, 256
        $region96: #{tpu_custom_call.1} parent=87 // pred_fallthru
          _
        %s744 = sand.u32 %s44, 1
        %s745 = scalar_lea.sflag [#allocation7], %s744
        %s746 = sand.u32 %s158, 1
        %s747 = scalar_lea.vmem [#allocation8], %s746
        // Predicated region
        $region97: #{tpu_custom_call.1} parent=87 // pred_check
          %p748 = pneg %p171
        $region98: #{tpu_custom_call.1} parent=87 // pred_check_branch
          %750 = sbr.rel (%p748) target = $region100
        $region99: #{tpu_custom_call.1} parent=87 // pred_region
          %751 = dma.done %s745, 16
        $region100: #{tpu_custom_call.1} parent=87 // pred_fallthru
          _
        %s752 = sand.u32 %s44, 1
        %s753 = scalar_lea.sflag [#allocation10], %s752
        %s754 = sand.u32 %s184, 1
        %s755 = smul.addr %s754, 16
        %s756 = scalar_lea.vmem [#allocation9], %s755
        // Predicated region
        $region101: #{tpu_custom_call.1} parent=87 // pred_check
          %p757 = pneg %p197
        $region102: #{tpu_custom_call.1} parent=87 // pred_check_branch
          %759 = sbr.rel (%p757) target = $region104
        $region103: #{tpu_custom_call.1} parent=87 // pred_region
          %760 = dma.done %s753, 256
        $region104: #{tpu_custom_call.1} parent=87 // pred_fallthru
          _
        %s761 = sand.u32 %s44, 1
        %s762 = scalar_lea.sflag [#allocation10], %s761
        %s763 = sand.u32 %s210, 1
        %s764 = scalar_lea.vmem [#allocation11], %s763
        // Predicated region
        $region105: #{tpu_custom_call.1} parent=87 // pred_check
          %p765 = pneg %p223
        $region106: #{tpu_custom_call.1} parent=87 // pred_check_branch
          %767 = sbr.rel (%p765) target = $region108
        $region107: #{tpu_custom_call.1} parent=87 // pred_region
          %768 = dma.done %s762, 16
        $region108: #{tpu_custom_call.1} parent=87 // pred_fallthru
          _
        %s769 = sand.u32 %s44, 1
        %s770 = scalar_lea.sflag [#allocation13], %s769
        %s771 = sand.u32 %s236, 1
        %s772 = scalar_lea.vmem [#allocation12], %s771
        // Predicated region
        $region109: #{tpu_custom_call.1} parent=87 // pred_check
          %p773 = pneg %p249
        $region110: #{tpu_custom_call.1} parent=87 // pred_check_branch
          %775 = sbr.rel (%p773) target = $region112
        $region111: #{tpu_custom_call.1} parent=87 // pred_region
          %776 = dma.done %s770, 16
        $region112: #{tpu_custom_call.1} parent=87 // pred_fallthru
          _
        %s777 = sand.u32 %s44, 1
        %s778 = scalar_lea.sflag [#allocation13], %s777
        %s779 = sand.u32 %s262, 1
        %s780 = scalar_lea.vmem [#allocation14], %s779
        // Predicated region
        $region113: #{tpu_custom_call.1} parent=87 // pred_check
          %p781 = pneg %p275
        $region114: #{tpu_custom_call.1} parent=87 // pred_check_branch
          %783 = sbr.rel (%p781) target = $region116
        $region115: #{tpu_custom_call.1} parent=87 // pred_region
          %784 = dma.done %s778, 16
        $region116: #{tpu_custom_call.1} parent=87 // pred_fallthru
          _
        %s785 = sand.u32 %s44, 1
        %s786 = scalar_lea.sflag [#allocation16], %s785
        %s787 = sand.u32 %s288, 1
        %s788 = smul.addr %s787, 16
        %s789 = scalar_lea.vmem [#allocation15], %s788
        // Predicated region
        $region117: #{tpu_custom_call.1} parent=87 // pred_check
          %p790 = pneg %p301
        $region118: #{tpu_custom_call.1} parent=87 // pred_check_branch
          %792 = sbr.rel (%p790) target = $region120
        $region119: #{tpu_custom_call.1} parent=87 // pred_region
          %793 = dma.done %s786, 256
        $region120: #{tpu_custom_call.1} parent=87 // pred_fallthru
          _
        %s794 = sand.u32 %s44, 1
        %s795 = scalar_lea.sflag [#allocation16], %s794
        %s796 = sand.u32 %s314, 1
        %s797 = scalar_lea.vmem [#allocation17], %s796
        // Predicated region
        $region121: #{tpu_custom_call.1} parent=87 // pred_check
          %p798 = pneg %p327
        $region122: #{tpu_custom_call.1} parent=87 // pred_check_branch
          %800 = sbr.rel (%p798) target = $region124
        $region123: #{tpu_custom_call.1} parent=87 // pred_region
          %801 = dma.done %s795, 16
        $region124: #{tpu_custom_call.1} parent=87 // pred_fallthru
          _
        %s802 = smul.u32 4, %s48
        %p803 = scmp.lt.s32.totalorder %s802, 7
        %s804 = scalar_select %p803, %s802, 7
        %s805 = smul.addr %s804, 2
        %s806 = smul.addr %s805, 8
        %s807 = scalar_lea.vmem %s0, %s806
        %p808 = pneg %p77
        %p809 = pneg %p74
        %p810 = pneg %p98
        %p811 = pneg %p95
        %p812 = pneg %p119
        %p813 = pneg %p116
        %s814 = sand.u32 %s44, 1
        %s815 = scalar_lea.sflag [#allocation7], %s814
        %s816 = sand.u32 %s132, 1
        %s817 = smul.addr %s816, 16
        %s818 = scalar_lea.vmem [#allocation6], %s817
        %p819 = pneg %p145
        %p820 = pneg %p142
        %s821 = sand.u32 %s44, 1
        %s822 = scalar_lea.sflag [#allocation7], %s821
        %s823 = sand.u32 %s158, 1
        %s824 = scalar_lea.vmem [#allocation8], %s823
        %p825 = pneg %p171
        %p826 = pneg %p168
        %s827 = sand.u32 %s44, 1
        %s828 = scalar_lea.sflag [#allocation10], %s827
        %s829 = sand.u32 %s184, 1
        %s830 = smul.addr %s829, 16
        %s831 = scalar_lea.vmem [#allocation9], %s830
        %p832 = pneg %p197
        %p833 = pneg %p194
        %s834 = sand.u32 %s44, 1
        %s835 = scalar_lea.sflag [#allocation10], %s834
        %s836 = sand.u32 %s210, 1
        %s837 = scalar_lea.vmem [#allocation11], %s836
        %p838 = pneg %p223
        %p839 = pneg %p220
        %s840 = sand.u32 %s44, 1
        %s841 = scalar_lea.sflag [#allocation13], %s840
        %s842 = sand.u32 %s236, 1
        %s843 = scalar_lea.vmem [#allocation12], %s842
        %p844 = pneg %p249
        %p845 = pneg %p246
        %s846 = sand.u32 %s44, 1
        %s847 = scalar_lea.sflag [#allocation13], %s846
        %s848 = sand.u32 %s262, 1
        %s849 = scalar_lea.vmem [#allocation14], %s848
        %p850 = pneg %p275
        %p851 = pneg %p272
        %s852 = sand.u32 %s44, 1
        %s853 = scalar_lea.sflag [#allocation16], %s852
        %s854 = sand.u32 %s288, 1
        %s855 = smul.addr %s854, 16
        %s856 = scalar_lea.vmem [#allocation15], %s855
        %p857 = pneg %p301
        %p858 = pneg %p298
        %s859 = sand.u32 %s44, 1
        %s860 = scalar_lea.sflag [#allocation16], %s859
        %s861 = sand.u32 %s314, 1
        %s862 = scalar_lea.vmem [#allocation17], %s861
        %p863 = pneg %p327
        %p864 = pneg %p324
        %p865 = scmp.lt.s32.totalorder %s49, 1
        %s866 = scalar_select %p865, %s49, 1
        %s867 = smul.addr %s866, 8
        %s868 = smul.addr %s867, 4
        %s869 = scalar_lea.vmem %s11, %s868
        %p870 = pneg %p353
        %p871 = pneg %p350
        %p872 = scmp.lt.s32.totalorder %s49, 1
        %s873 = scalar_select %p872, %s49, 1
        %s874 = scalar_lea.vmem %s12, %s873
        %p875 = pneg %p379
        %p876 = pneg %p376
        %p877 = scmp.lt.s32.totalorder %s49, 1
        %s878 = scalar_select %p877, %s49, 1
        %s879 = scalar_lea.vmem %s13, %s878
        %p880 = pneg %p405
        %p881 = pneg %p402
        %p882 = scmp.lt.s32.totalorder %s49, 1
        %s883 = scalar_select %p882, %s49, 1
        %s884 = scalar_lea.vmem %s14, %s883
        %p885 = pneg %p431
        %p886 = pneg %p428
        %p887 = pneg %p452
        %p888 = pneg %p449
        %p889 = pneg %p473
        %p890 = pneg %p470
        %p891 = pneg %p499
        %p892 = pneg %p496
        %s893 = sand.u32 %s486, 1
        %s894 = scalar_lea.sflag [#allocation5], %s893
        %s895 = sand.u32 %s486, 1
        %s896 = smul.addr %s895, 4
        %s897 = scalar_lea.vmem [#allocation18], %s896
        %s898 = smul.u32 4, %s48
        %p899 = scmp.lt.s32.totalorder %s898, 7
        %s900 = scalar_select %p899, %s898, 7
        %s901 = smul.addr %s900, 2
        %s902 = smul.addr %s901, 8
        %s903 = scalar_lea.vmem %s0, %s902
        %s904 = smul.u32 4, %s48
        %p905 = scmp.lt.s32.totalorder %s49, 1
        %s906 = scalar_select %p905, %s49, 1
        %s907 = smul.addr %s906, 8
        %s908 = smul.addr %s907, 4
        %s909 = scalar_lea.vmem %s11, %s908
        %p910 = scmp.lt.s32.totalorder %s49, 1
        %s911 = scalar_select %p910, %s49, 1
        %s912 = scalar_lea.vmem %s12, %s911
        %p913 = scmp.lt.s32.totalorder %s49, 1
        %s914 = scalar_select %p913, %s49, 1
        %s915 = scalar_lea.vmem %s13, %s914
        %p916 = scmp.lt.s32.totalorder %s49, 1
        %s917 = scalar_select %p916, %s49, 1
        %s918 = scalar_lea.vmem %s14, %s917
        %p920 = scmp.eq.s32.totalorder %s49, 0
        // Predicated region
        $region125: #{tpu_custom_call.1} parent=87 // pred_check
          %p921 = pneg %p920
        $region126: #{tpu_custom_call.1} parent=87 // pred_check_branch
          %923 = sbr.rel (%p921) target = $region128
        $region127: #{tpu_custom_call.1} parent=87 // pred_region
          %v924 = vld [vmem:[%s903] sm:$0xff]
          %v925 = vld [vmem:[%s903 + $0x8] sm:$0xff]
          %v926 = vld [vmem:[%s903 + $0x10] sm:$0xff]
          %v927 = vld [vmem:[%s903 + $0x18] sm:$0xff]
          %v928 = vld [vmem:[%s903 + $0x20] sm:$0xff]
          %v929 = vld [vmem:[%s903 + $0x28] sm:$0xff]
          %v930 = vld [vmem:[%s903 + $0x30] sm:$0xff]
          %v931 = vld [vmem:[%s903 + $0x38] sm:$0xff]
          %v932 = vld [vmem:[%s2] sm:$0xf]
          %v933 = vld [vmem:[%s2 + $0x4] sm:$0xf]
          %v934 = vld [vmem:[%s2 + $0x8] sm:$0xf]
          %v935 = vld [vmem:[%s2 + $0xc] sm:$0xf]
          %v936 = vld [vmem:[%s2 + $0x10] sm:$0xf]
          %v937 = vld [vmem:[%s2 + $0x14] sm:$0xf]
          %v938 = vpack.c.bf16 %v925, %v924
          %v939 = vpack.c.bf16 %v927, %v926
          %v940 = vpack.c.bf16 %v929, %v928
          %v941 = vpack.c.bf16 %v931, %v930
          %v942 = vld [vmem:[#allocation3] sm:$0xff]
          %v943 = vld [vmem:[#allocation3 + $0x8] sm:$0xff]
          %v950 = vunpack.c.l.b16 %v932
          %v951 = vunpack.c.l.b16 %v933
          %v952 = vunpack.c.l.b16 %v934
          %v953 = vunpack.c.l.b16 %v935
          %v954 = vunpack.c.l.b16 %v936
          %v955 = vunpack.c.l.b16 %v937
          %v956 = vpack.c.b16 %v951, %v950
          %v957 = vpack.c.b16 %v953, %v952
          %v958 = vpack.c.b16 %v955, %v954
          %vm962 = vcmask 392192
          %v964 = vsel %vm962, %v938, 0
          %v967 = vsel %vm962, %v939, 0
          %v970 = vsel %vm962, %v940, 0
          %v973 = vsel %vm962, %v941, 0
          %975 = vmatprep.subr.bf16.mxu0 0
          %976 = vmatpush1.bf16.msra.mxu0 %v956
          %977 = vmatprep.subr.bf16.mxu0 0
          %978 = vmatpush1.bf16.msra.mxu0 %v957
          %979 = vmatprep.subr.bf16.mxu0 0
          %980 = vmatpush1.bf16.msra.mxu0 %v958
          %981 = vmatprep.subr.bf16.mxu0 0
          %982 = vmatpush1.bf16.msra.mxu0 0
          %983 = vmatprep.subr.bf16.mxu0 0
          %984 = vmatpush1.bf16.msra.mxu0 0
          %985 = vmatprep.subr.bf16.mxu0 0
          %986 = vmatpush1.bf16.msra.mxu0 0
          %987 = vmatprep.subr.bf16.mxu0 0
          %988 = vmatpush1.bf16.msra.mxu0 0
          %989 = vmatprep.subr.bf16.mxu0 0
          %990 = vmatpush1.bf16.msra.mxu0 0
          %991 = vmatprep.subr.bf16.mxu0 0
          %992 = vmatpush1.bf16.msra.mxu0 0
          %993 = vmatprep.subr.bf16.mxu0 0
          %994 = vmatpush1.bf16.msra.mxu0 0
          %995 = vmatprep.subr.bf16.mxu0 0
          %996 = vmatpush1.bf16.msra.mxu0 0
          %997 = vmatprep.subr.bf16.mxu0 0
          %998 = vmatpush1.bf16.msra.mxu0 0
          %999 = vmatprep.subr.bf16.mxu0 0
          %1000 = vmatpush1.bf16.msra.mxu0 0
          %1001 = vmatprep.subr.bf16.mxu0 0
          %1002 = vmatpush1.bf16.msra.mxu0 0
          %1003 = vmatprep.subr.bf16.mxu0 0
          %1004 = vmatpush1.bf16.msra.mxu0 0
          %1005 = vmatprep.subr.bf16.mxu0 0
          %1006 = vmatpush1.bf16.msra.mxu0 0
          %1007 = vmatprep.mubr.bf16.mxu0 0
          %1008 = vmatmul.mubr.bf16.gmra.mrb[0].mxu0 %v964
          %v1009 = vpop.f32.mrb[0].mxu0
          %v1010 = vadd.f32 %v942, %v1009
          %v1011 = vpop.f32.mrb[0].mxu0
          %v1012 = vpop.f32.mrb[0].mxu0
          %v1013 = vadd.f32 %v943, %v1012
          %v1014 = vpop.f32.mrb[0].mxu0
          %1015 = vmatprep.mubr.bf16.mxu0 0
          %1016 = vmatmul.mubr.bf16.gmra.mrb[0].mxu0 %v967
          %v1017 = vpop.f32.mrb[0].mxu0
          %v1018 = vadd.f32 %v942, %v1017
          %v1019 = vpop.f32.mrb[0].mxu0
          %v1020 = vpop.f32.mrb[0].mxu0
          %v1021 = vadd.f32 %v943, %v1020
          %v1022 = vpop.f32.mrb[0].mxu0
          %1023 = vmatprep.mubr.bf16.mxu0 0
          %1024 = vmatmul.mubr.bf16.gmra.mrb[0].mxu0 %v970
          %v1025 = vpop.f32.mrb[0].mxu0
          %v1026 = vadd.f32 %v942, %v1025
          %v1027 = vpop.f32.mrb[0].mxu0
          %v1028 = vpop.f32.mrb[0].mxu0
          %v1029 = vadd.f32 %v943, %v1028
          %v1030 = vpop.f32.mrb[0].mxu0
          %1031 = vmatprep.mubr.bf16.mxu0 0
          %1032 = vmatmul.mubr.bf16.gmra.mrb[0].mxu0 %v973
          %v1033 = vpop.f32.mrb[0].mxu0
          %v1034 = vadd.f32 %v942, %v1033
          %v1035 = vpop.f32.mrb[0].mxu0
          %v1036 = vpop.f32.mrb[0].mxu0
          %v1037 = vadd.f32 %v943, %v1036
          %v1038 = vpop.f32.mrb[0].mxu0
          %1039 = vdwg.mxu0
          %vm1040 = vcmask 261120
          %1041 = vst.msk [vmem:[#allocation2] sm:$0xff] %vm1040, %v1010
          %1042 = vst.msk [vmem:[#allocation2 + $0x8] sm:$0xff] %vm1040, %v1013
          %1043 = vst.msk [vmem:[#allocation2 + $0x10] sm:$0xff] %vm1040, %v1018
          %1044 = vst.msk [vmem:[#allocation2 + $0x18] sm:$0xff] %vm1040, %v1021
          %1045 = vst.msk [vmem:[#allocation2 + $0x20] sm:$0xff] %vm1040, %v1026
          %1046 = vst.msk [vmem:[#allocation2 + $0x28] sm:$0xff] %vm1040, %v1029
          %1047 = vst.msk [vmem:[#allocation2 + $0x30] sm:$0xff] %vm1040, %v1034
          %1048 = vst.msk [vmem:[#allocation2 + $0x38] sm:$0xff] %vm1040, %v1037
        $region128: #{tpu_custom_call.1} parent=87 // pred_fallthru
          _
        %v1049 = vld [vmem:[#allocation2] sm:$0xff]
        %v1050 = vld [vmem:[#allocation2 + $0x8] sm:$0xff]
        %v1051 = vld [vmem:[#allocation2 + $0x10] sm:$0xff]
        %v1052 = vld [vmem:[#allocation2 + $0x18] sm:$0xff]
        %v1053 = vld [vmem:[#allocation2 + $0x20] sm:$0xff]
        %v1054 = vld [vmem:[#allocation2 + $0x28] sm:$0xff]
        %v1055 = vld [vmem:[#allocation2 + $0x30] sm:$0xff]
        %v1056 = vld [vmem:[#allocation2 + $0x38] sm:$0xff]
        %v1057 = vld [vmem:[%s739] sm:$0xf]
        %v1058 = vld [vmem:[%s739 + $0x4] sm:$0xf]
        %v1059 = vld [vmem:[%s739 + $0x8] sm:$0xf]
        %v1060 = vld [vmem:[%s739 + $0xc] sm:$0xf]
        %v1061 = vpack.c.bf16 %v1050, %v1049
        %v1062 = vpack.c.bf16 %v1052, %v1051
        %v1063 = vpack.c.bf16 %v1054, %v1053
        %v1064 = vpack.c.bf16 %v1056, %v1055
        %v1065 = vld [vmem:[%s747] sm:$0x1]
        %v1067 = vlaneseq
        %v1068 = vshrl.u32 %v1067, 7
        %v1069 = vsub.s32 0, %v1068
        %v1070 = vrot.slane %v1065, %v1069
        %v1076 = vunpack.c.l.b16 %v1057
        %v1077 = vunpack.c.l.b16 %v1058
        %v1078 = vunpack.c.l.b16 %v1059
        %v1079 = vunpack.c.l.b16 %v1060
        %v1080 = vpack.c.b16 %v1077, %v1076
        %v1081 = vpack.c.b16 %v1079, %v1078
        %vm1084 = vcmask 261120
        %v1086 = vsel %vm1084, %v1061, 0
        %v1089 = vsel %vm1084, %v1062, 0
        %v1092 = vsel %vm1084, %v1063, 0
        %v1095 = vsel %vm1084, %v1064, 0
        %1097 = vmatprep.subr.bf16.mxu0 0
        %1098 = vmatpush1.bf16.msra.mxu0 %v1080
        %1099 = vmatprep.subr.bf16.mxu0 0
        %1100 = vmatpush1.bf16.msra.mxu0 %v1081
        %1101 = vmatprep.subr.bf16.mxu0 0
        %1102 = vmatpush1.bf16.msra.mxu0 0
        %1103 = vmatprep.subr.bf16.mxu0 0
        %1104 = vmatpush1.bf16.msra.mxu0 0
        %1105 = vmatprep.subr.bf16.mxu0 0
        %1106 = vmatpush1.bf16.msra.mxu0 0
        %1107 = vmatprep.subr.bf16.mxu0 0
        %1108 = vmatpush1.bf16.msra.mxu0 0
        %1109 = vmatprep.subr.bf16.mxu0 0
        %1110 = vmatpush1.bf16.msra.mxu0 0
        %1111 = vmatprep.subr.bf16.mxu0 0
        %1112 = vmatpush1.bf16.msra.mxu0 0
        %1113 = vmatprep.subr.bf16.mxu0 0
        %1114 = vmatpush1.bf16.msra.mxu0 0
        %1115 = vmatprep.subr.bf16.mxu0 0
        %1116 = vmatpush1.bf16.msra.mxu0 0
        %1117 = vmatprep.subr.bf16.mxu0 0
        %1118 = vmatpush1.bf16.msra.mxu0 0
        %1119 = vmatprep.subr.bf16.mxu0 0
        %1120 = vmatpush1.bf16.msra.mxu0 0
        %1121 = vmatprep.subr.bf16.mxu0 0
        %1122 = vmatpush1.bf16.msra.mxu0 0
        %1123 = vmatprep.subr.bf16.mxu0 0
        %1124 = vmatpush1.bf16.msra.mxu0 0
        %1125 = vmatprep.subr.bf16.mxu0 0
        %1126 = vmatpush1.bf16.msra.mxu0 0
        %1127 = vmatprep.subr.bf16.mxu0 0
        %1128 = vmatpush1.bf16.msra.mxu0 0
        %1129 = vmatprep.mubr.bf16.mxu0 0
        %1130 = vmatmul.mubr.bf16.gmra.mrb[0].mxu0 %v1086
        %v1131 = vpop.f32.mrb[0].mxu0
        %v1132 = vadd.f32 %v1070, %v1131
        %v1133 = vpop.f32.mrb[0].mxu0
        %v1134 = vpop.f32.mrb[0].mxu0
        %v1135 = vadd.f32 %v1070, %v1134
        %v1136 = vpop.f32.mrb[0].mxu0
        %1137 = vmatprep.mubr.bf16.mxu0 0
        %1138 = vmatmul.mubr.bf16.gmra.mrb[0].mxu0 %v1089
        %v1139 = vpop.f32.mrb[0].mxu0
        %v1140 = vadd.f32 %v1070, %v1139
        %v1141 = vpop.f32.mrb[0].mxu0
        %v1142 = vpop.f32.mrb[0].mxu0
        %v1143 = vadd.f32 %v1070, %v1142
        %v1144 = vpop.f32.mrb[0].mxu0
        %1145 = vmatprep.mubr.bf16.mxu0 0
        %1146 = vmatmul.mubr.bf16.gmra.mrb[0].mxu0 %v1092
        %v1147 = vpop.f32.mrb[0].mxu0
        %v1148 = vadd.f32 %v1070, %v1147
        %v1149 = vpop.f32.mrb[0].mxu0
        %v1150 = vpop.f32.mrb[0].mxu0
        %v1151 = vadd.f32 %v1070, %v1150
        %v1152 = vpop.f32.mrb[0].mxu0
        %1153 = vmatprep.mubr.bf16.mxu0 0
        %1154 = vmatmul.mubr.bf16.gmra.mrb[0].mxu0 %v1095
        %v1155 = vpop.f32.mrb[0].mxu0
        %v1156 = vadd.f32 %v1070, %v1155
        %v1157 = vpop.f32.mrb[0].mxu0
        %v1158 = vpop.f32.mrb[0].mxu0
        %v1159 = vadd.f32 %v1070, %v1158
        %v1160 = vpop.f32.mrb[0].mxu0
        %1161 = vdwg.mxu0
        %v1162 = vld [vmem:[%s756] sm:$0xf]
        %v1163 = vld [vmem:[%s756 + $0x4] sm:$0xf]
        %v1164 = vld [vmem:[%s756 + $0x8] sm:$0xf]
        %v1165 = vld [vmem:[%s756 + $0xc] sm:$0xf]
        %1168 = vrot.lane.b32.xlu0 %v1132, 120
        %v1169 = vpop.permute.xlu0 %1168
        %1170 = vrot.lane.b32.xlu0 %v1135, 120
        %v1171 = vpop.permute.xlu0 %1170
        %1174 = vrot.lane.b32.xlu0 %v1132, 112
        %v1175 = vpop.permute.xlu0 %1174
        %1176 = vrot.lane.b32.xlu0 %v1135, 112
        %v1177 = vpop.permute.xlu0 %1176
        %1180 = vrot.lane.b32.xlu0 %v1132, 104
        %v1181 = vpop.permute.xlu0 %1180
        %1182 = vrot.lane.b32.xlu0 %v1135, 104
        %v1183 = vpop.permute.xlu0 %1182
        %v1186 = vpack.c.bf16 %v1135, %v1132
        %v1187 = vpack.c.bf16 %v1171, %v1169
        %v1188 = vpack.c.bf16 %v1177, %v1175
        %v1189 = vpack.c.bf16 %v1183, %v1181
        %1191 = vrot.lane.b32.xlu0 %v1186, 96
        %v1192 = vpop.permute.xlu0 %1191
        %vm1193 = vcmask 64512
        %v1195 = vsel %vm1193, %v1186, 0
        %v1198 = vsel %vm1193, %v1192, 0
        %1200 = vmatprep.subr.bf16.mxu0 0
        %1201 = vmatpush1.bf16.xpose.msra.mxu0 %v1198
        %1202 = vmatprep.subr.bf16.mxu0 0
        %1203 = vmatpush1.bf16.xpose.msra.mxu0 0
        %1204 = vmatprep.subr.bf16.mxu0 0
        %1205 = vmatpush1.bf16.xpose.msra.mxu0 0
        %1206 = vmatprep.subr.bf16.mxu0 0
        %1207 = vmatpush1.bf16.xpose.msra.mxu0 0
        %1208 = vmatprep.subr.bf16.mxu0 0
        %1209 = vmatpush1.bf16.xpose.msra.mxu0 0
        %1210 = vmatprep.subr.bf16.mxu0 0
        %1211 = vmatpush1.bf16.xpose.msra.mxu0 0
        %1212 = vmatprep.subr.bf16.mxu0 0
        %1213 = vmatpush1.bf16.xpose.msra.mxu0 0
        %1214 = vmatprep.subr.bf16.mxu0 0
        %1215 = vmatpush1.bf16.xpose.msra.mxu0 0
        %1216 = vmatprep.subr.bf16.mxu0 0
        %1217 = vmatpush1.bf16.xpose.msra.mxu0 0
        %1218 = vmatprep.subr.bf16.mxu0 0
        %1219 = vmatpush1.bf16.xpose.msra.mxu0 0
        %1220 = vmatprep.subr.bf16.mxu0 0
        %1221 = vmatpush1.bf16.xpose.msra.mxu0 0
        %1222 = vmatprep.subr.bf16.mxu0 0
        %1223 = vmatpush1.bf16.xpose.msra.mxu0 0
        %1224 = vmatprep.subr.bf16.mxu0 0
        %1225 = vmatpush1.bf16.xpose.msra.mxu0 0
        %1226 = vmatprep.subr.bf16.mxu0 0
        %1227 = vmatpush1.bf16.xpose.msra.mxu0 0
        %1228 = vmatprep.subr.bf16.mxu0 0
        %1229 = vmatpush1.bf16.xpose.msra.mxu0 0
        %1230 = vmatprep.subr.bf16.mxu0 0
        %1231 = vmatpush1.bf16.xpose.msra.mxu0 0
        %1232 = vmatprep.mubr.bf16.mxu0 0
        %1233 = vmatmul.mubr.bf16.gmra.mrb[0].mxu0 %v1195
        %v1234 = vpop.f32.mrb[0].mxu0
        %v1235 = vadd.f32 0.0, %v1234
        %v1236 = vpop.f32.mrb[0].mxu0
        %v1237 = vpop.f32.mrb[0].mxu0
        %v1238 = vadd.f32 0.0, %v1237
        %v1239 = vpop.f32.mrb[0].mxu0
        %1240 = vdwg.mxu0
        %1242 = vrot.lane.b32.xlu0 %v1187, 96
        %v1243 = vpop.permute.xlu0 %1242
        %v1245 = vsel %vm1193, %v1187, 0
        %v1248 = vsel %vm1193, %v1243, 0
        %1250 = vmatprep.subr.bf16.mxu0 0
        %1251 = vmatpush1.bf16.xpose.msra.mxu0 %v1248
        %1252 = vmatprep.subr.bf16.mxu0 0
        %1253 = vmatpush1.bf16.xpose.msra.mxu0 0
        %1254 = vmatprep.subr.bf16.mxu0 0
        %1255 = vmatpush1.bf16.xpose.msra.mxu0 0
        %1256 = vmatprep.subr.bf16.mxu0 0
        %1257 = vmatpush1.bf16.xpose.msra.mxu0 0
        %1258 = vmatprep.subr.bf16.mxu0 0
        %1259 = vmatpush1.bf16.xpose.msra.mxu0 0
        %1260 = vmatprep.subr.bf16.mxu0 0
        %1261 = vmatpush1.bf16.xpose.msra.mxu0 0
        %1262 = vmatprep.subr.bf16.mxu0 0
        %1263 = vmatpush1.bf16.xpose.msra.mxu0 0
        %1264 = vmatprep.subr.bf16.mxu0 0
        %1265 = vmatpush1.bf16.xpose.msra.mxu0 0
        %1266 = vmatprep.subr.bf16.mxu0 0
        %1267 = vmatpush1.bf16.xpose.msra.mxu0 0
        %1268 = vmatprep.subr.bf16.mxu0 0
        %1269 = vmatpush1.bf16.xpose.msra.mxu0 0
        %1270 = vmatprep.subr.bf16.mxu0 0
        %1271 = vmatpush1.bf16.xpose.msra.mxu0 0
        %1272 = vmatprep.subr.bf16.mxu0 0
        %1273 = vmatpush1.bf16.xpose.msra.mxu0 0
        %1274 = vmatprep.subr.bf16.mxu0 0
        %1275 = vmatpush1.bf16.xpose.msra.mxu0 0
        %1276 = vmatprep.subr.bf16.mxu0 0
        %1277 = vmatpush1.bf16.xpose.msra.mxu0 0
        %1278 = vmatprep.subr.bf16.mxu0 0
        %1279 = vmatpush1.bf16.xpose.msra.mxu0 0
        %1280 = vmatprep.subr.bf16.mxu0 0
        %1281 = vmatpush1.bf16.xpose.msra.mxu0 0
        %1282 = vmatprep.mubr.bf16.mxu0 0
        %1283 = vmatmul.mubr.bf16.gmra.mrb[0].mxu0 %v1245
        %v1284 = vpop.f32.mrb[0].mxu0
        %v1285 = vadd.f32 0.0, %v1284
        %v1286 = vpop.f32.mrb[0].mxu0
        %v1287 = vpop.f32.mrb[0].mxu0
        %v1288 = vadd.f32 0.0, %v1287
        %v1289 = vpop.f32.mrb[0].mxu0
        %1290 = vdwg.mxu0
        %1292 = vrot.lane.b32.xlu0 %v1188, 96
        %v1293 = vpop.permute.xlu0 %1292
        %v1295 = vsel %vm1193, %v1188, 0
        %v1298 = vsel %vm1193, %v1293, 0
        %1300 = vmatprep.subr.bf16.mxu0 0
        %1301 = vmatpush1.bf16.xpose.msra.mxu0 %v1298
        %1302 = vmatprep.subr.bf16.mxu0 0
        %1303 = vmatpush1.bf16.xpose.msra.mxu0 0
        %1304 = vmatprep.subr.bf16.mxu0 0
        %1305 = vmatpush1.bf16.xpose.msra.mxu0 0
        %1306 = vmatprep.subr.bf16.mxu0 0
        %1307 = vmatpush1.bf16.xpose.msra.mxu0 0
        %1308 = vmatprep.subr.bf16.mxu0 0
        %1309 = vmatpush1.bf16.xpose.msra.mxu0 0
        %1310 = vmatprep.subr.bf16.mxu0 0
        %1311 = vmatpush1.bf16.xpose.msra.mxu0 0
        %1312 = vmatprep.subr.bf16.mxu0 0
        %1313 = vmatpush1.bf16.xpose.msra.mxu0 0
        %1314 = vmatprep.subr.bf16.mxu0 0
        %1315 = vmatpush1.bf16.xpose.msra.mxu0 0
        %1316 = vmatprep.subr.bf16.mxu0 0
        %1317 = vmatpush1.bf16.xpose.msra.mxu0 0
        %1318 = vmatprep.subr.bf16.mxu0 0
        %1319 = vmatpush1.bf16.xpose.msra.mxu0 0
        %1320 = vmatprep.subr.bf16.mxu0 0
        %1321 = vmatpush1.bf16.xpose.msra.mxu0 0
        %1322 = vmatprep.subr.bf16.mxu0 0
        %1323 = vmatpush1.bf16.xpose.msra.mxu0 0
        %1324 = vmatprep.subr.bf16.mxu0 0
        %1325 = vmatpush1.bf16.xpose.msra.mxu0 0
        %1326 = vmatprep.subr.bf16.mxu0 0
        %1327 = vmatpush1.bf16.xpose.msra.mxu0 0
        %1328 = vmatprep.subr.bf16.mxu0 0
        %1329 = vmatpush1.bf16.xpose.msra.mxu0 0
        %1330 = vmatprep.subr.bf16.mxu0 0
        %1331 = vmatpush1.bf16.xpose.msra.mxu0 0
        %1332 = vmatprep.mubr.bf16.mxu0 0
        %1333 = vmatmul.mubr.bf16.gmra.mrb[0].mxu0 %v1295
        %v1334 = vpop.f32.mrb[0].mxu0
        %v1335 = vadd.f32 0.0, %v1334
        %v1336 = vpop.f32.mrb[0].mxu0
        %v1337 = vpop.f32.mrb[0].mxu0
        %v1338 = vadd.f32 0.0, %v1337
        %v1339 = vpop.f32.mrb[0].mxu0
        %1340 = vdwg.mxu0
        %1342 = vrot.lane.b32.xlu0 %v1189, 96
        %v1343 = vpop.permute.xlu0 %1342
        %v1345 = vsel %vm1193, %v1189, 0
        %v1348 = vsel %vm1193, %v1343, 0
        %1350 = vmatprep.subr.bf16.mxu0 0
        %1351 = vmatpush1.bf16.xpose.msra.mxu0 %v1348
        %1352 = vmatprep.subr.bf16.mxu0 0
        %1353 = vmatpush1.bf16.xpose.msra.mxu0 0
        %1354 = vmatprep.subr.bf16.mxu0 0
        %1355 = vmatpush1.bf16.xpose.msra.mxu0 0
        %1356 = vmatprep.subr.bf16.mxu0 0
        %1357 = vmatpush1.bf16.xpose.msra.mxu0 0
        %1358 = vmatprep.subr.bf16.mxu0 0
        %1359 = vmatpush1.bf16.xpose.msra.mxu0 0
        %1360 = vmatprep.subr.bf16.mxu0 0
        %1361 = vmatpush1.bf16.xpose.msra.mxu0 0
        %1362 = vmatprep.subr.bf16.mxu0 0
        %1363 = vmatpush1.bf16.xpose.msra.mxu0 0
        %1364 = vmatprep.subr.bf16.mxu0 0
        %1365 = vmatpush1.bf16.xpose.msra.mxu0 0
        %1366 = vmatprep.subr.bf16.mxu0 0
        %1367 = vmatpush1.bf16.xpose.msra.mxu0 0
        %1368 = vmatprep.subr.bf16.mxu0 0
        %1369 = vmatpush1.bf16.xpose.msra.mxu0 0
        %1370 = vmatprep.subr.bf16.mxu0 0
        %1371 = vmatpush1.bf16.xpose.msra.mxu0 0
        %1372 = vmatprep.subr.bf16.mxu0 0
        %1373 = vmatpush1.bf16.xpose.msra.mxu0 0
        %1374 = vmatprep.subr.bf16.mxu0 0
        %1375 = vmatpush1.bf16.xpose.msra.mxu0 0
        %1376 = vmatprep.subr.bf16.mxu0 0
        %1377 = vmatpush1.bf16.xpose.msra.mxu0 0
        %1378 = vmatprep.subr.bf16.mxu0 0
        %1379 = vmatpush1.bf16.xpose.msra.mxu0 0
        %1380 = vmatprep.subr.bf16.mxu0 0
        %1381 = vmatpush1.bf16.xpose.msra.mxu0 0
        %1382 = vmatprep.mubr.bf16.mxu0 0
        %1383 = vmatmul.mubr.bf16.gmra.mrb[0].mxu0 %v1345
        %v1384 = vpop.f32.mrb[0].mxu0
        %v1385 = vadd.f32 0.0, %v1384
        %v1386 = vpop.f32.mrb[0].mxu0
        %v1387 = vpop.f32.mrb[0].mxu0
        %v1388 = vadd.f32 0.0, %v1387
        %v1389 = vpop.f32.mrb[0].mxu0
        %1390 = vdwg.mxu0
        %vm1391 = vcmask 130048
        %v1392 = vsel %vm1391, %v1235, -inf
        %1393 = vmax.xlane.f32.xlu0 %v1392
        %v1394 = vpop.xlane.xlu0 %1393
        %v1395 = vsel %vm1391, %v1238, -inf
        %1396 = vmax.xlane.f32.xlu0 %v1395
        %v1397 = vpop.xlane.xlu0 %1396
        %v1398 = vsel %vm1391, %v1285, -inf
        %1399 = vmax.xlane.f32.xlu0 %v1398
        %v1400 = vpop.xlane.xlu0 %1399
        %v1401 = vsel %vm1391, %v1288, -inf
        %1402 = vmax.xlane.f32.xlu0 %v1401
        %v1403 = vpop.xlane.xlu0 %1402
        %v1404 = vsel %vm1391, %v1335, -inf
        %1405 = vmax.xlane.f32.xlu0 %v1404
        %v1406 = vpop.xlane.xlu0 %1405
        %v1407 = vsel %vm1391, %v1338, -inf
        %1408 = vmax.xlane.f32.xlu0 %v1407
        %v1409 = vpop.xlane.xlu0 %1408
        %v1410 = vsel %vm1391, %v1385, -inf
        %1411 = vmax.xlane.f32.xlu0 %v1410
        %v1412 = vpop.xlane.xlu0 %1411
        %v1413 = vsel %vm1391, %v1388, -inf
        %1414 = vmax.xlane.f32.xlu0 %v1413
        %v1415 = vpop.xlane.xlu0 %1414
        %v1416 = vsub.f32 %v1235, %v1394
        %v1417 = vsub.f32 %v1238, %v1397
        %v1418 = vsub.f32 %v1285, %v1400
        %v1419 = vsub.f32 %v1288, %v1403
        %v1420 = vsub.f32 %v1335, %v1406
        %v1421 = vsub.f32 %v1338, %v1409
        %v1422 = vsub.f32 %v1385, %v1412
        %v1423 = vsub.f32 %v1388, %v1415
        %v1424 = vmul.f32 %v1416, 1.442695
        %v1425 = vpow.pop %v1424
        %v1426 = vmul.f32 %v1417, 1.442695
        %v1427 = vpow.pop %v1426
        %v1428 = vmul.f32 %v1418, 1.442695
        %v1429 = vpow.pop %v1428
        %v1430 = vmul.f32 %v1419, 1.442695
        %v1431 = vpow.pop %v1430
        %v1432 = vmul.f32 %v1420, 1.442695
        %v1433 = vpow.pop %v1432
        %v1434 = vmul.f32 %v1421, 1.442695
        %v1435 = vpow.pop %v1434
        %v1436 = vmul.f32 %v1422, 1.442695
        %v1437 = vpow.pop %v1436
        %v1438 = vmul.f32 %v1423, 1.442695
        %v1439 = vpow.pop %v1438
        %v1440 = vsel %vm1391, %v1425, 0.0
        %1441 = vadd.xlane.f32.xlu0 %v1440
        %v1442 = vpop.xlane.xlu0 %1441
        %v1443 = vsel %vm1391, %v1427, 0.0
        %1444 = vadd.xlane.f32.xlu0 %v1443
        %v1445 = vpop.xlane.xlu0 %1444
        %v1446 = vsel %vm1391, %v1429, 0.0
        %1447 = vadd.xlane.f32.xlu0 %v1446
        %v1448 = vpop.xlane.xlu0 %1447
        %v1449 = vsel %vm1391, %v1431, 0.0
        %1450 = vadd.xlane.f32.xlu0 %v1449
        %v1451 = vpop.xlane.xlu0 %1450
        %v1452 = vsel %vm1391, %v1433, 0.0
        %1453 = vadd.xlane.f32.xlu0 %v1452
        %v1454 = vpop.xlane.xlu0 %1453
        %v1455 = vsel %vm1391, %v1435, 0.0
        %1456 = vadd.xlane.f32.xlu0 %v1455
        %v1457 = vpop.xlane.xlu0 %1456
        %v1458 = vsel %vm1391, %v1437, 0.0
        %1459 = vadd.xlane.f32.xlu0 %v1458
        %v1460 = vpop.xlane.xlu0 %1459
        %v1461 = vsel %vm1391, %v1439, 0.0
        %1462 = vadd.xlane.f32.xlu0 %v1461
        %v1463 = vpop.xlane.xlu0 %1462
        %v1464 = vrcp.pop %v1442
        %v1465 = vrcp.pop %v1445
        %v1466 = vrcp.pop %v1448
        %v1467 = vrcp.pop %v1451
        %v1468 = vrcp.pop %v1454
        %v1469 = vrcp.pop %v1457
        %v1470 = vrcp.pop %v1460
        %v1471 = vrcp.pop %v1463
        %v1472 = vmul.f32 %v1425, %v1464
        %v1473 = vmul.f32 %v1427, %v1465
        %v1474 = vmul.f32 %v1429, %v1466
        %v1475 = vmul.f32 %v1431, %v1467
        %v1476 = vmul.f32 %v1433, %v1468
        %v1477 = vmul.f32 %v1435, %v1469
        %v1478 = vmul.f32 %v1437, %v1470
        %v1479 = vmul.f32 %v1439, %v1471
        %v1480 = vpack.c.bf16 %v1473, %v1472
        %v1481 = vpack.c.bf16 %v1475, %v1474
        %v1482 = vpack.c.bf16 %v1477, %v1476
        %v1483 = vpack.c.bf16 %v1479, %v1478
        %1484 = vrot.lane.b32.xlu0 %v1186, 64
        %v1485 = vpop.permute.xlu0 %1484
        %v1488 = vsel %vm1391, %v1480, 0
        %1490 = vmatprep.subr.bf16.mxu0 0
        %1491 = vmatpush1.bf16.msra.mxu0 %v1485
        %1492 = vmatprep.subr.bf16.mxu0 0
        %1493 = vmatpush1.bf16.msra.mxu0 0
        %1494 = vmatprep.subr.bf16.mxu0 0
        %1495 = vmatpush1.bf16.msra.mxu0 0
        %1496 = vmatprep.subr.bf16.mxu0 0
        %1497 = vmatpush1.bf16.msra.mxu0 0
        %1498 = vmatprep.subr.bf16.mxu0 0
        %1499 = vmatpush1.bf16.msra.mxu0 0
        %1500 = vmatprep.subr.bf16.mxu0 0
        %1501 = vmatpush1.bf16.msra.mxu0 0
        %1502 = vmatprep.subr.bf16.mxu0 0
        %1503 = vmatpush1.bf16.msra.mxu0 0
        %1504 = vmatprep.subr.bf16.mxu0 0
        %1505 = vmatpush1.bf16.msra.mxu0 0
        %1506 = vmatprep.subr.bf16.mxu0 0
        %1507 = vmatpush1.bf16.msra.mxu0 0
        %1508 = vmatprep.subr.bf16.mxu0 0
        %1509 = vmatpush1.bf16.msra.mxu0 0
        %1510 = vmatprep.subr.bf16.mxu0 0
        %1511 = vmatpush1.bf16.msra.mxu0 0
        %1512 = vmatprep.subr.bf16.mxu0 0
        %1513 = vmatpush1.bf16.msra.mxu0 0
        %1514 = vmatprep.subr.bf16.mxu0 0
        %1515 = vmatpush1.bf16.msra.mxu0 0
        %1516 = vmatprep.subr.bf16.mxu0 0
        %1517 = vmatpush1.bf16.msra.mxu0 0
        %1518 = vmatprep.subr.bf16.mxu0 0
        %1519 = vmatpush1.bf16.msra.mxu0 0
        %1520 = vmatprep.subr.bf16.mxu0 0
        %1521 = vmatpush1.bf16.msra.mxu0 0
        %1522 = vmatprep.mubr.bf16.mxu0 0
        %1523 = vmatmul.mubr.bf16.gmra.mrb[0].mxu0 %v1488
        %v1524 = vpop.f32.mrb[0].mxu0
        %v1525 = vadd.f32 0.0, %v1524
        %v1526 = vpop.f32.mrb[0].mxu0
        %v1527 = vpop.f32.mrb[0].mxu0
        %v1528 = vadd.f32 0.0, %v1527
        %v1529 = vpop.f32.mrb[0].mxu0
        %1530 = vdwg.mxu0
        %1531 = vrot.lane.b32.xlu0 %v1187, 64
        %v1532 = vpop.permute.xlu0 %1531
        %v1535 = vsel %vm1391, %v1481, 0
        %1537 = vmatprep.subr.bf16.mxu0 0
        %1538 = vmatpush1.bf16.msra.mxu0 %v1532
        %1539 = vmatprep.subr.bf16.mxu0 0
        %1540 = vmatpush1.bf16.msra.mxu0 0
        %1541 = vmatprep.subr.bf16.mxu0 0
        %1542 = vmatpush1.bf16.msra.mxu0 0
        %1543 = vmatprep.subr.bf16.mxu0 0
        %1544 = vmatpush1.bf16.msra.mxu0 0
        %1545 = vmatprep.subr.bf16.mxu0 0
        %1546 = vmatpush1.bf16.msra.mxu0 0
        %1547 = vmatprep.subr.bf16.mxu0 0
        %1548 = vmatpush1.bf16.msra.mxu0 0
        %1549 = vmatprep.subr.bf16.mxu0 0
        %1550 = vmatpush1.bf16.msra.mxu0 0
        %1551 = vmatprep.subr.bf16.mxu0 0
        %1552 = vmatpush1.bf16.msra.mxu0 0
        %1553 = vmatprep.subr.bf16.mxu0 0
        %1554 = vmatpush1.bf16.msra.mxu0 0
        %1555 = vmatprep.subr.bf16.mxu0 0
        %1556 = vmatpush1.bf16.msra.mxu0 0
        %1557 = vmatprep.subr.bf16.mxu0 0
        %1558 = vmatpush1.bf16.msra.mxu0 0
        %1559 = vmatprep.subr.bf16.mxu0 0
        %1560 = vmatpush1.bf16.msra.mxu0 0
        %1561 = vmatprep.subr.bf16.mxu0 0
        %1562 = vmatpush1.bf16.msra.mxu0 0
        %1563 = vmatprep.subr.bf16.mxu0 0
        %1564 = vmatpush1.bf16.msra.mxu0 0
        %1565 = vmatprep.subr.bf16.mxu0 0
        %1566 = vmatpush1.bf16.msra.mxu0 0
        %1567 = vmatprep.subr.bf16.mxu0 0
        %1568 = vmatpush1.bf16.msra.mxu0 0
        %1569 = vmatprep.mubr.bf16.mxu0 0
        %1570 = vmatmul.mubr.bf16.gmra.mrb[0].mxu0 %v1535
        %v1571 = vpop.f32.mrb[0].mxu0
        %v1572 = vadd.f32 0.0, %v1571
        %v1573 = vpop.f32.mrb[0].mxu0
        %v1574 = vpop.f32.mrb[0].mxu0
        %v1575 = vadd.f32 0.0, %v1574
        %v1576 = vpop.f32.mrb[0].mxu0
        %1577 = vdwg.mxu0
        %1578 = vrot.lane.b32.xlu0 %v1188, 64
        %v1579 = vpop.permute.xlu0 %1578
        %v1582 = vsel %vm1391, %v1482, 0
        %1584 = vmatprep.subr.bf16.mxu0 0
        %1585 = vmatpush1.bf16.msra.mxu0 %v1579
        %1586 = vmatprep.subr.bf16.mxu0 0
        %1587 = vmatpush1.bf16.msra.mxu0 0
        %1588 = vmatprep.subr.bf16.mxu0 0
        %1589 = vmatpush1.bf16.msra.mxu0 0
        %1590 = vmatprep.subr.bf16.mxu0 0
        %1591 = vmatpush1.bf16.msra.mxu0 0
        %1592 = vmatprep.subr.bf16.mxu0 0
        %1593 = vmatpush1.bf16.msra.mxu0 0
        %1594 = vmatprep.subr.bf16.mxu0 0
        %1595 = vmatpush1.bf16.msra.mxu0 0
        %1596 = vmatprep.subr.bf16.mxu0 0
        %1597 = vmatpush1.bf16.msra.mxu0 0
        %1598 = vmatprep.subr.bf16.mxu0 0
        %1599 = vmatpush1.bf16.msra.mxu0 0
        %1600 = vmatprep.subr.bf16.mxu0 0
        %1601 = vmatpush1.bf16.msra.mxu0 0
        %1602 = vmatprep.subr.bf16.mxu0 0
        %1603 = vmatpush1.bf16.msra.mxu0 0
        %1604 = vmatprep.subr.bf16.mxu0 0
        %1605 = vmatpush1.bf16.msra.mxu0 0
        %1606 = vmatprep.subr.bf16.mxu0 0
        %1607 = vmatpush1.bf16.msra.mxu0 0
        %1608 = vmatprep.subr.bf16.mxu0 0
        %1609 = vmatpush1.bf16.msra.mxu0 0
        %1610 = vmatprep.subr.bf16.mxu0 0
        %1611 = vmatpush1.bf16.msra.mxu0 0
        %1612 = vmatprep.subr.bf16.mxu0 0
        %1613 = vmatpush1.bf16.msra.mxu0 0
        %1614 = vmatprep.subr.bf16.mxu0 0
        %1615 = vmatpush1.bf16.msra.mxu0 0
        %1616 = vmatprep.mubr.bf16.mxu0 0
        %1617 = vmatmul.mubr.bf16.gmra.mrb[0].mxu0 %v1582
        %v1618 = vpop.f32.mrb[0].mxu0
        %v1619 = vadd.f32 0.0, %v1618
        %v1620 = vpop.f32.mrb[0].mxu0
        %v1621 = vpop.f32.mrb[0].mxu0
        %v1622 = vadd.f32 0.0, %v1621
        %v1623 = vpop.f32.mrb[0].mxu0
        %1624 = vdwg.mxu0
        %1625 = vrot.lane.b32.xlu0 %v1189, 64
        %v1626 = vpop.permute.xlu0 %1625
        %v1629 = vsel %vm1391, %v1483, 0
        %1631 = vmatprep.subr.bf16.mxu0 0
        %1632 = vmatpush1.bf16.msra.mxu0 %v1626
        %1633 = vmatprep.subr.bf16.mxu0 0
        %1634 = vmatpush1.bf16.msra.mxu0 0
        %1635 = vmatprep.subr.bf16.mxu0 0
        %1636 = vmatpush1.bf16.msra.mxu0 0
        %1637 = vmatprep.subr.bf16.mxu0 0
        %1638 = vmatpush1.bf16.msra.mxu0 0
        %1639 = vmatprep.subr.bf16.mxu0 0
        %1640 = vmatpush1.bf16.msra.mxu0 0
        %1641 = vmatprep.subr.bf16.mxu0 0
        %1642 = vmatpush1.bf16.msra.mxu0 0
        %1643 = vmatprep.subr.bf16.mxu0 0
        %1644 = vmatpush1.bf16.msra.mxu0 0
        %1645 = vmatprep.subr.bf16.mxu0 0
        %1646 = vmatpush1.bf16.msra.mxu0 0
        %1647 = vmatprep.subr.bf16.mxu0 0
        %1648 = vmatpush1.bf16.msra.mxu0 0
        %1649 = vmatprep.subr.bf16.mxu0 0
        %1650 = vmatpush1.bf16.msra.mxu0 0
        %1651 = vmatprep.subr.bf16.mxu0 0
        %1652 = vmatpush1.bf16.msra.mxu0 0
        %1653 = vmatprep.subr.bf16.mxu0 0
        %1654 = vmatpush1.bf16.msra.mxu0 0
        %1655 = vmatprep.subr.bf16.mxu0 0
        %1656 = vmatpush1.bf16.msra.mxu0 0
        %1657 = vmatprep.subr.bf16.mxu0 0
        %1658 = vmatpush1.bf16.msra.mxu0 0
        %1659 = vmatprep.subr.bf16.mxu0 0
        %1660 = vmatpush1.bf16.msra.mxu0 0
        %1661 = vmatprep.subr.bf16.mxu0 0
        %1662 = vmatpush1.bf16.msra.mxu0 0
        %1663 = vmatprep.mubr.bf16.mxu0 0
        %1664 = vmatmul.mubr.bf16.gmra.mrb[0].mxu0 %v1629
        %v1665 = vpop.f32.mrb[0].mxu0
        %v1666 = vadd.f32 0.0, %v1665
        %v1667 = vpop.f32.mrb[0].mxu0
        %v1668 = vpop.f32.mrb[0].mxu0
        %v1669 = vadd.f32 0.0, %v1668
        %v1670 = vpop.f32.mrb[0].mxu0
        %1671 = vdwg.mxu0
        %v1672 = vpack.c.bf16 %v1528, %v1525
        %v1673 = vpack.c.bf16 %v1575, %v1572
        %v1674 = vpack.c.bf16 %v1622, %v1619
        %v1675 = vpack.c.bf16 %v1669, %v1666
        %v1677 = vsel %vm1193, %v1672, 0
        %vm1679 = vcmask 1043456
        %v1681 = vsel %vm1679, %v1162, 0
        %1683 = vmatprep.subr.bf16.mxu0 0
        %1684 = vmatpush1.bf16.msra.mxu0 %v1681
        %1685 = vmatprep.subr.bf16.mxu0 0
        %1686 = vmatpush1.bf16.msra.mxu0 0
        %1687 = vmatprep.subr.bf16.mxu0 0
        %1688 = vmatpush1.bf16.msra.mxu0 0
        %1689 = vmatprep.subr.bf16.mxu0 0
        %1690 = vmatpush1.bf16.msra.mxu0 0
        %1691 = vmatprep.subr.bf16.mxu0 0
        %1692 = vmatpush1.bf16.msra.mxu0 0
        %1693 = vmatprep.subr.bf16.mxu0 0
        %1694 = vmatpush1.bf16.msra.mxu0 0
        %1695 = vmatprep.subr.bf16.mxu0 0
        %1696 = vmatpush1.bf16.msra.mxu0 0
        %1697 = vmatprep.subr.bf16.mxu0 0
        %1698 = vmatpush1.bf16.msra.mxu0 0
        %1699 = vmatprep.subr.bf16.mxu0 0
        %1700 = vmatpush1.bf16.msra.mxu0 0
        %1701 = vmatprep.subr.bf16.mxu0 0
        %1702 = vmatpush1.bf16.msra.mxu0 0
        %1703 = vmatprep.subr.bf16.mxu0 0
        %1704 = vmatpush1.bf16.msra.mxu0 0
        %1705 = vmatprep.subr.bf16.mxu0 0
        %1706 = vmatpush1.bf16.msra.mxu0 0
        %1707 = vmatprep.subr.bf16.mxu0 0
        %1708 = vmatpush1.bf16.msra.mxu0 0
        %1709 = vmatprep.subr.bf16.mxu0 0
        %1710 = vmatpush1.bf16.msra.mxu0 0
        %1711 = vmatprep.subr.bf16.mxu0 0
        %1712 = vmatpush1.bf16.msra.mxu0 0
        %1713 = vmatprep.subr.bf16.mxu0 0
        %1714 = vmatpush1.bf16.msra.mxu0 0
        %1715 = vmatprep.mubr.bf16.mxu0 0
        %1716 = vmatmul.mubr.bf16.gmra.mrb[0].mxu0 %v1677
        %v1717 = vpop.f32.mrb[0].mxu0
        %v1718 = vadd.f32 0.0, %v1717
        %v1719 = vpop.f32.mrb[0].mxu0
        %v1720 = vpop.f32.mrb[0].mxu0
        %v1721 = vadd.f32 0.0, %v1720
        %v1722 = vpop.f32.mrb[0].mxu0
        %1723 = vdwg.mxu0
        %v1725 = vsel %vm1193, %v1673, 0
        %v1728 = vsel %vm1679, %v1163, 0
        %1730 = vmatprep.subr.bf16.mxu0 0
        %1731 = vmatpush1.bf16.msra.mxu0 %v1728
        %1732 = vmatprep.subr.bf16.mxu0 0
        %1733 = vmatpush1.bf16.msra.mxu0 0
        %1734 = vmatprep.subr.bf16.mxu0 0
        %1735 = vmatpush1.bf16.msra.mxu0 0
        %1736 = vmatprep.subr.bf16.mxu0 0
        %1737 = vmatpush1.bf16.msra.mxu0 0
        %1738 = vmatprep.subr.bf16.mxu0 0
        %1739 = vmatpush1.bf16.msra.mxu0 0
        %1740 = vmatprep.subr.bf16.mxu0 0
        %1741 = vmatpush1.bf16.msra.mxu0 0
        %1742 = vmatprep.subr.bf16.mxu0 0
        %1743 = vmatpush1.bf16.msra.mxu0 0
        %1744 = vmatprep.subr.bf16.mxu0 0
        %1745 = vmatpush1.bf16.msra.mxu0 0
        %1746 = vmatprep.subr.bf16.mxu0 0
        %1747 = vmatpush1.bf16.msra.mxu0 0
        %1748 = vmatprep.subr.bf16.mxu0 0
        %1749 = vmatpush1.bf16.msra.mxu0 0
        %1750 = vmatprep.subr.bf16.mxu0 0
        %1751 = vmatpush1.bf16.msra.mxu0 0
        %1752 = vmatprep.subr.bf16.mxu0 0
        %1753 = vmatpush1.bf16.msra.mxu0 0
        %1754 = vmatprep.subr.bf16.mxu0 0
        %1755 = vmatpush1.bf16.msra.mxu0 0
        %1756 = vmatprep.subr.bf16.mxu0 0
        %1757 = vmatpush1.bf16.msra.mxu0 0
        %1758 = vmatprep.subr.bf16.mxu0 0
        %1759 = vmatpush1.bf16.msra.mxu0 0
        %1760 = vmatprep.subr.bf16.mxu0 0
        %1761 = vmatpush1.bf16.msra.mxu0 0
        %1762 = vmatprep.mubr.bf16.mxu0 0
        %1763 = vmatmul.mubr.bf16.gmra.mrb[0].mxu0 %v1725
        %v1764 = vpop.f32.mrb[0].mxu0
        %v1765 = vadd.f32 0.0, %v1764
        %v1766 = vpop.f32.mrb[0].mxu0
        %v1767 = vpop.f32.mrb[0].mxu0
        %v1768 = vadd.f32 0.0, %v1767
        %v1769 = vpop.f32.mrb[0].mxu0
        %1770 = vdwg.mxu0
        %v1772 = vsel %vm1193, %v1674, 0
        %v1775 = vsel %vm1679, %v1164, 0
        %1777 = vmatprep.subr.bf16.mxu0 0
        %1778 = vmatpush1.bf16.msra.mxu0 %v1775
        %1779 = vmatprep.subr.bf16.mxu0 0
        %1780 = vmatpush1.bf16.msra.mxu0 0
        %1781 = vmatprep.subr.bf16.mxu0 0
        %1782 = vmatpush1.bf16.msra.mxu0 0
        %1783 = vmatprep.subr.bf16.mxu0 0
        %1784 = vmatpush1.bf16.msra.mxu0 0
        %1785 = vmatprep.subr.bf16.mxu0 0
        %1786 = vmatpush1.bf16.msra.mxu0 0
        %1787 = vmatprep.subr.bf16.mxu0 0
        %1788 = vmatpush1.bf16.msra.mxu0 0
        %1789 = vmatprep.subr.bf16.mxu0 0
        %1790 = vmatpush1.bf16.msra.mxu0 0
        %1791 = vmatprep.subr.bf16.mxu0 0
        %1792 = vmatpush1.bf16.msra.mxu0 0
        %1793 = vmatprep.subr.bf16.mxu0 0
        %1794 = vmatpush1.bf16.msra.mxu0 0
        %1795 = vmatprep.subr.bf16.mxu0 0
        %1796 = vmatpush1.bf16.msra.mxu0 0
        %1797 = vmatprep.subr.bf16.mxu0 0
        %1798 = vmatpush1.bf16.msra.mxu0 0
        %1799 = vmatprep.subr.bf16.mxu0 0
        %1800 = vmatpush1.bf16.msra.mxu0 0
        %1801 = vmatprep.subr.bf16.mxu0 0
        %1802 = vmatpush1.bf16.msra.mxu0 0
        %1803 = vmatprep.subr.bf16.mxu0 0
        %1804 = vmatpush1.bf16.msra.mxu0 0
        %1805 = vmatprep.subr.bf16.mxu0 0
        %1806 = vmatpush1.bf16.msra.mxu0 0
        %1807 = vmatprep.subr.bf16.mxu0 0
        %1808 = vmatpush1.bf16.msra.mxu0 0
        %1809 = vmatprep.mubr.bf16.mxu0 0
        %1810 = vmatmul.mubr.bf16.gmra.mrb[0].mxu0 %v1772
        %v1811 = vpop.f32.mrb[0].mxu0
        %v1812 = vadd.f32 0.0, %v1811
        %v1813 = vpop.f32.mrb[0].mxu0
        %v1814 = vpop.f32.mrb[0].mxu0
        %v1815 = vadd.f32 0.0, %v1814
        %v1816 = vpop.f32.mrb[0].mxu0
        %1817 = vdwg.mxu0
        %v1819 = vsel %vm1193, %v1675, 0
        %v1822 = vsel %vm1679, %v1165, 0
        %1824 = vmatprep.subr.bf16.mxu0 0
        %1825 = vmatpush1.bf16.msra.mxu0 %v1822
        %1826 = vmatprep.subr.bf16.mxu0 0
        %1827 = vmatpush1.bf16.msra.mxu0 0
        %1828 = vmatprep.subr.bf16.mxu0 0
        %1829 = vmatpush1.bf16.msra.mxu0 0
        %1830 = vmatprep.subr.bf16.mxu0 0
        %1831 = vmatpush1.bf16.msra.mxu0 0
        %1832 = vmatprep.subr.bf16.mxu0 0
        %1833 = vmatpush1.bf16.msra.mxu0 0
        %1834 = vmatprep.subr.bf16.mxu0 0
        %1835 = vmatpush1.bf16.msra.mxu0 0
        %1836 = vmatprep.subr.bf16.mxu0 0
        %1837 = vmatpush1.bf16.msra.mxu0 0
        %1838 = vmatprep.subr.bf16.mxu0 0
        %1839 = vmatpush1.bf16.msra.mxu0 0
        %1840 = vmatprep.subr.bf16.mxu0 0
        %1841 = vmatpush1.bf16.msra.mxu0 0
        %1842 = vmatprep.subr.bf16.mxu0 0
        %1843 = vmatpush1.bf16.msra.mxu0 0
        %1844 = vmatprep.subr.bf16.mxu0 0
        %1845 = vmatpush1.bf16.msra.mxu0 0
        %1846 = vmatprep.subr.bf16.mxu0 0
        %1847 = vmatpush1.bf16.msra.mxu0 0
        %1848 = vmatprep.subr.bf16.mxu0 0
        %1849 = vmatpush1.bf16.msra.mxu0 0
        %1850 = vmatprep.subr.bf16.mxu0 0
        %1851 = vmatpush1.bf16.msra.mxu0 0
        %1852 = vmatprep.subr.bf16.mxu0 0
        %1853 = vmatpush1.bf16.msra.mxu0 0
        %1854 = vmatprep.subr.bf16.mxu0 0
        %1855 = vmatpush1.bf16.msra.mxu0 0
        %1856 = vmatprep.mubr.bf16.mxu0 0
        %1857 = vmatmul.mubr.bf16.gmra.mrb[0].mxu0 %v1819
        %v1858 = vpop.f32.mrb[0].mxu0
        %v1859 = vadd.f32 0.0, %v1858
        %v1860 = vpop.f32.mrb[0].mxu0
        %v1861 = vpop.f32.mrb[0].mxu0
        %v1862 = vadd.f32 0.0, %v1861
        %v1863 = vpop.f32.mrb[0].mxu0
        %1864 = vdwg.mxu0
        %v1865 = vsel %vm1084, %v1718, 0.0
        %v1866 = vsel %vm1084, %v1765, 0.0
        %v1867 = vadd.f32 %v1865, %v1866
        %v1868 = vsel %vm1084, %v1812, 0.0
        %v1869 = vadd.f32 %v1867, %v1868
        %v1870 = vsel %vm1084, %v1859, 0.0
        %v1871 = vadd.f32 %v1869, %v1870
        %v1872 = vsel %vm1084, %v1721, 0.0
        %v1873 = vsel %vm1084, %v1768, 0.0
        %v1874 = vadd.f32 %v1872, %v1873
        %v1875 = vsel %vm1084, %v1815, 0.0
        %v1876 = vadd.f32 %v1874, %v1875
        %v1877 = vsel %vm1084, %v1862, 0.0
        %v1878 = vadd.f32 %v1876, %v1877
        %1881 = vrot.lane.b32.xlu0 %v1140, 120
        %v1882 = vpop.permute.xlu0 %1881
        %1883 = vrot.lane.b32.xlu0 %v1143, 120
        %v1884 = vpop.permute.xlu0 %1883
        %1887 = vrot.lane.b32.xlu0 %v1140, 112
        %v1888 = vpop.permute.xlu0 %1887
        %1889 = vrot.lane.b32.xlu0 %v1143, 112
        %v1890 = vpop.permute.xlu0 %1889
        %1893 = vrot.lane.b32.xlu0 %v1140, 104
        %v1894 = vpop.permute.xlu0 %1893
        %1895 = vrot.lane.b32.xlu0 %v1143, 104
        %v1896 = vpop.permute.xlu0 %1895
        %v1899 = vpack.c.bf16 %v1143, %v1140
        %v1900 = vpack.c.bf16 %v1884, %v1882
        %v1901 = vpack.c.bf16 %v1890, %v1888
        %v1902 = vpack.c.bf16 %v1896, %v1894
        %1904 = vrot.lane.b32.xlu0 %v1899, 96
        %v1905 = vpop.permute.xlu0 %1904
        %v1907 = vsel %vm1193, %v1899, 0
        %v1910 = vsel %vm1193, %v1905, 0
        %1912 = vmatprep.subr.bf16.mxu0 0
        %1913 = vmatpush1.bf16.xpose.msra.mxu0 %v1910
        %1914 = vmatprep.subr.bf16.mxu0 0
        %1915 = vmatpush1.bf16.xpose.msra.mxu0 0
        %1916 = vmatprep.subr.bf16.mxu0 0
        %1917 = vmatpush1.bf16.xpose.msra.mxu0 0
        %1918 = vmatprep.subr.bf16.mxu0 0
        %1919 = vmatpush1.bf16.xpose.msra.mxu0 0
        %1920 = vmatprep.subr.bf16.mxu0 0
        %1921 = vmatpush1.bf16.xpose.msra.mxu0 0
        %1922 = vmatprep.subr.bf16.mxu0 0
        %1923 = vmatpush1.bf16.xpose.msra.mxu0 0
        %1924 = vmatprep.subr.bf16.mxu0 0
        %1925 = vmatpush1.bf16.xpose.msra.mxu0 0
        %1926 = vmatprep.subr.bf16.mxu0 0
        %1927 = vmatpush1.bf16.xpose.msra.mxu0 0
        %1928 = vmatprep.subr.bf16.mxu0 0
        %1929 = vmatpush1.bf16.xpose.msra.mxu0 0
        %1930 = vmatprep.subr.bf16.mxu0 0
        %1931 = vmatpush1.bf16.xpose.msra.mxu0 0
        %1932 = vmatprep.subr.bf16.mxu0 0
        %1933 = vmatpush1.bf16.xpose.msra.mxu0 0
        %1934 = vmatprep.subr.bf16.mxu0 0
        %1935 = vmatpush1.bf16.xpose.msra.mxu0 0
        %1936 = vmatprep.subr.bf16.mxu0 0
        %1937 = vmatpush1.bf16.xpose.msra.mxu0 0
        %1938 = vmatprep.subr.bf16.mxu0 0
        %1939 = vmatpush1.bf16.xpose.msra.mxu0 0
        %1940 = vmatprep.subr.bf16.mxu0 0
        %1941 = vmatpush1.bf16.xpose.msra.mxu0 0
        %1942 = vmatprep.subr.bf16.mxu0 0
        %1943 = vmatpush1.bf16.xpose.msra.mxu0 0
        %1944 = vmatprep.mubr.bf16.mxu0 0
        %1945 = vmatmul.mubr.bf16.gmra.mrb[0].mxu0 %v1907
        %v1946 = vpop.f32.mrb[0].mxu0
        %v1947 = vadd.f32 0.0, %v1946
        %v1948 = vpop.f32.mrb[0].mxu0
        %v1949 = vpop.f32.mrb[0].mxu0
        %v1950 = vadd.f32 0.0, %v1949
        %v1951 = vpop.f32.mrb[0].mxu0
        %1952 = vdwg.mxu0
        %1954 = vrot.lane.b32.xlu0 %v1900, 96
        %v1955 = vpop.permute.xlu0 %1954
        %v1957 = vsel %vm1193, %v1900, 0
        %v1960 = vsel %vm1193, %v1955, 0
        %1962 = vmatprep.subr.bf16.mxu0 0
        %1963 = vmatpush1.bf16.xpose.msra.mxu0 %v1960
        %1964 = vmatprep.subr.bf16.mxu0 0
        %1965 = vmatpush1.bf16.xpose.msra.mxu0 0
        %1966 = vmatprep.subr.bf16.mxu0 0
        %1967 = vmatpush1.bf16.xpose.msra.mxu0 0
        %1968 = vmatprep.subr.bf16.mxu0 0
        %1969 = vmatpush1.bf16.xpose.msra.mxu0 0
        %1970 = vmatprep.subr.bf16.mxu0 0
        %1971 = vmatpush1.bf16.xpose.msra.mxu0 0
        %1972 = vmatprep.subr.bf16.mxu0 0
        %1973 = vmatpush1.bf16.xpose.msra.mxu0 0
        %1974 = vmatprep.subr.bf16.mxu0 0
        %1975 = vmatpush1.bf16.xpose.msra.mxu0 0
        %1976 = vmatprep.subr.bf16.mxu0 0
        %1977 = vmatpush1.bf16.xpose.msra.mxu0 0
        %1978 = vmatprep.subr.bf16.mxu0 0
        %1979 = vmatpush1.bf16.xpose.msra.mxu0 0
        %1980 = vmatprep.subr.bf16.mxu0 0
        %1981 = vmatpush1.bf16.xpose.msra.mxu0 0
        %1982 = vmatprep.subr.bf16.mxu0 0
        %1983 = vmatpush1.bf16.xpose.msra.mxu0 0
        %1984 = vmatprep.subr.bf16.mxu0 0
        %1985 = vmatpush1.bf16.xpose.msra.mxu0 0
        %1986 = vmatprep.subr.bf16.mxu0 0
        %1987 = vmatpush1.bf16.xpose.msra.mxu0 0
        %1988 = vmatprep.subr.bf16.mxu0 0
        %1989 = vmatpush1.bf16.xpose.msra.mxu0 0
        %1990 = vmatprep.subr.bf16.mxu0 0
        %1991 = vmatpush1.bf16.xpose.msra.mxu0 0
        %1992 = vmatprep.subr.bf16.mxu0 0
        %1993 = vmatpush1.bf16.xpose.msra.mxu0 0
        %1994 = vmatprep.mubr.bf16.mxu0 0
        %1995 = vmatmul.mubr.bf16.gmra.mrb[0].mxu0 %v1957
        %v1996 = vpop.f32.mrb[0].mxu0
        %v1997 = vadd.f32 0.0, %v1996
        %v1998 = vpop.f32.mrb[0].mxu0
        %v1999 = vpop.f32.mrb[0].mxu0
        %v2000 = vadd.f32 0.0, %v1999
        %v2001 = vpop.f32.mrb[0].mxu0
        %2002 = vdwg.mxu0
        %2004 = vrot.lane.b32.xlu0 %v1901, 96
        %v2005 = vpop.permute.xlu0 %2004
        %v2007 = vsel %vm1193, %v1901, 0
        %v2010 = vsel %vm1193, %v2005, 0
        %2012 = vmatprep.subr.bf16.mxu0 0
        %2013 = vmatpush1.bf16.xpose.msra.mxu0 %v2010
        %2014 = vmatprep.subr.bf16.mxu0 0
        %2015 = vmatpush1.bf16.xpose.msra.mxu0 0
        %2016 = vmatprep.subr.bf16.mxu0 0
        %2017 = vmatpush1.bf16.xpose.msra.mxu0 0
        %2018 = vmatprep.subr.bf16.mxu0 0
        %2019 = vmatpush1.bf16.xpose.msra.mxu0 0
        %2020 = vmatprep.subr.bf16.mxu0 0
        %2021 = vmatpush1.bf16.xpose.msra.mxu0 0
        %2022 = vmatprep.subr.bf16.mxu0 0
        %2023 = vmatpush1.bf16.xpose.msra.mxu0 0
        %2024 = vmatprep.subr.bf16.mxu0 0
        %2025 = vmatpush1.bf16.xpose.msra.mxu0 0
        %2026 = vmatprep.subr.bf16.mxu0 0
        %2027 = vmatpush1.bf16.xpose.msra.mxu0 0
        %2028 = vmatprep.subr.bf16.mxu0 0
        %2029 = vmatpush1.bf16.xpose.msra.mxu0 0
        %2030 = vmatprep.subr.bf16.mxu0 0
        %2031 = vmatpush1.bf16.xpose.msra.mxu0 0
        %2032 = vmatprep.subr.bf16.mxu0 0
        %2033 = vmatpush1.bf16.xpose.msra.mxu0 0
        %2034 = vmatprep.subr.bf16.mxu0 0
        %2035 = vmatpush1.bf16.xpose.msra.mxu0 0
        %2036 = vmatprep.subr.bf16.mxu0 0
        %2037 = vmatpush1.bf16.xpose.msra.mxu0 0
        %2038 = vmatprep.subr.bf16.mxu0 0
        %2039 = vmatpush1.bf16.xpose.msra.mxu0 0
        %2040 = vmatprep.subr.bf16.mxu0 0
        %2041 = vmatpush1.bf16.xpose.msra.mxu0 0
        %2042 = vmatprep.subr.bf16.mxu0 0
        %2043 = vmatpush1.bf16.xpose.msra.mxu0 0
        %2044 = vmatprep.mubr.bf16.mxu0 0
        %2045 = vmatmul.mubr.bf16.gmra.mrb[0].mxu0 %v2007
        %v2046 = vpop.f32.mrb[0].mxu0
        %v2047 = vadd.f32 0.0, %v2046
        %v2048 = vpop.f32.mrb[0].mxu0
        %v2049 = vpop.f32.mrb[0].mxu0
        %v2050 = vadd.f32 0.0, %v2049
        %v2051 = vpop.f32.mrb[0].mxu0
        %2052 = vdwg.mxu0
        %2054 = vrot.lane.b32.xlu0 %v1902, 96
        %v2055 = vpop.permute.xlu0 %2054
        %v2057 = vsel %vm1193, %v1902, 0
        %v2060 = vsel %vm1193, %v2055, 0
        %2062 = vmatprep.subr.bf16.mxu0 0
        %2063 = vmatpush1.bf16.xpose.msra.mxu0 %v2060
        %2064 = vmatprep.subr.bf16.mxu0 0
        %2065 = vmatpush1.bf16.xpose.msra.mxu0 0
        %2066 = vmatprep.subr.bf16.mxu0 0
        %2067 = vmatpush1.bf16.xpose.msra.mxu0 0
        %2068 = vmatprep.subr.bf16.mxu0 0
        %2069 = vmatpush1.bf16.xpose.msra.mxu0 0
        %2070 = vmatprep.subr.bf16.mxu0 0
        %2071 = vmatpush1.bf16.xpose.msra.mxu0 0
        %2072 = vmatprep.subr.bf16.mxu0 0
        %2073 = vmatpush1.bf16.xpose.msra.mxu0 0
        %2074 = vmatprep.subr.bf16.mxu0 0
        %2075 = vmatpush1.bf16.xpose.msra.mxu0 0
        %2076 = vmatprep.subr.bf16.mxu0 0
        %2077 = vmatpush1.bf16.xpose.msra.mxu0 0
        %2078 = vmatprep.subr.bf16.mxu0 0
        %2079 = vmatpush1.bf16.xpose.msra.mxu0 0
        %2080 = vmatprep.subr.bf16.mxu0 0
        %2081 = vmatpush1.bf16.xpose.msra.mxu0 0
        %2082 = vmatprep.subr.bf16.mxu0 0
        %2083 = vmatpush1.bf16.xpose.msra.mxu0 0
        %2084 = vmatprep.subr.bf16.mxu0 0
        %2085 = vmatpush1.bf16.xpose.msra.mxu0 0
        %2086 = vmatprep.subr.bf16.mxu0 0
        %2087 = vmatpush1.bf16.xpose.msra.mxu0 0
        %2088 = vmatprep.subr.bf16.mxu0 0
        %2089 = vmatpush1.bf16.xpose.msra.mxu0 0
        %2090 = vmatprep.subr.bf16.mxu0 0
        %2091 = vmatpush1.bf16.xpose.msra.mxu0 0
        %2092 = vmatprep.subr.bf16.mxu0 0
        %2093 = vmatpush1.bf16.xpose.msra.mxu0 0
        %2094 = vmatprep.mubr.bf16.mxu0 0
        %2095 = vmatmul.mubr.bf16.gmra.mrb[0].mxu0 %v2057
        %v2096 = vpop.f32.mrb[0].mxu0
        %v2097 = vadd.f32 0.0, %v2096
        %v2098 = vpop.f32.mrb[0].mxu0
        %v2099 = vpop.f32.mrb[0].mxu0
        %v2100 = vadd.f32 0.0, %v2099
        %v2101 = vpop.f32.mrb[0].mxu0
        %2102 = vdwg.mxu0
        %v2103 = vsel %vm1391, %v1947, -inf
        %2104 = vmax.xlane.f32.xlu0 %v2103
        %v2105 = vpop.xlane.xlu0 %2104
        %v2106 = vsel %vm1391, %v1950, -inf
        %2107 = vmax.xlane.f32.xlu0 %v2106
        %v2108 = vpop.xlane.xlu0 %2107
        %v2109 = vsel %vm1391, %v1997, -inf
        %2110 = vmax.xlane.f32.xlu0 %v2109
        %v2111 = vpop.xlane.xlu0 %2110
        %v2112 = vsel %vm1391, %v2000, -inf
        %2113 = vmax.xlane.f32.xlu0 %v2112
        %v2114 = vpop.xlane.xlu0 %2113
        %v2115 = vsel %vm1391, %v2047, -inf
        %2116 = vmax.xlane.f32.xlu0 %v2115
        %v2117 = vpop.xlane.xlu0 %2116
        %v2118 = vsel %vm1391, %v2050, -inf
        %2119 = vmax.xlane.f32.xlu0 %v2118
        %v2120 = vpop.xlane.xlu0 %2119
        %v2121 = vsel %vm1391, %v2097, -inf
        %2122 = vmax.xlane.f32.xlu0 %v2121
        %v2123 = vpop.xlane.xlu0 %2122
        %v2124 = vsel %vm1391, %v2100, -inf
        %2125 = vmax.xlane.f32.xlu0 %v2124
        %v2126 = vpop.xlane.xlu0 %2125
        %v2127 = vsub.f32 %v1947, %v2105
        %v2128 = vsub.f32 %v1950, %v2108
        %v2129 = vsub.f32 %v1997, %v2111
        %v2130 = vsub.f32 %v2000, %v2114
        %v2131 = vsub.f32 %v2047, %v2117
        %v2132 = vsub.f32 %v2050, %v2120
        %v2133 = vsub.f32 %v2097, %v2123
        %v2134 = vsub.f32 %v2100, %v2126
        %v2135 = vmul.f32 %v2127, 1.442695
        %v2136 = vpow.pop %v2135
        %v2137 = vmul.f32 %v2128, 1.442695
        %v2138 = vpow.pop %v2137
        %v2139 = vmul.f32 %v2129, 1.442695
        %v2140 = vpow.pop %v2139
        %v2141 = vmul.f32 %v2130, 1.442695
        %v2142 = vpow.pop %v2141
        %v2143 = vmul.f32 %v2131, 1.442695
        %v2144 = vpow.pop %v2143
        %v2145 = vmul.f32 %v2132, 1.442695
        %v2146 = vpow.pop %v2145
        %v2147 = vmul.f32 %v2133, 1.442695
        %v2148 = vpow.pop %v2147
        %v2149 = vmul.f32 %v2134, 1.442695
        %v2150 = vpow.pop %v2149
        %v2151 = vsel %vm1391, %v2136, 0.0
        %2152 = vadd.xlane.f32.xlu0 %v2151
        %v2153 = vpop.xlane.xlu0 %2152
        %v2154 = vsel %vm1391, %v2138, 0.0
        %2155 = vadd.xlane.f32.xlu0 %v2154
        %v2156 = vpop.xlane.xlu0 %2155
        %v2157 = vsel %vm1391, %v2140, 0.0
        %2158 = vadd.xlane.f32.xlu0 %v2157
        %v2159 = vpop.xlane.xlu0 %2158
        %v2160 = vsel %vm1391, %v2142, 0.0
        %2161 = vadd.xlane.f32.xlu0 %v2160
        %v2162 = vpop.xlane.xlu0 %2161
        %v2163 = vsel %vm1391, %v2144, 0.0
        %2164 = vadd.xlane.f32.xlu0 %v2163
        %v2165 = vpop.xlane.xlu0 %2164
        %v2166 = vsel %vm1391, %v2146, 0.0
        %2167 = vadd.xlane.f32.xlu0 %v2166
        %v2168 = vpop.xlane.xlu0 %2167
        %v2169 = vsel %vm1391, %v2148, 0.0
        %2170 = vadd.xlane.f32.xlu0 %v2169
        %v2171 = vpop.xlane.xlu0 %2170
        %v2172 = vsel %vm1391, %v2150, 0.0
        %2173 = vadd.xlane.f32.xlu0 %v2172
        %v2174 = vpop.xlane.xlu0 %2173
        %v2175 = vrcp.pop %v2153
        %v2176 = vrcp.pop %v2156
        %v2177 = vrcp.pop %v2159
        %v2178 = vrcp.pop %v2162
        %v2179 = vrcp.pop %v2165
        %v2180 = vrcp.pop %v2168
        %v2181 = vrcp.pop %v2171
        %v2182 = vrcp.pop %v2174
        %v2183 = vmul.f32 %v2136, %v2175
        %v2184 = vmul.f32 %v2138, %v2176
        %v2185 = vmul.f32 %v2140, %v2177
        %v2186 = vmul.f32 %v2142, %v2178
        %v2187 = vmul.f32 %v2144, %v2179
        %v2188 = vmul.f32 %v2146, %v2180
        %v2189 = vmul.f32 %v2148, %v2181
        %v2190 = vmul.f32 %v2150, %v2182
        %v2191 = vpack.c.bf16 %v2184, %v2183
        %v2192 = vpack.c.bf16 %v2186, %v2185
        %v2193 = vpack.c.bf16 %v2188, %v2187
        %v2194 = vpack.c.bf16 %v2190, %v2189
        %2195 = vrot.lane.b32.xlu0 %v1899, 64
        %v2196 = vpop.permute.xlu0 %2195
        %v2199 = vsel %vm1391, %v2191, 0
        %2201 = vmatprep.subr.bf16.mxu0 0
        %2202 = vmatpush1.bf16.msra.mxu0 %v2196
        %2203 = vmatprep.subr.bf16.mxu0 0
        %2204 = vmatpush1.bf16.msra.mxu0 0
        %2205 = vmatprep.subr.bf16.mxu0 0
        %2206 = vmatpush1.bf16.msra.mxu0 0
        %2207 = vmatprep.subr.bf16.mxu0 0
        %2208 = vmatpush1.bf16.msra.mxu0 0
        %2209 = vmatprep.subr.bf16.mxu0 0
        %2210 = vmatpush1.bf16.msra.mxu0 0
        %2211 = vmatprep.subr.bf16.mxu0 0
        %2212 = vmatpush1.bf16.msra.mxu0 0
        %2213 = vmatprep.subr.bf16.mxu0 0
        %2214 = vmatpush1.bf16.msra.mxu0 0
        %2215 = vmatprep.subr.bf16.mxu0 0
        %2216 = vmatpush1.bf16.msra.mxu0 0
        %2217 = vmatprep.subr.bf16.mxu0 0
        %2218 = vmatpush1.bf16.msra.mxu0 0
        %2219 = vmatprep.subr.bf16.mxu0 0
        %2220 = vmatpush1.bf16.msra.mxu0 0
        %2221 = vmatprep.subr.bf16.mxu0 0
        %2222 = vmatpush1.bf16.msra.mxu0 0
        %2223 = vmatprep.subr.bf16.mxu0 0
        %2224 = vmatpush1.bf16.msra.mxu0 0
        %2225 = vmatprep.subr.bf16.mxu0 0
        %2226 = vmatpush1.bf16.msra.mxu0 0
        %2227 = vmatprep.subr.bf16.mxu0 0
        %2228 = vmatpush1.bf16.msra.mxu0 0
        %2229 = vmatprep.subr.bf16.mxu0 0
        %2230 = vmatpush1.bf16.msra.mxu0 0
        %2231 = vmatprep.subr.bf16.mxu0 0
        %2232 = vmatpush1.bf16.msra.mxu0 0
        %2233 = vmatprep.mubr.bf16.mxu0 0
        %2234 = vmatmul.mubr.bf16.gmra.mrb[0].mxu0 %v2199
        %v2235 = vpop.f32.mrb[0].mxu0
        %v2236 = vadd.f32 0.0, %v2235
        %v2237 = vpop.f32.mrb[0].mxu0
        %v2238 = vpop.f32.mrb[0].mxu0
        %v2239 = vadd.f32 0.0, %v2238
        %v2240 = vpop.f32.mrb[0].mxu0
        %2241 = vdwg.mxu0
        %2242 = vrot.lane.b32.xlu0 %v1900, 64
        %v2243 = vpop.permute.xlu0 %2242
        %v2246 = vsel %vm1391, %v2192, 0
        %2248 = vmatprep.subr.bf16.mxu0 0
        %2249 = vmatpush1.bf16.msra.mxu0 %v2243
        %2250 = vmatprep.subr.bf16.mxu0 0
        %2251 = vmatpush1.bf16.msra.mxu0 0
        %2252 = vmatprep.subr.bf16.mxu0 0
        %2253 = vmatpush1.bf16.msra.mxu0 0
        %2254 = vmatprep.subr.bf16.mxu0 0
        %2255 = vmatpush1.bf16.msra.mxu0 0
        %2256 = vmatprep.subr.bf16.mxu0 0
        %2257 = vmatpush1.bf16.msra.mxu0 0
        %2258 = vmatprep.subr.bf16.mxu0 0
        %2259 = vmatpush1.bf16.msra.mxu0 0
        %2260 = vmatprep.subr.bf16.mxu0 0
        %2261 = vmatpush1.bf16.msra.mxu0 0
        %2262 = vmatprep.subr.bf16.mxu0 0
        %2263 = vmatpush1.bf16.msra.mxu0 0
        %2264 = vmatprep.subr.bf16.mxu0 0
        %2265 = vmatpush1.bf16.msra.mxu0 0
        %2266 = vmatprep.subr.bf16.mxu0 0
        %2267 = vmatpush1.bf16.msra.mxu0 0
        %2268 = vmatprep.subr.bf16.mxu0 0
        %2269 = vmatpush1.bf16.msra.mxu0 0
        %2270 = vmatprep.subr.bf16.mxu0 0
        %2271 = vmatpush1.bf16.msra.mxu0 0
        %2272 = vmatprep.subr.bf16.mxu0 0
        %2273 = vmatpush1.bf16.msra.mxu0 0
        %2274 = vmatprep.subr.bf16.mxu0 0
        %2275 = vmatpush1.bf16.msra.mxu0 0
        %2276 = vmatprep.subr.bf16.mxu0 0
        %2277 = vmatpush1.bf16.msra.mxu0 0
        %2278 = vmatprep.subr.bf16.mxu0 0
        %2279 = vmatpush1.bf16.msra.mxu0 0
        %2280 = vmatprep.mubr.bf16.mxu0 0
        %2281 = vmatmul.mubr.bf16.gmra.mrb[0].mxu0 %v2246
        %v2282 = vpop.f32.mrb[0].mxu0
        %v2283 = vadd.f32 0.0, %v2282
        %v2284 = vpop.f32.mrb[0].mxu0
        %v2285 = vpop.f32.mrb[0].mxu0
        %v2286 = vadd.f32 0.0, %v2285
        %v2287 = vpop.f32.mrb[0].mxu0
        %2288 = vdwg.mxu0
        %2289 = vrot.lane.b32.xlu0 %v1901, 64
        %v2290 = vpop.permute.xlu0 %2289
        %v2293 = vsel %vm1391, %v2193, 0
        %2295 = vmatprep.subr.bf16.mxu0 0
        %2296 = vmatpush1.bf16.msra.mxu0 %v2290
        %2297 = vmatprep.subr.bf16.mxu0 0
        %2298 = vmatpush1.bf16.msra.mxu0 0
        %2299 = vmatprep.subr.bf16.mxu0 0
        %2300 = vmatpush1.bf16.msra.mxu0 0
        %2301 = vmatprep.subr.bf16.mxu0 0
        %2302 = vmatpush1.bf16.msra.mxu0 0
        %2303 = vmatprep.subr.bf16.mxu0 0
        %2304 = vmatpush1.bf16.msra.mxu0 0
        %2305 = vmatprep.subr.bf16.mxu0 0
        %2306 = vmatpush1.bf16.msra.mxu0 0
        %2307 = vmatprep.subr.bf16.mxu0 0
        %2308 = vmatpush1.bf16.msra.mxu0 0
        %2309 = vmatprep.subr.bf16.mxu0 0
        %2310 = vmatpush1.bf16.msra.mxu0 0
        %2311 = vmatprep.subr.bf16.mxu0 0
        %2312 = vmatpush1.bf16.msra.mxu0 0
        %2313 = vmatprep.subr.bf16.mxu0 0
        %2314 = vmatpush1.bf16.msra.mxu0 0
        %2315 = vmatprep.subr.bf16.mxu0 0
        %2316 = vmatpush1.bf16.msra.mxu0 0
        %2317 = vmatprep.subr.bf16.mxu0 0
        %2318 = vmatpush1.bf16.msra.mxu0 0
        %2319 = vmatprep.subr.bf16.mxu0 0
        %2320 = vmatpush1.bf16.msra.mxu0 0
        %2321 = vmatprep.subr.bf16.mxu0 0
        %2322 = vmatpush1.bf16.msra.mxu0 0
        %2323 = vmatprep.subr.bf16.mxu0 0
        %2324 = vmatpush1.bf16.msra.mxu0 0
        %2325 = vmatprep.subr.bf16.mxu0 0
        %2326 = vmatpush1.bf16.msra.mxu0 0
        %2327 = vmatprep.mubr.bf16.mxu0 0
        %2328 = vmatmul.mubr.bf16.gmra.mrb[0].mxu0 %v2293
        %v2329 = vpop.f32.mrb[0].mxu0
        %v2330 = vadd.f32 0.0, %v2329
        %v2331 = vpop.f32.mrb[0].mxu0
        %v2332 = vpop.f32.mrb[0].mxu0
        %v2333 = vadd.f32 0.0, %v2332
        %v2334 = vpop.f32.mrb[0].mxu0
        %2335 = vdwg.mxu0
        %2336 = vrot.lane.b32.xlu0 %v1902, 64
        %v2337 = vpop.permute.xlu0 %2336
        %v2340 = vsel %vm1391, %v2194, 0
        %2342 = vmatprep.subr.bf16.mxu0 0
        %2343 = vmatpush1.bf16.msra.mxu0 %v2337
        %2344 = vmatprep.subr.bf16.mxu0 0
        %2345 = vmatpush1.bf16.msra.mxu0 0
        %2346 = vmatprep.subr.bf16.mxu0 0
        %2347 = vmatpush1.bf16.msra.mxu0 0
        %2348 = vmatprep.subr.bf16.mxu0 0
        %2349 = vmatpush1.bf16.msra.mxu0 0
        %2350 = vmatprep.subr.bf16.mxu0 0
        %2351 = vmatpush1.bf16.msra.mxu0 0
        %2352 = vmatprep.subr.bf16.mxu0 0
        %2353 = vmatpush1.bf16.msra.mxu0 0
        %2354 = vmatprep.subr.bf16.mxu0 0
        %2355 = vmatpush1.bf16.msra.mxu0 0
        %2356 = vmatprep.subr.bf16.mxu0 0
        %2357 = vmatpush1.bf16.msra.mxu0 0
        %2358 = vmatprep.subr.bf16.mxu0 0
        %2359 = vmatpush1.bf16.msra.mxu0 0
        %2360 = vmatprep.subr.bf16.mxu0 0
        %2361 = vmatpush1.bf16.msra.mxu0 0
        %2362 = vmatprep.subr.bf16.mxu0 0
        %2363 = vmatpush1.bf16.msra.mxu0 0
        %2364 = vmatprep.subr.bf16.mxu0 0
        %2365 = vmatpush1.bf16.msra.mxu0 0
        %2366 = vmatprep.subr.bf16.mxu0 0
        %2367 = vmatpush1.bf16.msra.mxu0 0
        %2368 = vmatprep.subr.bf16.mxu0 0
        %2369 = vmatpush1.bf16.msra.mxu0 0
        %2370 = vmatprep.subr.bf16.mxu0 0
        %2371 = vmatpush1.bf16.msra.mxu0 0
        %2372 = vmatprep.subr.bf16.mxu0 0
        %2373 = vmatpush1.bf16.msra.mxu0 0
        %2374 = vmatprep.mubr.bf16.mxu0 0
        %2375 = vmatmul.mubr.bf16.gmra.mrb[0].mxu0 %v2340
        %v2376 = vpop.f32.mrb[0].mxu0
        %v2377 = vadd.f32 0.0, %v2376
        %v2378 = vpop.f32.mrb[0].mxu0
        %v2379 = vpop.f32.mrb[0].mxu0
        %v2380 = vadd.f32 0.0, %v2379
        %v2381 = vpop.f32.mrb[0].mxu0
        %2382 = vdwg.mxu0
        %v2383 = vpack.c.bf16 %v2239, %v2236
        %v2384 = vpack.c.bf16 %v2286, %v2283
        %v2385 = vpack.c.bf16 %v2333, %v2330
        %v2386 = vpack.c.bf16 %v2380, %v2377
        %v2388 = vsel %vm1193, %v2383, 0
        %2390 = vmatprep.subr.bf16.mxu0 0
        %2391 = vmatpush1.bf16.msra.mxu0 %v1681
        %2392 = vmatprep.subr.bf16.mxu0 0
        %2393 = vmatpush1.bf16.msra.mxu0 0
        %2394 = vmatprep.subr.bf16.mxu0 0
        %2395 = vmatpush1.bf16.msra.mxu0 0
        %2396 = vmatprep.subr.bf16.mxu0 0
        %2397 = vmatpush1.bf16.msra.mxu0 0
        %2398 = vmatprep.subr.bf16.mxu0 0
        %2399 = vmatpush1.bf16.msra.mxu0 0
        %2400 = vmatprep.subr.bf16.mxu0 0
        %2401 = vmatpush1.bf16.msra.mxu0 0
        %2402 = vmatprep.subr.bf16.mxu0 0
        %2403 = vmatpush1.bf16.msra.mxu0 0
        %2404 = vmatprep.subr.bf16.mxu0 0
        %2405 = vmatpush1.bf16.msra.mxu0 0
        %2406 = vmatprep.subr.bf16.mxu0 0
        %2407 = vmatpush1.bf16.msra.mxu0 0
        %2408 = vmatprep.subr.bf16.mxu0 0
        %2409 = vmatpush1.bf16.msra.mxu0 0
        %2410 = vmatprep.subr.bf16.mxu0 0
        %2411 = vmatpush1.bf16.msra.mxu0 0
        %2412 = vmatprep.subr.bf16.mxu0 0
        %2413 = vmatpush1.bf16.msra.mxu0 0
        %2414 = vmatprep.subr.bf16.mxu0 0
        %2415 = vmatpush1.bf16.msra.mxu0 0
        %2416 = vmatprep.subr.bf16.mxu0 0
        %2417 = vmatpush1.bf16.msra.mxu0 0
        %2418 = vmatprep.subr.bf16.mxu0 0
        %2419 = vmatpush1.bf16.msra.mxu0 0
        %2420 = vmatprep.subr.bf16.mxu0 0
        %2421 = vmatpush1.bf16.msra.mxu0 0
        %2422 = vmatprep.mubr.bf16.mxu0 0
        %2423 = vmatmul.mubr.bf16.gmra.mrb[0].mxu0 %v2388
        %v2424 = vpop.f32.mrb[0].mxu0
        %v2425 = vadd.f32 0.0, %v2424
        %v2426 = vpop.f32.mrb[0].mxu0
        %v2427 = vpop.f32.mrb[0].mxu0
        %v2428 = vadd.f32 0.0, %v2427
        %v2429 = vpop.f32.mrb[0].mxu0
        %2430 = vdwg.mxu0
        %v2432 = vsel %vm1193, %v2384, 0
        %2434 = vmatprep.subr.bf16.mxu0 0
        %2435 = vmatpush1.bf16.msra.mxu0 %v1728
        %2436 = vmatprep.subr.bf16.mxu0 0
        %2437 = vmatpush1.bf16.msra.mxu0 0
        %2438 = vmatprep.subr.bf16.mxu0 0
        %2439 = vmatpush1.bf16.msra.mxu0 0
        %2440 = vmatprep.subr.bf16.mxu0 0
        %2441 = vmatpush1.bf16.msra.mxu0 0
        %2442 = vmatprep.subr.bf16.mxu0 0
        %2443 = vmatpush1.bf16.msra.mxu0 0
        %2444 = vmatprep.subr.bf16.mxu0 0
        %2445 = vmatpush1.bf16.msra.mxu0 0
        %2446 = vmatprep.subr.bf16.mxu0 0
        %2447 = vmatpush1.bf16.msra.mxu0 0
        %2448 = vmatprep.subr.bf16.mxu0 0
        %2449 = vmatpush1.bf16.msra.mxu0 0
        %2450 = vmatprep.subr.bf16.mxu0 0
        %2451 = vmatpush1.bf16.msra.mxu0 0
        %2452 = vmatprep.subr.bf16.mxu0 0
        %2453 = vmatpush1.bf16.msra.mxu0 0
        %2454 = vmatprep.subr.bf16.mxu0 0
        %2455 = vmatpush1.bf16.msra.mxu0 0
        %2456 = vmatprep.subr.bf16.mxu0 0
        %2457 = vmatpush1.bf16.msra.mxu0 0
        %2458 = vmatprep.subr.bf16.mxu0 0
        %2459 = vmatpush1.bf16.msra.mxu0 0
        %2460 = vmatprep.subr.bf16.mxu0 0
        %2461 = vmatpush1.bf16.msra.mxu0 0
        %2462 = vmatprep.subr.bf16.mxu0 0
        %2463 = vmatpush1.bf16.msra.mxu0 0
        %2464 = vmatprep.subr.bf16.mxu0 0
        %2465 = vmatpush1.bf16.msra.mxu0 0
        %2466 = vmatprep.mubr.bf16.mxu0 0
        %2467 = vmatmul.mubr.bf16.gmra.mrb[0].mxu0 %v2432
        %v2468 = vpop.f32.mrb[0].mxu0
        %v2469 = vadd.f32 0.0, %v2468
        %v2470 = vpop.f32.mrb[0].mxu0
        %v2471 = vpop.f32.mrb[0].mxu0
        %v2472 = vadd.f32 0.0, %v2471
        %v2473 = vpop.f32.mrb[0].mxu0
        %2474 = vdwg.mxu0
        %v2476 = vsel %vm1193, %v2385, 0
        %2478 = vmatprep.subr.bf16.mxu0 0
        %2479 = vmatpush1.bf16.msra.mxu0 %v1775
        %2480 = vmatprep.subr.bf16.mxu0 0
        %2481 = vmatpush1.bf16.msra.mxu0 0
        %2482 = vmatprep.subr.bf16.mxu0 0
        %2483 = vmatpush1.bf16.msra.mxu0 0
        %2484 = vmatprep.subr.bf16.mxu0 0
        %2485 = vmatpush1.bf16.msra.mxu0 0
        %2486 = vmatprep.subr.bf16.mxu0 0
        %2487 = vmatpush1.bf16.msra.mxu0 0
        %2488 = vmatprep.subr.bf16.mxu0 0
        %2489 = vmatpush1.bf16.msra.mxu0 0
        %2490 = vmatprep.subr.bf16.mxu0 0
        %2491 = vmatpush1.bf16.msra.mxu0 0
        %2492 = vmatprep.subr.bf16.mxu0 0
        %2493 = vmatpush1.bf16.msra.mxu0 0
        %2494 = vmatprep.subr.bf16.mxu0 0
        %2495 = vmatpush1.bf16.msra.mxu0 0
        %2496 = vmatprep.subr.bf16.mxu0 0
        %2497 = vmatpush1.bf16.msra.mxu0 0
        %2498 = vmatprep.subr.bf16.mxu0 0
        %2499 = vmatpush1.bf16.msra.mxu0 0
        %2500 = vmatprep.subr.bf16.mxu0 0
        %2501 = vmatpush1.bf16.msra.mxu0 0
        %2502 = vmatprep.subr.bf16.mxu0 0
        %2503 = vmatpush1.bf16.msra.mxu0 0
        %2504 = vmatprep.subr.bf16.mxu0 0
        %2505 = vmatpush1.bf16.msra.mxu0 0
        %2506 = vmatprep.subr.bf16.mxu0 0
        %2507 = vmatpush1.bf16.msra.mxu0 0
        %2508 = vmatprep.subr.bf16.mxu0 0
        %2509 = vmatpush1.bf16.msra.mxu0 0
        %2510 = vmatprep.mubr.bf16.mxu0 0
        %2511 = vmatmul.mubr.bf16.gmra.mrb[0].mxu0 %v2476
        %v2512 = vpop.f32.mrb[0].mxu0
        %v2513 = vadd.f32 0.0, %v2512
        %v2514 = vpop.f32.mrb[0].mxu0
        %v2515 = vpop.f32.mrb[0].mxu0
        %v2516 = vadd.f32 0.0, %v2515
        %v2517 = vpop.f32.mrb[0].mxu0
        %2518 = vdwg.mxu0
        %v2520 = vsel %vm1193, %v2386, 0
        %2522 = vmatprep.subr.bf16.mxu0 0
        %2523 = vmatpush1.bf16.msra.mxu0 %v1822
        %2524 = vmatprep.subr.bf16.mxu0 0
        %2525 = vmatpush1.bf16.msra.mxu0 0
        %2526 = vmatprep.subr.bf16.mxu0 0
        %2527 = vmatpush1.bf16.msra.mxu0 0
        %2528 = vmatprep.subr.bf16.mxu0 0
        %2529 = vmatpush1.bf16.msra.mxu0 0
        %2530 = vmatprep.subr.bf16.mxu0 0
        %2531 = vmatpush1.bf16.msra.mxu0 0
        %2532 = vmatprep.subr.bf16.mxu0 0
        %2533 = vmatpush1.bf16.msra.mxu0 0
        %2534 = vmatprep.subr.bf16.mxu0 0
        %2535 = vmatpush1.bf16.msra.mxu0 0
        %2536 = vmatprep.subr.bf16.mxu0 0
        %2537 = vmatpush1.bf16.msra.mxu0 0
        %2538 = vmatprep.subr.bf16.mxu0 0
        %2539 = vmatpush1.bf16.msra.mxu0 0
        %2540 = vmatprep.subr.bf16.mxu0 0
        %2541 = vmatpush1.bf16.msra.mxu0 0
        %2542 = vmatprep.subr.bf16.mxu0 0
        %2543 = vmatpush1.bf16.msra.mxu0 0
        %2544 = vmatprep.subr.bf16.mxu0 0
        %2545 = vmatpush1.bf16.msra.mxu0 0
        %2546 = vmatprep.subr.bf16.mxu0 0
        %2547 = vmatpush1.bf16.msra.mxu0 0
        %2548 = vmatprep.subr.bf16.mxu0 0
        %2549 = vmatpush1.bf16.msra.mxu0 0
        %2550 = vmatprep.subr.bf16.mxu0 0
        %2551 = vmatpush1.bf16.msra.mxu0 0
        %2552 = vmatprep.subr.bf16.mxu0 0
        %2553 = vmatpush1.bf16.msra.mxu0 0
        %2554 = vmatprep.mubr.bf16.mxu0 0
        %2555 = vmatmul.mubr.bf16.gmra.mrb[0].mxu0 %v2520
        %v2556 = vpop.f32.mrb[0].mxu0
        %v2557 = vadd.f32 0.0, %v2556
        %v2558 = vpop.f32.mrb[0].mxu0
        %v2559 = vpop.f32.mrb[0].mxu0
        %v2560 = vadd.f32 0.0, %v2559
        %v2561 = vpop.f32.mrb[0].mxu0
        %2562 = vdwg.mxu0
        %v2563 = vsel %vm1084, %v2425, 0.0
        %v2564 = vsel %vm1084, %v2469, 0.0
        %v2565 = vadd.f32 %v2563, %v2564
        %v2566 = vsel %vm1084, %v2513, 0.0
        %v2567 = vadd.f32 %v2565, %v2566
        %v2568 = vsel %vm1084, %v2557, 0.0
        %v2569 = vadd.f32 %v2567, %v2568
        %v2570 = vsel %vm1084, %v2428, 0.0
        %v2571 = vsel %vm1084, %v2472, 0.0
        %v2572 = vadd.f32 %v2570, %v2571
        %v2573 = vsel %vm1084, %v2516, 0.0
        %v2574 = vadd.f32 %v2572, %v2573
        %v2575 = vsel %vm1084, %v2560, 0.0
        %v2576 = vadd.f32 %v2574, %v2575
        %2579 = vrot.lane.b32.xlu0 %v1148, 120
        %v2580 = vpop.permute.xlu0 %2579
        %2581 = vrot.lane.b32.xlu0 %v1151, 120
        %v2582 = vpop.permute.xlu0 %2581
        %2585 = vrot.lane.b32.xlu0 %v1148, 112
        %v2586 = vpop.permute.xlu0 %2585
        %2587 = vrot.lane.b32.xlu0 %v1151, 112
        %v2588 = vpop.permute.xlu0 %2587
        %2591 = vrot.lane.b32.xlu0 %v1148, 104
        %v2592 = vpop.permute.xlu0 %2591
        %2593 = vrot.lane.b32.xlu0 %v1151, 104
        %v2594 = vpop.permute.xlu0 %2593
        %v2597 = vpack.c.bf16 %v1151, %v1148
        %v2598 = vpack.c.bf16 %v2582, %v2580
        %v2599 = vpack.c.bf16 %v2588, %v2586
        %v2600 = vpack.c.bf16 %v2594, %v2592
        %2602 = vrot.lane.b32.xlu0 %v2597, 96
        %v2603 = vpop.permute.xlu0 %2602
        %v2605 = vsel %vm1193, %v2597, 0
        %v2608 = vsel %vm1193, %v2603, 0
        %2610 = vmatprep.subr.bf16.mxu0 0
        %2611 = vmatpush1.bf16.xpose.msra.mxu0 %v2608
        %2612 = vmatprep.subr.bf16.mxu0 0
        %2613 = vmatpush1.bf16.xpose.msra.mxu0 0
        %2614 = vmatprep.subr.bf16.mxu0 0
        %2615 = vmatpush1.bf16.xpose.msra.mxu0 0
        %2616 = vmatprep.subr.bf16.mxu0 0
        %2617 = vmatpush1.bf16.xpose.msra.mxu0 0
        %2618 = vmatprep.subr.bf16.mxu0 0
        %2619 = vmatpush1.bf16.xpose.msra.mxu0 0
        %2620 = vmatprep.subr.bf16.mxu0 0
        %2621 = vmatpush1.bf16.xpose.msra.mxu0 0
        %2622 = vmatprep.subr.bf16.mxu0 0
        %2623 = vmatpush1.bf16.xpose.msra.mxu0 0
        %2624 = vmatprep.subr.bf16.mxu0 0
        %2625 = vmatpush1.bf16.xpose.msra.mxu0 0
        %2626 = vmatprep.subr.bf16.mxu0 0
        %2627 = vmatpush1.bf16.xpose.msra.mxu0 0
        %2628 = vmatprep.subr.bf16.mxu0 0
        %2629 = vmatpush1.bf16.xpose.msra.mxu0 0
        %2630 = vmatprep.subr.bf16.mxu0 0
        %2631 = vmatpush1.bf16.xpose.msra.mxu0 0
        %2632 = vmatprep.subr.bf16.mxu0 0
        %2633 = vmatpush1.bf16.xpose.msra.mxu0 0
        %2634 = vmatprep.subr.bf16.mxu0 0
        %2635 = vmatpush1.bf16.xpose.msra.mxu0 0
        %2636 = vmatprep.subr.bf16.mxu0 0
        %2637 = vmatpush1.bf16.xpose.msra.mxu0 0
        %2638 = vmatprep.subr.bf16.mxu0 0
        %2639 = vmatpush1.bf16.xpose.msra.mxu0 0
        %2640 = vmatprep.subr.bf16.mxu0 0
        %2641 = vmatpush1.bf16.xpose.msra.mxu0 0
        %2642 = vmatprep.mubr.bf16.mxu0 0
        %2643 = vmatmul.mubr.bf16.gmra.mrb[0].mxu0 %v2605
        %v2644 = vpop.f32.mrb[0].mxu0
        %v2645 = vadd.f32 0.0, %v2644
        %v2646 = vpop.f32.mrb[0].mxu0
        %v2647 = vpop.f32.mrb[0].mxu0
        %v2648 = vadd.f32 0.0, %v2647
        %v2649 = vpop.f32.mrb[0].mxu0
        %2650 = vdwg.mxu0
        %2652 = vrot.lane.b32.xlu0 %v2598, 96
        %v2653 = vpop.permute.xlu0 %2652
        %v2655 = vsel %vm1193, %v2598, 0
        %v2658 = vsel %vm1193, %v2653, 0
        %2660 = vmatprep.subr.bf16.mxu0 0
        %2661 = vmatpush1.bf16.xpose.msra.mxu0 %v2658
        %2662 = vmatprep.subr.bf16.mxu0 0
        %2663 = vmatpush1.bf16.xpose.msra.mxu0 0
        %2664 = vmatprep.subr.bf16.mxu0 0
        %2665 = vmatpush1.bf16.xpose.msra.mxu0 0
        %2666 = vmatprep.subr.bf16.mxu0 0
        %2667 = vmatpush1.bf16.xpose.msra.mxu0 0
        %2668 = vmatprep.subr.bf16.mxu0 0
        %2669 = vmatpush1.bf16.xpose.msra.mxu0 0
        %2670 = vmatprep.subr.bf16.mxu0 0
        %2671 = vmatpush1.bf16.xpose.msra.mxu0 0
        %2672 = vmatprep.subr.bf16.mxu0 0
        %2673 = vmatpush1.bf16.xpose.msra.mxu0 0
        %2674 = vmatprep.subr.bf16.mxu0 0
        %2675 = vmatpush1.bf16.xpose.msra.mxu0 0
        %2676 = vmatprep.subr.bf16.mxu0 0
        %2677 = vmatpush1.bf16.xpose.msra.mxu0 0
        %2678 = vmatprep.subr.bf16.mxu0 0
        %2679 = vmatpush1.bf16.xpose.msra.mxu0 0
        %2680 = vmatprep.subr.bf16.mxu0 0
        %2681 = vmatpush1.bf16.xpose.msra.mxu0 0
        %2682 = vmatprep.subr.bf16.mxu0 0
        %2683 = vmatpush1.bf16.xpose.msra.mxu0 0
        %2684 = vmatprep.subr.bf16.mxu0 0
        %2685 = vmatpush1.bf16.xpose.msra.mxu0 0
        %2686 = vmatprep.subr.bf16.mxu0 0
        %2687 = vmatpush1.bf16.xpose.msra.mxu0 0
        %2688 = vmatprep.subr.bf16.mxu0 0
        %2689 = vmatpush1.bf16.xpose.msra.mxu0 0
        %2690 = vmatprep.subr.bf16.mxu0 0
        %2691 = vmatpush1.bf16.xpose.msra.mxu0 0
        %2692 = vmatprep.mubr.bf16.mxu0 0
        %2693 = vmatmul.mubr.bf16.gmra.mrb[0].mxu0 %v2655
        %v2694 = vpop.f32.mrb[0].mxu0
        %v2695 = vadd.f32 0.0, %v2694
        %v2696 = vpop.f32.mrb[0].mxu0
        %v2697 = vpop.f32.mrb[0].mxu0
        %v2698 = vadd.f32 0.0, %v2697
        %v2699 = vpop.f32.mrb[0].mxu0
        %2700 = vdwg.mxu0
        %2702 = vrot.lane.b32.xlu0 %v2599, 96
        %v2703 = vpop.permute.xlu0 %2702
        %v2705 = vsel %vm1193, %v2599, 0
        %v2708 = vsel %vm1193, %v2703, 0
        %2710 = vmatprep.subr.bf16.mxu0 0
        %2711 = vmatpush1.bf16.xpose.msra.mxu0 %v2708
        %2712 = vmatprep.subr.bf16.mxu0 0
        %2713 = vmatpush1.bf16.xpose.msra.mxu0 0
        %2714 = vmatprep.subr.bf16.mxu0 0
        %2715 = vmatpush1.bf16.xpose.msra.mxu0 0
        %2716 = vmatprep.subr.bf16.mxu0 0
        %2717 = vmatpush1.bf16.xpose.msra.mxu0 0
        %2718 = vmatprep.subr.bf16.mxu0 0
        %2719 = vmatpush1.bf16.xpose.msra.mxu0 0
        %2720 = vmatprep.subr.bf16.mxu0 0
        %2721 = vmatpush1.bf16.xpose.msra.mxu0 0
        %2722 = vmatprep.subr.bf16.mxu0 0
        %2723 = vmatpush1.bf16.xpose.msra.mxu0 0
        %2724 = vmatprep.subr.bf16.mxu0 0
        %2725 = vmatpush1.bf16.xpose.msra.mxu0 0
        %2726 = vmatprep.subr.bf16.mxu0 0
        %2727 = vmatpush1.bf16.xpose.msra.mxu0 0
        %2728 = vmatprep.subr.bf16.mxu0 0
        %2729 = vmatpush1.bf16.xpose.msra.mxu0 0
        %2730 = vmatprep.subr.bf16.mxu0 0
        %2731 = vmatpush1.bf16.xpose.msra.mxu0 0
        %2732 = vmatprep.subr.bf16.mxu0 0
        %2733 = vmatpush1.bf16.xpose.msra.mxu0 0
        %2734 = vmatprep.subr.bf16.mxu0 0
        %2735 = vmatpush1.bf16.xpose.msra.mxu0 0
        %2736 = vmatprep.subr.bf16.mxu0 0
        %2737 = vmatpush1.bf16.xpose.msra.mxu0 0
        %2738 = vmatprep.subr.bf16.mxu0 0
        %2739 = vmatpush1.bf16.xpose.msra.mxu0 0
        %2740 = vmatprep.subr.bf16.mxu0 0
        %2741 = vmatpush1.bf16.xpose.msra.mxu0 0
        %2742 = vmatprep.mubr.bf16.mxu0 0
        %2743 = vmatmul.mubr.bf16.gmra.mrb[0].mxu0 %v2705
        %v2744 = vpop.f32.mrb[0].mxu0
        %v2745 = vadd.f32 0.0, %v2744
        %v2746 = vpop.f32.mrb[0].mxu0
        %v2747 = vpop.f32.mrb[0].mxu0
        %v2748 = vadd.f32 0.0, %v2747
        %v2749 = vpop.f32.mrb[0].mxu0
        %2750 = vdwg.mxu0
        %2752 = vrot.lane.b32.xlu0 %v2600, 96
        %v2753 = vpop.permute.xlu0 %2752
        %v2755 = vsel %vm1193, %v2600, 0
        %v2758 = vsel %vm1193, %v2753, 0
        %2760 = vmatprep.subr.bf16.mxu0 0
        %2761 = vmatpush1.bf16.xpose.msra.mxu0 %v2758
        %2762 = vmatprep.subr.bf16.mxu0 0
        %2763 = vmatpush1.bf16.xpose.msra.mxu0 0
        %2764 = vmatprep.subr.bf16.mxu0 0
        %2765 = vmatpush1.bf16.xpose.msra.mxu0 0
        %2766 = vmatprep.subr.bf16.mxu0 0
        %2767 = vmatpush1.bf16.xpose.msra.mxu0 0
        %2768 = vmatprep.subr.bf16.mxu0 0
        %2769 = vmatpush1.bf16.xpose.msra.mxu0 0
        %2770 = vmatprep.subr.bf16.mxu0 0
        %2771 = vmatpush1.bf16.xpose.msra.mxu0 0
        %2772 = vmatprep.subr.bf16.mxu0 0
        %2773 = vmatpush1.bf16.xpose.msra.mxu0 0
        %2774 = vmatprep.subr.bf16.mxu0 0
        %2775 = vmatpush1.bf16.xpose.msra.mxu0 0
        %2776 = vmatprep.subr.bf16.mxu0 0
        %2777 = vmatpush1.bf16.xpose.msra.mxu0 0
        %2778 = vmatprep.subr.bf16.mxu0 0
        %2779 = vmatpush1.bf16.xpose.msra.mxu0 0
        %2780 = vmatprep.subr.bf16.mxu0 0
        %2781 = vmatpush1.bf16.xpose.msra.mxu0 0
        %2782 = vmatprep.subr.bf16.mxu0 0
        %2783 = vmatpush1.bf16.xpose.msra.mxu0 0
        %2784 = vmatprep.subr.bf16.mxu0 0
        %2785 = vmatpush1.bf16.xpose.msra.mxu0 0
        %2786 = vmatprep.subr.bf16.mxu0 0
        %2787 = vmatpush1.bf16.xpose.msra.mxu0 0
        %2788 = vmatprep.subr.bf16.mxu0 0
        %2789 = vmatpush1.bf16.xpose.msra.mxu0 0
        %2790 = vmatprep.subr.bf16.mxu0 0
        %2791 = vmatpush1.bf16.xpose.msra.mxu0 0
        %2792 = vmatprep.mubr.bf16.mxu0 0
        %2793 = vmatmul.mubr.bf16.gmra.mrb[0].mxu0 %v2755
        %v2794 = vpop.f32.mrb[0].mxu0
        %v2795 = vadd.f32 0.0, %v2794
        %v2796 = vpop.f32.mrb[0].mxu0
        %v2797 = vpop.f32.mrb[0].mxu0
        %v2798 = vadd.f32 0.0, %v2797
        %v2799 = vpop.f32.mrb[0].mxu0
        %2800 = vdwg.mxu0
        %v2801 = vsel %vm1391, %v2645, -inf
        %2802 = vmax.xlane.f32.xlu0 %v2801
        %v2803 = vpop.xlane.xlu0 %2802
        %v2804 = vsel %vm1391, %v2648, -inf
        %2805 = vmax.xlane.f32.xlu0 %v2804
        %v2806 = vpop.xlane.xlu0 %2805
        %v2807 = vsel %vm1391, %v2695, -inf
        %2808 = vmax.xlane.f32.xlu0 %v2807
        %v2809 = vpop.xlane.xlu0 %2808
        %v2810 = vsel %vm1391, %v2698, -inf
        %2811 = vmax.xlane.f32.xlu0 %v2810
        %v2812 = vpop.xlane.xlu0 %2811
        %v2813 = vsel %vm1391, %v2745, -inf
        %2814 = vmax.xlane.f32.xlu0 %v2813
        %v2815 = vpop.xlane.xlu0 %2814
        %v2816 = vsel %vm1391, %v2748, -inf
        %2817 = vmax.xlane.f32.xlu0 %v2816
        %v2818 = vpop.xlane.xlu0 %2817
        %v2819 = vsel %vm1391, %v2795, -inf
        %2820 = vmax.xlane.f32.xlu0 %v2819
        %v2821 = vpop.xlane.xlu0 %2820
        %v2822 = vsel %vm1391, %v2798, -inf
        %2823 = vmax.xlane.f32.xlu0 %v2822
        %v2824 = vpop.xlane.xlu0 %2823
        %v2825 = vsub.f32 %v2645, %v2803
        %v2826 = vsub.f32 %v2648, %v2806
        %v2827 = vsub.f32 %v2695, %v2809
        %v2828 = vsub.f32 %v2698, %v2812
        %v2829 = vsub.f32 %v2745, %v2815
        %v2830 = vsub.f32 %v2748, %v2818
        %v2831 = vsub.f32 %v2795, %v2821
        %v2832 = vsub.f32 %v2798, %v2824
        %v2833 = vmul.f32 %v2825, 1.442695
        %v2834 = vpow.pop %v2833
        %v2835 = vmul.f32 %v2826, 1.442695
        %v2836 = vpow.pop %v2835
        %v2837 = vmul.f32 %v2827, 1.442695
        %v2838 = vpow.pop %v2837
        %v2839 = vmul.f32 %v2828, 1.442695
        %v2840 = vpow.pop %v2839
        %v2841 = vmul.f32 %v2829, 1.442695
        %v2842 = vpow.pop %v2841
        %v2843 = vmul.f32 %v2830, 1.442695
        %v2844 = vpow.pop %v2843
        %v2845 = vmul.f32 %v2831, 1.442695
        %v2846 = vpow.pop %v2845
        %v2847 = vmul.f32 %v2832, 1.442695
        %v2848 = vpow.pop %v2847
        %v2849 = vsel %vm1391, %v2834, 0.0
        %2850 = vadd.xlane.f32.xlu0 %v2849
        %v2851 = vpop.xlane.xlu0 %2850
        %v2852 = vsel %vm1391, %v2836, 0.0
        %2853 = vadd.xlane.f32.xlu0 %v2852
        %v2854 = vpop.xlane.xlu0 %2853
        %v2855 = vsel %vm1391, %v2838, 0.0
        %2856 = vadd.xlane.f32.xlu0 %v2855
        %v2857 = vpop.xlane.xlu0 %2856
        %v2858 = vsel %vm1391, %v2840, 0.0
        %2859 = vadd.xlane.f32.xlu0 %v2858
        %v2860 = vpop.xlane.xlu0 %2859
        %v2861 = vsel %vm1391, %v2842, 0.0
        %2862 = vadd.xlane.f32.xlu0 %v2861
        %v2863 = vpop.xlane.xlu0 %2862
        %v2864 = vsel %vm1391, %v2844, 0.0
        %2865 = vadd.xlane.f32.xlu0 %v2864
        %v2866 = vpop.xlane.xlu0 %2865
        %v2867 = vsel %vm1391, %v2846, 0.0
        %2868 = vadd.xlane.f32.xlu0 %v2867
        %v2869 = vpop.xlane.xlu0 %2868
        %v2870 = vsel %vm1391, %v2848, 0.0
        %2871 = vadd.xlane.f32.xlu0 %v2870
        %v2872 = vpop.xlane.xlu0 %2871
        %v2873 = vrcp.pop %v2851
        %v2874 = vrcp.pop %v2854
        %v2875 = vrcp.pop %v2857
        %v2876 = vrcp.pop %v2860
        %v2877 = vrcp.pop %v2863
        %v2878 = vrcp.pop %v2866
        %v2879 = vrcp.pop %v2869
        %v2880 = vrcp.pop %v2872
        %v2881 = vmul.f32 %v2834, %v2873
        %v2882 = vmul.f32 %v2836, %v2874
        %v2883 = vmul.f32 %v2838, %v2875
        %v2884 = vmul.f32 %v2840, %v2876
        %v2885 = vmul.f32 %v2842, %v2877
        %v2886 = vmul.f32 %v2844, %v2878
        %v2887 = vmul.f32 %v2846, %v2879
        %v2888 = vmul.f32 %v2848, %v2880
        %v2889 = vpack.c.bf16 %v2882, %v2881
        %v2890 = vpack.c.bf16 %v2884, %v2883
        %v2891 = vpack.c.bf16 %v2886, %v2885
        %v2892 = vpack.c.bf16 %v2888, %v2887
        %2893 = vrot.lane.b32.xlu0 %v2597, 64
        %v2894 = vpop.permute.xlu0 %2893
        %v2897 = vsel %vm1391, %v2889, 0
        %2899 = vmatprep.subr.bf16.mxu0 0
        %2900 = vmatpush1.bf16.msra.mxu0 %v2894
        %2901 = vmatprep.subr.bf16.mxu0 0
        %2902 = vmatpush1.bf16.msra.mxu0 0
        %2903 = vmatprep.subr.bf16.mxu0 0
        %2904 = vmatpush1.bf16.msra.mxu0 0
        %2905 = vmatprep.subr.bf16.mxu0 0
        %2906 = vmatpush1.bf16.msra.mxu0 0
        %2907 = vmatprep.subr.bf16.mxu0 0
        %2908 = vmatpush1.bf16.msra.mxu0 0
        %2909 = vmatprep.subr.bf16.mxu0 0
        %2910 = vmatpush1.bf16.msra.mxu0 0
        %2911 = vmatprep.subr.bf16.mxu0 0
        %2912 = vmatpush1.bf16.msra.mxu0 0
        %2913 = vmatprep.subr.bf16.mxu0 0
        %2914 = vmatpush1.bf16.msra.mxu0 0
        %2915 = vmatprep.subr.bf16.mxu0 0
        %2916 = vmatpush1.bf16.msra.mxu0 0
        %2917 = vmatprep.subr.bf16.mxu0 0
        %2918 = vmatpush1.bf16.msra.mxu0 0
        %2919 = vmatprep.subr.bf16.mxu0 0
        %2920 = vmatpush1.bf16.msra.mxu0 0
        %2921 = vmatprep.subr.bf16.mxu0 0
        %2922 = vmatpush1.bf16.msra.mxu0 0
        %2923 = vmatprep.subr.bf16.mxu0 0
        %2924 = vmatpush1.bf16.msra.mxu0 0
        %2925 = vmatprep.subr.bf16.mxu0 0
        %2926 = vmatpush1.bf16.msra.mxu0 0
        %2927 = vmatprep.subr.bf16.mxu0 0
        %2928 = vmatpush1.bf16.msra.mxu0 0
        %2929 = vmatprep.subr.bf16.mxu0 0
        %2930 = vmatpush1.bf16.msra.mxu0 0
        %2931 = vmatprep.mubr.bf16.mxu0 0
        %2932 = vmatmul.mubr.bf16.gmra.mrb[0].mxu0 %v2897
        %v2933 = vpop.f32.mrb[0].mxu0
        %v2934 = vadd.f32 0.0, %v2933
        %v2935 = vpop.f32.mrb[0].mxu0
        %v2936 = vpop.f32.mrb[0].mxu0
        %v2937 = vadd.f32 0.0, %v2936
        %v2938 = vpop.f32.mrb[0].mxu0
        %2939 = vdwg.mxu0
        %2940 = vrot.lane.b32.xlu0 %v2598, 64
        %v2941 = vpop.permute.xlu0 %2940
        %v2944 = vsel %vm1391, %v2890, 0
        %2946 = vmatprep.subr.bf16.mxu0 0
        %2947 = vmatpush1.bf16.msra.mxu0 %v2941
        %2948 = vmatprep.subr.bf16.mxu0 0
        %2949 = vmatpush1.bf16.msra.mxu0 0
        %2950 = vmatprep.subr.bf16.mxu0 0
        %2951 = vmatpush1.bf16.msra.mxu0 0
        %2952 = vmatprep.subr.bf16.mxu0 0
        %2953 = vmatpush1.bf16.msra.mxu0 0
        %2954 = vmatprep.subr.bf16.mxu0 0
        %2955 = vmatpush1.bf16.msra.mxu0 0
        %2956 = vmatprep.subr.bf16.mxu0 0
        %2957 = vmatpush1.bf16.msra.mxu0 0
        %2958 = vmatprep.subr.bf16.mxu0 0
        %2959 = vmatpush1.bf16.msra.mxu0 0
        %2960 = vmatprep.subr.bf16.mxu0 0
        %2961 = vmatpush1.bf16.msra.mxu0 0
        %2962 = vmatprep.subr.bf16.mxu0 0
        %2963 = vmatpush1.bf16.msra.mxu0 0
        %2964 = vmatprep.subr.bf16.mxu0 0
        %2965 = vmatpush1.bf16.msra.mxu0 0
        %2966 = vmatprep.subr.bf16.mxu0 0
        %2967 = vmatpush1.bf16.msra.mxu0 0
        %2968 = vmatprep.subr.bf16.mxu0 0
        %2969 = vmatpush1.bf16.msra.mxu0 0
        %2970 = vmatprep.subr.bf16.mxu0 0
        %2971 = vmatpush1.bf16.msra.mxu0 0
        %2972 = vmatprep.subr.bf16.mxu0 0
        %2973 = vmatpush1.bf16.msra.mxu0 0
        %2974 = vmatprep.subr.bf16.mxu0 0
        %2975 = vmatpush1.bf16.msra.mxu0 0
        %2976 = vmatprep.subr.bf16.mxu0 0
        %2977 = vmatpush1.bf16.msra.mxu0 0
        %2978 = vmatprep.mubr.bf16.mxu0 0
        %2979 = vmatmul.mubr.bf16.gmra.mrb[0].mxu0 %v2944
        %v2980 = vpop.f32.mrb[0].mxu0
        %v2981 = vadd.f32 0.0, %v2980
        %v2982 = vpop.f32.mrb[0].mxu0
        %v2983 = vpop.f32.mrb[0].mxu0
        %v2984 = vadd.f32 0.0, %v2983
        %v2985 = vpop.f32.mrb[0].mxu0
        %2986 = vdwg.mxu0
        %2987 = vrot.lane.b32.xlu0 %v2599, 64
        %v2988 = vpop.permute.xlu0 %2987
        %v2991 = vsel %vm1391, %v2891, 0
        %2993 = vmatprep.subr.bf16.mxu0 0
        %2994 = vmatpush1.bf16.msra.mxu0 %v2988
        %2995 = vmatprep.subr.bf16.mxu0 0
        %2996 = vmatpush1.bf16.msra.mxu0 0
        %2997 = vmatprep.subr.bf16.mxu0 0
        %2998 = vmatpush1.bf16.msra.mxu0 0
        %2999 = vmatprep.subr.bf16.mxu0 0
        %3000 = vmatpush1.bf16.msra.mxu0 0
        %3001 = vmatprep.subr.bf16.mxu0 0
        %3002 = vmatpush1.bf16.msra.mxu0 0
        %3003 = vmatprep.subr.bf16.mxu0 0
        %3004 = vmatpush1.bf16.msra.mxu0 0
        %3005 = vmatprep.subr.bf16.mxu0 0
        %3006 = vmatpush1.bf16.msra.mxu0 0
        %3007 = vmatprep.subr.bf16.mxu0 0
        %3008 = vmatpush1.bf16.msra.mxu0 0
        %3009 = vmatprep.subr.bf16.mxu0 0
        %3010 = vmatpush1.bf16.msra.mxu0 0
        %3011 = vmatprep.subr.bf16.mxu0 0
        %3012 = vmatpush1.bf16.msra.mxu0 0
        %3013 = vmatprep.subr.bf16.mxu0 0
        %3014 = vmatpush1.bf16.msra.mxu0 0
        %3015 = vmatprep.subr.bf16.mxu0 0
        %3016 = vmatpush1.bf16.msra.mxu0 0
        %3017 = vmatprep.subr.bf16.mxu0 0
        %3018 = vmatpush1.bf16.msra.mxu0 0
        %3019 = vmatprep.subr.bf16.mxu0 0
        %3020 = vmatpush1.bf16.msra.mxu0 0
        %3021 = vmatprep.subr.bf16.mxu0 0
        %3022 = vmatpush1.bf16.msra.mxu0 0
        %3023 = vmatprep.subr.bf16.mxu0 0
        %3024 = vmatpush1.bf16.msra.mxu0 0
        %3025 = vmatprep.mubr.bf16.mxu0 0
        %3026 = vmatmul.mubr.bf16.gmra.mrb[0].mxu0 %v2991
        %v3027 = vpop.f32.mrb[0].mxu0
        %v3028 = vadd.f32 0.0, %v3027
        %v3029 = vpop.f32.mrb[0].mxu0
        %v3030 = vpop.f32.mrb[0].mxu0
        %v3031 = vadd.f32 0.0, %v3030
        %v3032 = vpop.f32.mrb[0].mxu0
        %3033 = vdwg.mxu0
        %3034 = vrot.lane.b32.xlu0 %v2600, 64
        %v3035 = vpop.permute.xlu0 %3034
        %v3038 = vsel %vm1391, %v2892, 0
        %3040 = vmatprep.subr.bf16.mxu0 0
        %3041 = vmatpush1.bf16.msra.mxu0 %v3035
        %3042 = vmatprep.subr.bf16.mxu0 0
        %3043 = vmatpush1.bf16.msra.mxu0 0
        %3044 = vmatprep.subr.bf16.mxu0 0
        %3045 = vmatpush1.bf16.msra.mxu0 0
        %3046 = vmatprep.subr.bf16.mxu0 0
        %3047 = vmatpush1.bf16.msra.mxu0 0
        %3048 = vmatprep.subr.bf16.mxu0 0
        %3049 = vmatpush1.bf16.msra.mxu0 0
        %3050 = vmatprep.subr.bf16.mxu0 0
        %3051 = vmatpush1.bf16.msra.mxu0 0
        %3052 = vmatprep.subr.bf16.mxu0 0
        %3053 = vmatpush1.bf16.msra.mxu0 0
        %3054 = vmatprep.subr.bf16.mxu0 0
        %3055 = vmatpush1.bf16.msra.mxu0 0
        %3056 = vmatprep.subr.bf16.mxu0 0
        %3057 = vmatpush1.bf16.msra.mxu0 0
        %3058 = vmatprep.subr.bf16.mxu0 0
        %3059 = vmatpush1.bf16.msra.mxu0 0
        %3060 = vmatprep.subr.bf16.mxu0 0
        %3061 = vmatpush1.bf16.msra.mxu0 0
        %3062 = vmatprep.subr.bf16.mxu0 0
        %3063 = vmatpush1.bf16.msra.mxu0 0
        %3064 = vmatprep.subr.bf16.mxu0 0
        %3065 = vmatpush1.bf16.msra.mxu0 0
        %3066 = vmatprep.subr.bf16.mxu0 0
        %3067 = vmatpush1.bf16.msra.mxu0 0
        %3068 = vmatprep.subr.bf16.mxu0 0
        %3069 = vmatpush1.bf16.msra.mxu0 0
        %3070 = vmatprep.subr.bf16.mxu0 0
        %3071 = vmatpush1.bf16.msra.mxu0 0
        %3072 = vmatprep.mubr.bf16.mxu0 0
        %3073 = vmatmul.mubr.bf16.gmra.mrb[0].mxu0 %v3038
        %v3074 = vpop.f32.mrb[0].mxu0
        %v3075 = vadd.f32 0.0, %v3074
        %v3076 = vpop.f32.mrb[0].mxu0
        %v3077 = vpop.f32.mrb[0].mxu0
        %v3078 = vadd.f32 0.0, %v3077
        %v3079 = vpop.f32.mrb[0].mxu0
        %3080 = vdwg.mxu0
        %v3081 = vpack.c.bf16 %v2937, %v2934
        %v3082 = vpack.c.bf16 %v2984, %v2981
        %v3083 = vpack.c.bf16 %v3031, %v3028
        %v3084 = vpack.c.bf16 %v3078, %v3075
        %v3086 = vsel %vm1193, %v3081, 0
        %3088 = vmatprep.subr.bf16.mxu0 0
        %3089 = vmatpush1.bf16.msra.mxu0 %v1681
        %3090 = vmatprep.subr.bf16.mxu0 0
        %3091 = vmatpush1.bf16.msra.mxu0 0
        %3092 = vmatprep.subr.bf16.mxu0 0
        %3093 = vmatpush1.bf16.msra.mxu0 0
        %3094 = vmatprep.subr.bf16.mxu0 0
        %3095 = vmatpush1.bf16.msra.mxu0 0
        %3096 = vmatprep.subr.bf16.mxu0 0
        %3097 = vmatpush1.bf16.msra.mxu0 0
        %3098 = vmatprep.subr.bf16.mxu0 0
        %3099 = vmatpush1.bf16.msra.mxu0 0
        %3100 = vmatprep.subr.bf16.mxu0 0
        %3101 = vmatpush1.bf16.msra.mxu0 0
        %3102 = vmatprep.subr.bf16.mxu0 0
        %3103 = vmatpush1.bf16.msra.mxu0 0
        %3104 = vmatprep.subr.bf16.mxu0 0
        %3105 = vmatpush1.bf16.msra.mxu0 0
        %3106 = vmatprep.subr.bf16.mxu0 0
        %3107 = vmatpush1.bf16.msra.mxu0 0
        %3108 = vmatprep.subr.bf16.mxu0 0
        %3109 = vmatpush1.bf16.msra.mxu0 0
        %3110 = vmatprep.subr.bf16.mxu0 0
        %3111 = vmatpush1.bf16.msra.mxu0 0
        %3112 = vmatprep.subr.bf16.mxu0 0
        %3113 = vmatpush1.bf16.msra.mxu0 0
        %3114 = vmatprep.subr.bf16.mxu0 0
        %3115 = vmatpush1.bf16.msra.mxu0 0
        %3116 = vmatprep.subr.bf16.mxu0 0
        %3117 = vmatpush1.bf16.msra.mxu0 0
        %3118 = vmatprep.subr.bf16.mxu0 0
        %3119 = vmatpush1.bf16.msra.mxu0 0
        %3120 = vmatprep.mubr.bf16.mxu0 0
        %3121 = vmatmul.mubr.bf16.gmra.mrb[0].mxu0 %v3086
        %v3122 = vpop.f32.mrb[0].mxu0
        %v3123 = vadd.f32 0.0, %v3122
        %v3124 = vpop.f32.mrb[0].mxu0
        %v3125 = vpop.f32.mrb[0].mxu0
        %v3126 = vadd.f32 0.0, %v3125
        %v3127 = vpop.f32.mrb[0].mxu0
        %3128 = vdwg.mxu0
        %v3130 = vsel %vm1193, %v3082, 0
        %3132 = vmatprep.subr.bf16.mxu0 0
        %3133 = vmatpush1.bf16.msra.mxu0 %v1728
        %3134 = vmatprep.subr.bf16.mxu0 0
        %3135 = vmatpush1.bf16.msra.mxu0 0
        %3136 = vmatprep.subr.bf16.mxu0 0
        %3137 = vmatpush1.bf16.msra.mxu0 0
        %3138 = vmatprep.subr.bf16.mxu0 0
        %3139 = vmatpush1.bf16.msra.mxu0 0
        %3140 = vmatprep.subr.bf16.mxu0 0
        %3141 = vmatpush1.bf16.msra.mxu0 0
        %3142 = vmatprep.subr.bf16.mxu0 0
        %3143 = vmatpush1.bf16.msra.mxu0 0
        %3144 = vmatprep.subr.bf16.mxu0 0
        %3145 = vmatpush1.bf16.msra.mxu0 0
        %3146 = vmatprep.subr.bf16.mxu0 0
        %3147 = vmatpush1.bf16.msra.mxu0 0
        %3148 = vmatprep.subr.bf16.mxu0 0
        %3149 = vmatpush1.bf16.msra.mxu0 0
        %3150 = vmatprep.subr.bf16.mxu0 0
        %3151 = vmatpush1.bf16.msra.mxu0 0
        %3152 = vmatprep.subr.bf16.mxu0 0
        %3153 = vmatpush1.bf16.msra.mxu0 0
        %3154 = vmatprep.subr.bf16.mxu0 0
        %3155 = vmatpush1.bf16.msra.mxu0 0
        %3156 = vmatprep.subr.bf16.mxu0 0
        %3157 = vmatpush1.bf16.msra.mxu0 0
        %3158 = vmatprep.subr.bf16.mxu0 0
        %3159 = vmatpush1.bf16.msra.mxu0 0
        %3160 = vmatprep.subr.bf16.mxu0 0
        %3161 = vmatpush1.bf16.msra.mxu0 0
        %3162 = vmatprep.subr.bf16.mxu0 0
        %3163 = vmatpush1.bf16.msra.mxu0 0
        %3164 = vmatprep.mubr.bf16.mxu0 0
        %3165 = vmatmul.mubr.bf16.gmra.mrb[0].mxu0 %v3130
        %v3166 = vpop.f32.mrb[0].mxu0
        %v3167 = vadd.f32 0.0, %v3166
        %v3168 = vpop.f32.mrb[0].mxu0
        %v3169 = vpop.f32.mrb[0].mxu0
        %v3170 = vadd.f32 0.0, %v3169
        %v3171 = vpop.f32.mrb[0].mxu0
        %3172 = vdwg.mxu0
        %v3174 = vsel %vm1193, %v3083, 0
        %3176 = vmatprep.subr.bf16.mxu0 0
        %3177 = vmatpush1.bf16.msra.mxu0 %v1775
        %3178 = vmatprep.subr.bf16.mxu0 0
        %3179 = vmatpush1.bf16.msra.mxu0 0
        %3180 = vmatprep.subr.bf16.mxu0 0
        %3181 = vmatpush1.bf16.msra.mxu0 0
        %3182 = vmatprep.subr.bf16.mxu0 0
        %3183 = vmatpush1.bf16.msra.mxu0 0
        %3184 = vmatprep.subr.bf16.mxu0 0
        %3185 = vmatpush1.bf16.msra.mxu0 0
        %3186 = vmatprep.subr.bf16.mxu0 0
        %3187 = vmatpush1.bf16.msra.mxu0 0
        %3188 = vmatprep.subr.bf16.mxu0 0
        %3189 = vmatpush1.bf16.msra.mxu0 0
        %3190 = vmatprep.subr.bf16.mxu0 0
        %3191 = vmatpush1.bf16.msra.mxu0 0
        %3192 = vmatprep.subr.bf16.mxu0 0
        %3193 = vmatpush1.bf16.msra.mxu0 0
        %3194 = vmatprep.subr.bf16.mxu0 0
        %3195 = vmatpush1.bf16.msra.mxu0 0
        %3196 = vmatprep.subr.bf16.mxu0 0
        %3197 = vmatpush1.bf16.msra.mxu0 0
        %3198 = vmatprep.subr.bf16.mxu0 0
        %3199 = vmatpush1.bf16.msra.mxu0 0
        %3200 = vmatprep.subr.bf16.mxu0 0
        %3201 = vmatpush1.bf16.msra.mxu0 0
        %3202 = vmatprep.subr.bf16.mxu0 0
        %3203 = vmatpush1.bf16.msra.mxu0 0
        %3204 = vmatprep.subr.bf16.mxu0 0
        %3205 = vmatpush1.bf16.msra.mxu0 0
        %3206 = vmatprep.subr.bf16.mxu0 0
        %3207 = vmatpush1.bf16.msra.mxu0 0
        %3208 = vmatprep.mubr.bf16.mxu0 0
        %3209 = vmatmul.mubr.bf16.gmra.mrb[0].mxu0 %v3174
        %v3210 = vpop.f32.mrb[0].mxu0
        %v3211 = vadd.f32 0.0, %v3210
        %v3212 = vpop.f32.mrb[0].mxu0
        %v3213 = vpop.f32.mrb[0].mxu0
        %v3214 = vadd.f32 0.0, %v3213
        %v3215 = vpop.f32.mrb[0].mxu0
        %3216 = vdwg.mxu0
        %v3218 = vsel %vm1193, %v3084, 0
        %3220 = vmatprep.subr.bf16.mxu0 0
        %3221 = vmatpush1.bf16.msra.mxu0 %v1822
        %3222 = vmatprep.subr.bf16.mxu0 0
        %3223 = vmatpush1.bf16.msra.mxu0 0
        %3224 = vmatprep.subr.bf16.mxu0 0
        %3225 = vmatpush1.bf16.msra.mxu0 0
        %3226 = vmatprep.subr.bf16.mxu0 0
        %3227 = vmatpush1.bf16.msra.mxu0 0
        %3228 = vmatprep.subr.bf16.mxu0 0
        %3229 = vmatpush1.bf16.msra.mxu0 0
        %3230 = vmatprep.subr.bf16.mxu0 0
        %3231 = vmatpush1.bf16.msra.mxu0 0
        %3232 = vmatprep.subr.bf16.mxu0 0
        %3233 = vmatpush1.bf16.msra.mxu0 0
        %3234 = vmatprep.subr.bf16.mxu0 0
        %3235 = vmatpush1.bf16.msra.mxu0 0
        %3236 = vmatprep.subr.bf16.mxu0 0
        %3237 = vmatpush1.bf16.msra.mxu0 0
        %3238 = vmatprep.subr.bf16.mxu0 0
        %3239 = vmatpush1.bf16.msra.mxu0 0
        %3240 = vmatprep.subr.bf16.mxu0 0
        %3241 = vmatpush1.bf16.msra.mxu0 0
        %3242 = vmatprep.subr.bf16.mxu0 0
        %3243 = vmatpush1.bf16.msra.mxu0 0
        %3244 = vmatprep.subr.bf16.mxu0 0
        %3245 = vmatpush1.bf16.msra.mxu0 0
        %3246 = vmatprep.subr.bf16.mxu0 0
        %3247 = vmatpush1.bf16.msra.mxu0 0
        %3248 = vmatprep.subr.bf16.mxu0 0
        %3249 = vmatpush1.bf16.msra.mxu0 0
        %3250 = vmatprep.subr.bf16.mxu0 0
        %3251 = vmatpush1.bf16.msra.mxu0 0
        %3252 = vmatprep.mubr.bf16.mxu0 0
        %3253 = vmatmul.mubr.bf16.gmra.mrb[0].mxu0 %v3218
        %v3254 = vpop.f32.mrb[0].mxu0
        %v3255 = vadd.f32 0.0, %v3254
        %v3256 = vpop.f32.mrb[0].mxu0
        %v3257 = vpop.f32.mrb[0].mxu0
        %v3258 = vadd.f32 0.0, %v3257
        %v3259 = vpop.f32.mrb[0].mxu0
        %3260 = vdwg.mxu0
        %v3261 = vsel %vm1084, %v3123, 0.0
        %v3262 = vsel %vm1084, %v3167, 0.0
        %v3263 = vadd.f32 %v3261, %v3262
        %v3264 = vsel %vm1084, %v3211, 0.0
        %v3265 = vadd.f32 %v3263, %v3264
        %v3266 = vsel %vm1084, %v3255, 0.0
        %v3267 = vadd.f32 %v3265, %v3266
        %v3268 = vsel %vm1084, %v3126, 0.0
        %v3269 = vsel %vm1084, %v3170, 0.0
        %v3270 = vadd.f32 %v3268, %v3269
        %v3271 = vsel %vm1084, %v3214, 0.0
        %v3272 = vadd.f32 %v3270, %v3271
        %v3273 = vsel %vm1084, %v3258, 0.0
        %v3274 = vadd.f32 %v3272, %v3273
        %3277 = vrot.lane.b32.xlu0 %v1156, 120
        %v3278 = vpop.permute.xlu0 %3277
        %3279 = vrot.lane.b32.xlu0 %v1159, 120
        %v3280 = vpop.permute.xlu0 %3279
        %3283 = vrot.lane.b32.xlu0 %v1156, 112
        %v3284 = vpop.permute.xlu0 %3283
        %3285 = vrot.lane.b32.xlu0 %v1159, 112
        %v3286 = vpop.permute.xlu0 %3285
        %3289 = vrot.lane.b32.xlu0 %v1156, 104
        %v3290 = vpop.permute.xlu0 %3289
        %3291 = vrot.lane.b32.xlu0 %v1159, 104
        %v3292 = vpop.permute.xlu0 %3291
        %v3295 = vpack.c.bf16 %v1159, %v1156
        %v3296 = vpack.c.bf16 %v3280, %v3278
        %v3297 = vpack.c.bf16 %v3286, %v3284
        %v3298 = vpack.c.bf16 %v3292, %v3290
        %3300 = vrot.lane.b32.xlu0 %v3295, 96
        %v3301 = vpop.permute.xlu0 %3300
        %v3303 = vsel %vm1193, %v3295, 0
        %v3306 = vsel %vm1193, %v3301, 0
        %3308 = vmatprep.subr.bf16.mxu0 0
        %3309 = vmatpush1.bf16.xpose.msra.mxu0 %v3306
        %3310 = vmatprep.subr.bf16.mxu0 0
        %3311 = vmatpush1.bf16.xpose.msra.mxu0 0
        %3312 = vmatprep.subr.bf16.mxu0 0
        %3313 = vmatpush1.bf16.xpose.msra.mxu0 0
        %3314 = vmatprep.subr.bf16.mxu0 0
        %3315 = vmatpush1.bf16.xpose.msra.mxu0 0
        %3316 = vmatprep.subr.bf16.mxu0 0
        %3317 = vmatpush1.bf16.xpose.msra.mxu0 0
        %3318 = vmatprep.subr.bf16.mxu0 0
        %3319 = vmatpush1.bf16.xpose.msra.mxu0 0
        %3320 = vmatprep.subr.bf16.mxu0 0
        %3321 = vmatpush1.bf16.xpose.msra.mxu0 0
        %3322 = vmatprep.subr.bf16.mxu0 0
        %3323 = vmatpush1.bf16.xpose.msra.mxu0 0
        %3324 = vmatprep.subr.bf16.mxu0 0
        %3325 = vmatpush1.bf16.xpose.msra.mxu0 0
        %3326 = vmatprep.subr.bf16.mxu0 0
        %3327 = vmatpush1.bf16.xpose.msra.mxu0 0
        %3328 = vmatprep.subr.bf16.mxu0 0
        %3329 = vmatpush1.bf16.xpose.msra.mxu0 0
        %3330 = vmatprep.subr.bf16.mxu0 0
        %3331 = vmatpush1.bf16.xpose.msra.mxu0 0
        %3332 = vmatprep.subr.bf16.mxu0 0
        %3333 = vmatpush1.bf16.xpose.msra.mxu0 0
        %3334 = vmatprep.subr.bf16.mxu0 0
        %3335 = vmatpush1.bf16.xpose.msra.mxu0 0
        %3336 = vmatprep.subr.bf16.mxu0 0
        %3337 = vmatpush1.bf16.xpose.msra.mxu0 0
        %3338 = vmatprep.subr.bf16.mxu0 0
        %3339 = vmatpush1.bf16.xpose.msra.mxu0 0
        %3340 = vmatprep.mubr.bf16.mxu0 0
        %3341 = vmatmul.mubr.bf16.gmra.mrb[0].mxu0 %v3303
        %v3342 = vpop.f32.mrb[0].mxu0
        %v3343 = vadd.f32 0.0, %v3342
        %v3344 = vpop.f32.mrb[0].mxu0
        %v3345 = vpop.f32.mrb[0].mxu0
        %v3346 = vadd.f32 0.0, %v3345
        %v3347 = vpop.f32.mrb[0].mxu0
        %3348 = vdwg.mxu0
        %3350 = vrot.lane.b32.xlu0 %v3296, 96
        %v3351 = vpop.permute.xlu0 %3350
        %v3353 = vsel %vm1193, %v3296, 0
        %v3356 = vsel %vm1193, %v3351, 0
        %3358 = vmatprep.subr.bf16.mxu0 0
        %3359 = vmatpush1.bf16.xpose.msra.mxu0 %v3356
        %3360 = vmatprep.subr.bf16.mxu0 0
        %3361 = vmatpush1.bf16.xpose.msra.mxu0 0
        %3362 = vmatprep.subr.bf16.mxu0 0
        %3363 = vmatpush1.bf16.xpose.msra.mxu0 0
        %3364 = vmatprep.subr.bf16.mxu0 0
        %3365 = vmatpush1.bf16.xpose.msra.mxu0 0
        %3366 = vmatprep.subr.bf16.mxu0 0
        %3367 = vmatpush1.bf16.xpose.msra.mxu0 0
        %3368 = vmatprep.subr.bf16.mxu0 0
        %3369 = vmatpush1.bf16.xpose.msra.mxu0 0
        %3370 = vmatprep.subr.bf16.mxu0 0
        %3371 = vmatpush1.bf16.xpose.msra.mxu0 0
        %3372 = vmatprep.subr.bf16.mxu0 0
        %3373 = vmatpush1.bf16.xpose.msra.mxu0 0
        %3374 = vmatprep.subr.bf16.mxu0 0
        %3375 = vmatpush1.bf16.xpose.msra.mxu0 0
        %3376 = vmatprep.subr.bf16.mxu0 0
        %3377 = vmatpush1.bf16.xpose.msra.mxu0 0
        %3378 = vmatprep.subr.bf16.mxu0 0
        %3379 = vmatpush1.bf16.xpose.msra.mxu0 0
        %3380 = vmatprep.subr.bf16.mxu0 0
        %3381 = vmatpush1.bf16.xpose.msra.mxu0 0
        %3382 = vmatprep.subr.bf16.mxu0 0
        %3383 = vmatpush1.bf16.xpose.msra.mxu0 0
        %3384 = vmatprep.subr.bf16.mxu0 0
        %3385 = vmatpush1.bf16.xpose.msra.mxu0 0
        %3386 = vmatprep.subr.bf16.mxu0 0
        %3387 = vmatpush1.bf16.xpose.msra.mxu0 0
        %3388 = vmatprep.subr.bf16.mxu0 0
        %3389 = vmatpush1.bf16.xpose.msra.mxu0 0
        %3390 = vmatprep.mubr.bf16.mxu0 0
        %3391 = vmatmul.mubr.bf16.gmra.mrb[0].mxu0 %v3353
        %v3392 = vpop.f32.mrb[0].mxu0
        %v3393 = vadd.f32 0.0, %v3392
        %v3394 = vpop.f32.mrb[0].mxu0
        %v3395 = vpop.f32.mrb[0].mxu0
        %v3396 = vadd.f32 0.0, %v3395
        %v3397 = vpop.f32.mrb[0].mxu0
        %3398 = vdwg.mxu0
        %3400 = vrot.lane.b32.xlu0 %v3297, 96
        %v3401 = vpop.permute.xlu0 %3400
        %v3403 = vsel %vm1193, %v3297, 0
        %v3406 = vsel %vm1193, %v3401, 0
        %3408 = vmatprep.subr.bf16.mxu0 0
        %3409 = vmatpush1.bf16.xpose.msra.mxu0 %v3406
        %3410 = vmatprep.subr.bf16.mxu0 0
        %3411 = vmatpush1.bf16.xpose.msra.mxu0 0
        %3412 = vmatprep.subr.bf16.mxu0 0
        %3413 = vmatpush1.bf16.xpose.msra.mxu0 0
        %3414 = vmatprep.subr.bf16.mxu0 0
        %3415 = vmatpush1.bf16.xpose.msra.mxu0 0
        %3416 = vmatprep.subr.bf16.mxu0 0
        %3417 = vmatpush1.bf16.xpose.msra.mxu0 0
        %3418 = vmatprep.subr.bf16.mxu0 0
        %3419 = vmatpush1.bf16.xpose.msra.mxu0 0
        %3420 = vmatprep.subr.bf16.mxu0 0
        %3421 = vmatpush1.bf16.xpose.msra.mxu0 0
        %3422 = vmatprep.subr.bf16.mxu0 0
        %3423 = vmatpush1.bf16.xpose.msra.mxu0 0
        %3424 = vmatprep.subr.bf16.mxu0 0
        %3425 = vmatpush1.bf16.xpose.msra.mxu0 0
        %3426 = vmatprep.subr.bf16.mxu0 0
        %3427 = vmatpush1.bf16.xpose.msra.mxu0 0
        %3428 = vmatprep.subr.bf16.mxu0 0
        %3429 = vmatpush1.bf16.xpose.msra.mxu0 0
        %3430 = vmatprep.subr.bf16.mxu0 0
        %3431 = vmatpush1.bf16.xpose.msra.mxu0 0
        %3432 = vmatprep.subr.bf16.mxu0 0
        %3433 = vmatpush1.bf16.xpose.msra.mxu0 0
        %3434 = vmatprep.subr.bf16.mxu0 0
        %3435 = vmatpush1.bf16.xpose.msra.mxu0 0
        %3436 = vmatprep.subr.bf16.mxu0 0
        %3437 = vmatpush1.bf16.xpose.msra.mxu0 0
        %3438 = vmatprep.subr.bf16.mxu0 0
        %3439 = vmatpush1.bf16.xpose.msra.mxu0 0
        %3440 = vmatprep.mubr.bf16.mxu0 0
        %3441 = vmatmul.mubr.bf16.gmra.mrb[0].mxu0 %v3403
        %v3442 = vpop.f32.mrb[0].mxu0
        %v3443 = vadd.f32 0.0, %v3442
        %v3444 = vpop.f32.mrb[0].mxu0
        %v3445 = vpop.f32.mrb[0].mxu0
        %v3446 = vadd.f32 0.0, %v3445
        %v3447 = vpop.f32.mrb[0].mxu0
        %3448 = vdwg.mxu0
        %3450 = vrot.lane.b32.xlu0 %v3298, 96
        %v3451 = vpop.permute.xlu0 %3450
        %v3453 = vsel %vm1193, %v3298, 0
        %v3456 = vsel %vm1193, %v3451, 0
        %3458 = vmatprep.subr.bf16.mxu0 0
        %3459 = vmatpush1.bf16.xpose.msra.mxu0 %v3456
        %3460 = vmatprep.subr.bf16.mxu0 0
        %3461 = vmatpush1.bf16.xpose.msra.mxu0 0
        %3462 = vmatprep.subr.bf16.mxu0 0
        %3463 = vmatpush1.bf16.xpose.msra.mxu0 0
        %3464 = vmatprep.subr.bf16.mxu0 0
        %3465 = vmatpush1.bf16.xpose.msra.mxu0 0
        %3466 = vmatprep.subr.bf16.mxu0 0
        %3467 = vmatpush1.bf16.xpose.msra.mxu0 0
        %3468 = vmatprep.subr.bf16.mxu0 0
        %3469 = vmatpush1.bf16.xpose.msra.mxu0 0
        %3470 = vmatprep.subr.bf16.mxu0 0
        %3471 = vmatpush1.bf16.xpose.msra.mxu0 0
        %3472 = vmatprep.subr.bf16.mxu0 0
        %3473 = vmatpush1.bf16.xpose.msra.mxu0 0
        %3474 = vmatprep.subr.bf16.mxu0 0
        %3475 = vmatpush1.bf16.xpose.msra.mxu0 0
        %3476 = vmatprep.subr.bf16.mxu0 0
        %3477 = vmatpush1.bf16.xpose.msra.mxu0 0
        %3478 = vmatprep.subr.bf16.mxu0 0
        %3479 = vmatpush1.bf16.xpose.msra.mxu0 0
        %3480 = vmatprep.subr.bf16.mxu0 0
        %3481 = vmatpush1.bf16.xpose.msra.mxu0 0
        %3482 = vmatprep.subr.bf16.mxu0 0
        %3483 = vmatpush1.bf16.xpose.msra.mxu0 0
        %3484 = vmatprep.subr.bf16.mxu0 0
        %3485 = vmatpush1.bf16.xpose.msra.mxu0 0
        %3486 = vmatprep.subr.bf16.mxu0 0
        %3487 = vmatpush1.bf16.xpose.msra.mxu0 0
        %3488 = vmatprep.subr.bf16.mxu0 0
        %3489 = vmatpush1.bf16.xpose.msra.mxu0 0
        %3490 = vmatprep.mubr.bf16.mxu0 0
        %3491 = vmatmul.mubr.bf16.gmra.mrb[0].mxu0 %v3453
        %v3492 = vpop.f32.mrb[0].mxu0
        %v3493 = vadd.f32 0.0, %v3492
        %v3494 = vpop.f32.mrb[0].mxu0
        %v3495 = vpop.f32.mrb[0].mxu0
        %v3496 = vadd.f32 0.0, %v3495
        %v3497 = vpop.f32.mrb[0].mxu0
        %3498 = vdwg.mxu0
        %v3499 = vsel %vm1391, %v3343, -inf
        %3500 = vmax.xlane.f32.xlu0 %v3499
        %v3501 = vpop.xlane.xlu0 %3500
        %v3502 = vsel %vm1391, %v3346, -inf
        %3503 = vmax.xlane.f32.xlu0 %v3502
        %v3504 = vpop.xlane.xlu0 %3503
        %v3505 = vsel %vm1391, %v3393, -inf
        %3506 = vmax.xlane.f32.xlu0 %v3505
        %v3507 = vpop.xlane.xlu0 %3506
        %v3508 = vsel %vm1391, %v3396, -inf
        %3509 = vmax.xlane.f32.xlu0 %v3508
        %v3510 = vpop.xlane.xlu0 %3509
        %v3511 = vsel %vm1391, %v3443, -inf
        %3512 = vmax.xlane.f32.xlu0 %v3511
        %v3513 = vpop.xlane.xlu0 %3512
        %v3514 = vsel %vm1391, %v3446, -inf
        %3515 = vmax.xlane.f32.xlu0 %v3514
        %v3516 = vpop.xlane.xlu0 %3515
        %v3517 = vsel %vm1391, %v3493, -inf
        %3518 = vmax.xlane.f32.xlu0 %v3517
        %v3519 = vpop.xlane.xlu0 %3518
        %v3520 = vsel %vm1391, %v3496, -inf
        %3521 = vmax.xlane.f32.xlu0 %v3520
        %v3522 = vpop.xlane.xlu0 %3521
        %v3523 = vsub.f32 %v3343, %v3501
        %v3524 = vsub.f32 %v3346, %v3504
        %v3525 = vsub.f32 %v3393, %v3507
        %v3526 = vsub.f32 %v3396, %v3510
        %v3527 = vsub.f32 %v3443, %v3513
        %v3528 = vsub.f32 %v3446, %v3516
        %v3529 = vsub.f32 %v3493, %v3519
        %v3530 = vsub.f32 %v3496, %v3522
        %v3531 = vmul.f32 %v3523, 1.442695
        %v3532 = vpow.pop %v3531
        %v3533 = vmul.f32 %v3524, 1.442695
        %v3534 = vpow.pop %v3533
        %v3535 = vmul.f32 %v3525, 1.442695
        %v3536 = vpow.pop %v3535
        %v3537 = vmul.f32 %v3526, 1.442695
        %v3538 = vpow.pop %v3537
        %v3539 = vmul.f32 %v3527, 1.442695
        %v3540 = vpow.pop %v3539
        %v3541 = vmul.f32 %v3528, 1.442695
        %v3542 = vpow.pop %v3541
        %v3543 = vmul.f32 %v3529, 1.442695
        %v3544 = vpow.pop %v3543
        %v3545 = vmul.f32 %v3530, 1.442695
        %v3546 = vpow.pop %v3545
        %v3547 = vsel %vm1391, %v3532, 0.0
        %3548 = vadd.xlane.f32.xlu0 %v3547
        %v3549 = vpop.xlane.xlu0 %3548
        %v3550 = vsel %vm1391, %v3534, 0.0
        %3551 = vadd.xlane.f32.xlu0 %v3550
        %v3552 = vpop.xlane.xlu0 %3551
        %v3553 = vsel %vm1391, %v3536, 0.0
        %3554 = vadd.xlane.f32.xlu0 %v3553
        %v3555 = vpop.xlane.xlu0 %3554
        %v3556 = vsel %vm1391, %v3538, 0.0
        %3557 = vadd.xlane.f32.xlu0 %v3556
        %v3558 = vpop.xlane.xlu0 %3557
        %v3559 = vsel %vm1391, %v3540, 0.0
        %3560 = vadd.xlane.f32.xlu0 %v3559
        %v3561 = vpop.xlane.xlu0 %3560
        %v3562 = vsel %vm1391, %v3542, 0.0
        %3563 = vadd.xlane.f32.xlu0 %v3562
        %v3564 = vpop.xlane.xlu0 %3563
        %v3565 = vsel %vm1391, %v3544, 0.0
        %3566 = vadd.xlane.f32.xlu0 %v3565
        %v3567 = vpop.xlane.xlu0 %3566
        %v3568 = vsel %vm1391, %v3546, 0.0
        %3569 = vadd.xlane.f32.xlu0 %v3568
        %v3570 = vpop.xlane.xlu0 %3569
        %v3571 = vrcp.pop %v3549
        %v3572 = vrcp.pop %v3552
        %v3573 = vrcp.pop %v3555
        %v3574 = vrcp.pop %v3558
        %v3575 = vrcp.pop %v3561
        %v3576 = vrcp.pop %v3564
        %v3577 = vrcp.pop %v3567
        %v3578 = vrcp.pop %v3570
        %v3579 = vmul.f32 %v3532, %v3571
        %v3580 = vmul.f32 %v3534, %v3572
        %v3581 = vmul.f32 %v3536, %v3573
        %v3582 = vmul.f32 %v3538, %v3574
        %v3583 = vmul.f32 %v3540, %v3575
        %v3584 = vmul.f32 %v3542, %v3576
        %v3585 = vmul.f32 %v3544, %v3577
        %v3586 = vmul.f32 %v3546, %v3578
        %v3587 = vpack.c.bf16 %v3580, %v3579
        %v3588 = vpack.c.bf16 %v3582, %v3581
        %v3589 = vpack.c.bf16 %v3584, %v3583
        %v3590 = vpack.c.bf16 %v3586, %v3585
        %3591 = vrot.lane.b32.xlu0 %v3295, 64
        %v3592 = vpop.permute.xlu0 %3591
        %v3595 = vsel %vm1391, %v3587, 0
        %3597 = vmatprep.subr.bf16.mxu0 0
        %3598 = vmatpush1.bf16.msra.mxu0 %v3592
        %3599 = vmatprep.subr.bf16.mxu0 0
        %3600 = vmatpush1.bf16.msra.mxu0 0
        %3601 = vmatprep.subr.bf16.mxu0 0
        %3602 = vmatpush1.bf16.msra.mxu0 0
        %3603 = vmatprep.subr.bf16.mxu0 0
        %3604 = vmatpush1.bf16.msra.mxu0 0
        %3605 = vmatprep.subr.bf16.mxu0 0
        %3606 = vmatpush1.bf16.msra.mxu0 0
        %3607 = vmatprep.subr.bf16.mxu0 0
        %3608 = vmatpush1.bf16.msra.mxu0 0
        %3609 = vmatprep.subr.bf16.mxu0 0
        %3610 = vmatpush1.bf16.msra.mxu0 0
        %3611 = vmatprep.subr.bf16.mxu0 0
        %3612 = vmatpush1.bf16.msra.mxu0 0
        %3613 = vmatprep.subr.bf16.mxu0 0
        %3614 = vmatpush1.bf16.msra.mxu0 0
        %3615 = vmatprep.subr.bf16.mxu0 0
        %3616 = vmatpush1.bf16.msra.mxu0 0
        %3617 = vmatprep.subr.bf16.mxu0 0
        %3618 = vmatpush1.bf16.msra.mxu0 0
        %3619 = vmatprep.subr.bf16.mxu0 0
        %3620 = vmatpush1.bf16.msra.mxu0 0
        %3621 = vmatprep.subr.bf16.mxu0 0
        %3622 = vmatpush1.bf16.msra.mxu0 0
        %3623 = vmatprep.subr.bf16.mxu0 0
        %3624 = vmatpush1.bf16.msra.mxu0 0
        %3625 = vmatprep.subr.bf16.mxu0 0
        %3626 = vmatpush1.bf16.msra.mxu0 0
        %3627 = vmatprep.subr.bf16.mxu0 0
        %3628 = vmatpush1.bf16.msra.mxu0 0
        %3629 = vmatprep.mubr.bf16.mxu0 0
        %3630 = vmatmul.mubr.bf16.gmra.mrb[0].mxu0 %v3595
        %v3631 = vpop.f32.mrb[0].mxu0
        %v3632 = vadd.f32 0.0, %v3631
        %v3633 = vpop.f32.mrb[0].mxu0
        %v3634 = vpop.f32.mrb[0].mxu0
        %v3635 = vadd.f32 0.0, %v3634
        %v3636 = vpop.f32.mrb[0].mxu0
        %3637 = vdwg.mxu0
        %3638 = vrot.lane.b32.xlu0 %v3296, 64
        %v3639 = vpop.permute.xlu0 %3638
        %v3642 = vsel %vm1391, %v3588, 0
        %3644 = vmatprep.subr.bf16.mxu0 0
        %3645 = vmatpush1.bf16.msra.mxu0 %v3639
        %3646 = vmatprep.subr.bf16.mxu0 0
        %3647 = vmatpush1.bf16.msra.mxu0 0
        %3648 = vmatprep.subr.bf16.mxu0 0
        %3649 = vmatpush1.bf16.msra.mxu0 0
        %3650 = vmatprep.subr.bf16.mxu0 0
        %3651 = vmatpush1.bf16.msra.mxu0 0
        %3652 = vmatprep.subr.bf16.mxu0 0
        %3653 = vmatpush1.bf16.msra.mxu0 0
        %3654 = vmatprep.subr.bf16.mxu0 0
        %3655 = vmatpush1.bf16.msra.mxu0 0
        %3656 = vmatprep.subr.bf16.mxu0 0
        %3657 = vmatpush1.bf16.msra.mxu0 0
        %3658 = vmatprep.subr.bf16.mxu0 0
        %3659 = vmatpush1.bf16.msra.mxu0 0
        %3660 = vmatprep.subr.bf16.mxu0 0
        %3661 = vmatpush1.bf16.msra.mxu0 0
        %3662 = vmatprep.subr.bf16.mxu0 0
        %3663 = vmatpush1.bf16.msra.mxu0 0
        %3664 = vmatprep.subr.bf16.mxu0 0
        %3665 = vmatpush1.bf16.msra.mxu0 0
        %3666 = vmatprep.subr.bf16.mxu0 0
        %3667 = vmatpush1.bf16.msra.mxu0 0
        %3668 = vmatprep.subr.bf16.mxu0 0
        %3669 = vmatpush1.bf16.msra.mxu0 0
        %3670 = vmatprep.subr.bf16.mxu0 0
        %3671 = vmatpush1.bf16.msra.mxu0 0
        %3672 = vmatprep.subr.bf16.mxu0 0
        %3673 = vmatpush1.bf16.msra.mxu0 0
        %3674 = vmatprep.subr.bf16.mxu0 0
        %3675 = vmatpush1.bf16.msra.mxu0 0
        %3676 = vmatprep.mubr.bf16.mxu0 0
        %3677 = vmatmul.mubr.bf16.gmra.mrb[0].mxu0 %v3642
        %v3678 = vpop.f32.mrb[0].mxu0
        %v3679 = vadd.f32 0.0, %v3678
        %v3680 = vpop.f32.mrb[0].mxu0
        %v3681 = vpop.f32.mrb[0].mxu0
        %v3682 = vadd.f32 0.0, %v3681
        %v3683 = vpop.f32.mrb[0].mxu0
        %3684 = vdwg.mxu0
        %3685 = vrot.lane.b32.xlu0 %v3297, 64
        %v3686 = vpop.permute.xlu0 %3685
        %v3689 = vsel %vm1391, %v3589, 0
        %3691 = vmatprep.subr.bf16.mxu0 0
        %3692 = vmatpush1.bf16.msra.mxu0 %v3686
        %3693 = vmatprep.subr.bf16.mxu0 0
        %3694 = vmatpush1.bf16.msra.mxu0 0
        %3695 = vmatprep.subr.bf16.mxu0 0
        %3696 = vmatpush1.bf16.msra.mxu0 0
        %3697 = vmatprep.subr.bf16.mxu0 0
        %3698 = vmatpush1.bf16.msra.mxu0 0
        %3699 = vmatprep.subr.bf16.mxu0 0
        %3700 = vmatpush1.bf16.msra.mxu0 0
        %3701 = vmatprep.subr.bf16.mxu0 0
        %3702 = vmatpush1.bf16.msra.mxu0 0
        %3703 = vmatprep.subr.bf16.mxu0 0
        %3704 = vmatpush1.bf16.msra.mxu0 0
        %3705 = vmatprep.subr.bf16.mxu0 0
        %3706 = vmatpush1.bf16.msra.mxu0 0
        %3707 = vmatprep.subr.bf16.mxu0 0
        %3708 = vmatpush1.bf16.msra.mxu0 0
        %3709 = vmatprep.subr.bf16.mxu0 0
        %3710 = vmatpush1.bf16.msra.mxu0 0
        %3711 = vmatprep.subr.bf16.mxu0 0
        %3712 = vmatpush1.bf16.msra.mxu0 0
        %3713 = vmatprep.subr.bf16.mxu0 0
        %3714 = vmatpush1.bf16.msra.mxu0 0
        %3715 = vmatprep.subr.bf16.mxu0 0
        %3716 = vmatpush1.bf16.msra.mxu0 0
        %3717 = vmatprep.subr.bf16.mxu0 0
        %3718 = vmatpush1.bf16.msra.mxu0 0
        %3719 = vmatprep.subr.bf16.mxu0 0
        %3720 = vmatpush1.bf16.msra.mxu0 0
        %3721 = vmatprep.subr.bf16.mxu0 0
        %3722 = vmatpush1.bf16.msra.mxu0 0
        %3723 = vmatprep.mubr.bf16.mxu0 0
        %3724 = vmatmul.mubr.bf16.gmra.mrb[0].mxu0 %v3689
        %v3725 = vpop.f32.mrb[0].mxu0
        %v3726 = vadd.f32 0.0, %v3725
        %v3727 = vpop.f32.mrb[0].mxu0
        %v3728 = vpop.f32.mrb[0].mxu0
        %v3729 = vadd.f32 0.0, %v3728
        %v3730 = vpop.f32.mrb[0].mxu0
        %3731 = vdwg.mxu0
        %3732 = vrot.lane.b32.xlu0 %v3298, 64
        %v3733 = vpop.permute.xlu0 %3732
        %v3736 = vsel %vm1391, %v3590, 0
        %3738 = vmatprep.subr.bf16.mxu0 0
        %3739 = vmatpush1.bf16.msra.mxu0 %v3733
        %3740 = vmatprep.subr.bf16.mxu0 0
        %3741 = vmatpush1.bf16.msra.mxu0 0
        %3742 = vmatprep.subr.bf16.mxu0 0
        %3743 = vmatpush1.bf16.msra.mxu0 0
        %3744 = vmatprep.subr.bf16.mxu0 0
        %3745 = vmatpush1.bf16.msra.mxu0 0
        %3746 = vmatprep.subr.bf16.mxu0 0
        %3747 = vmatpush1.bf16.msra.mxu0 0
        %3748 = vmatprep.subr.bf16.mxu0 0
        %3749 = vmatpush1.bf16.msra.mxu0 0
        %3750 = vmatprep.subr.bf16.mxu0 0
        %3751 = vmatpush1.bf16.msra.mxu0 0
        %3752 = vmatprep.subr.bf16.mxu0 0
        %3753 = vmatpush1.bf16.msra.mxu0 0
        %3754 = vmatprep.subr.bf16.mxu0 0
        %3755 = vmatpush1.bf16.msra.mxu0 0
        %3756 = vmatprep.subr.bf16.mxu0 0
        %3757 = vmatpush1.bf16.msra.mxu0 0
        %3758 = vmatprep.subr.bf16.mxu0 0
        %3759 = vmatpush1.bf16.msra.mxu0 0
        %3760 = vmatprep.subr.bf16.mxu0 0
        %3761 = vmatpush1.bf16.msra.mxu0 0
        %3762 = vmatprep.subr.bf16.mxu0 0
        %3763 = vmatpush1.bf16.msra.mxu0 0
        %3764 = vmatprep.subr.bf16.mxu0 0
        %3765 = vmatpush1.bf16.msra.mxu0 0
        %3766 = vmatprep.subr.bf16.mxu0 0
        %3767 = vmatpush1.bf16.msra.mxu0 0
        %3768 = vmatprep.subr.bf16.mxu0 0
        %3769 = vmatpush1.bf16.msra.mxu0 0
        %3770 = vmatprep.mubr.bf16.mxu0 0
        %3771 = vmatmul.mubr.bf16.gmra.mrb[0].mxu0 %v3736
        %v3772 = vpop.f32.mrb[0].mxu0
        %v3773 = vadd.f32 0.0, %v3772
        %v3774 = vpop.f32.mrb[0].mxu0
        %v3775 = vpop.f32.mrb[0].mxu0
        %v3776 = vadd.f32 0.0, %v3775
        %v3777 = vpop.f32.mrb[0].mxu0
        %3778 = vdwg.mxu0
        %v3779 = vpack.c.bf16 %v3635, %v3632
        %v3780 = vpack.c.bf16 %v3682, %v3679
        %v3781 = vpack.c.bf16 %v3729, %v3726
        %v3782 = vpack.c.bf16 %v3776, %v3773
        %v3784 = vsel %vm1193, %v3779, 0
        %3786 = vmatprep.subr.bf16.mxu0 0
        %3787 = vmatpush1.bf16.msra.mxu0 %v1681
        %3788 = vmatprep.subr.bf16.mxu0 0
        %3789 = vmatpush1.bf16.msra.mxu0 0
        %3790 = vmatprep.subr.bf16.mxu0 0
        %3791 = vmatpush1.bf16.msra.mxu0 0
        %3792 = vmatprep.subr.bf16.mxu0 0
        %3793 = vmatpush1.bf16.msra.mxu0 0
        %3794 = vmatprep.subr.bf16.mxu0 0
        %3795 = vmatpush1.bf16.msra.mxu0 0
        %3796 = vmatprep.subr.bf16.mxu0 0
        %3797 = vmatpush1.bf16.msra.mxu0 0
        %3798 = vmatprep.subr.bf16.mxu0 0
        %3799 = vmatpush1.bf16.msra.mxu0 0
        %3800 = vmatprep.subr.bf16.mxu0 0
        %3801 = vmatpush1.bf16.msra.mxu0 0
        %3802 = vmatprep.subr.bf16.mxu0 0
        %3803 = vmatpush1.bf16.msra.mxu0 0
        %3804 = vmatprep.subr.bf16.mxu0 0
        %3805 = vmatpush1.bf16.msra.mxu0 0
        %3806 = vmatprep.subr.bf16.mxu0 0
        %3807 = vmatpush1.bf16.msra.mxu0 0
        %3808 = vmatprep.subr.bf16.mxu0 0
        %3809 = vmatpush1.bf16.msra.mxu0 0
        %3810 = vmatprep.subr.bf16.mxu0 0
        %3811 = vmatpush1.bf16.msra.mxu0 0
        %3812 = vmatprep.subr.bf16.mxu0 0
        %3813 = vmatpush1.bf16.msra.mxu0 0
        %3814 = vmatprep.subr.bf16.mxu0 0
        %3815 = vmatpush1.bf16.msra.mxu0 0
        %3816 = vmatprep.subr.bf16.mxu0 0
        %3817 = vmatpush1.bf16.msra.mxu0 0
        %3818 = vmatprep.mubr.bf16.mxu0 0
        %3819 = vmatmul.mubr.bf16.gmra.mrb[0].mxu0 %v3784
        %v3820 = vpop.f32.mrb[0].mxu0
        %v3821 = vadd.f32 0.0, %v3820
        %v3822 = vpop.f32.mrb[0].mxu0
        %v3823 = vpop.f32.mrb[0].mxu0
        %v3824 = vadd.f32 0.0, %v3823
        %v3825 = vpop.f32.mrb[0].mxu0
        %3826 = vdwg.mxu0
        %v3828 = vsel %vm1193, %v3780, 0
        %3830 = vmatprep.subr.bf16.mxu0 0
        %3831 = vmatpush1.bf16.msra.mxu0 %v1728
        %3832 = vmatprep.subr.bf16.mxu0 0
        %3833 = vmatpush1.bf16.msra.mxu0 0
        %3834 = vmatprep.subr.bf16.mxu0 0
        %3835 = vmatpush1.bf16.msra.mxu0 0
        %3836 = vmatprep.subr.bf16.mxu0 0
        %3837 = vmatpush1.bf16.msra.mxu0 0
        %3838 = vmatprep.subr.bf16.mxu0 0
        %3839 = vmatpush1.bf16.msra.mxu0 0
        %3840 = vmatprep.subr.bf16.mxu0 0
        %3841 = vmatpush1.bf16.msra.mxu0 0
        %3842 = vmatprep.subr.bf16.mxu0 0
        %3843 = vmatpush1.bf16.msra.mxu0 0
        %3844 = vmatprep.subr.bf16.mxu0 0
        %3845 = vmatpush1.bf16.msra.mxu0 0
        %3846 = vmatprep.subr.bf16.mxu0 0
        %3847 = vmatpush1.bf16.msra.mxu0 0
        %3848 = vmatprep.subr.bf16.mxu0 0
        %3849 = vmatpush1.bf16.msra.mxu0 0
        %3850 = vmatprep.subr.bf16.mxu0 0
        %3851 = vmatpush1.bf16.msra.mxu0 0
        %3852 = vmatprep.subr.bf16.mxu0 0
        %3853 = vmatpush1.bf16.msra.mxu0 0
        %3854 = vmatprep.subr.bf16.mxu0 0
        %3855 = vmatpush1.bf16.msra.mxu0 0
        %3856 = vmatprep.subr.bf16.mxu0 0
        %3857 = vmatpush1.bf16.msra.mxu0 0
        %3858 = vmatprep.subr.bf16.mxu0 0
        %3859 = vmatpush1.bf16.msra.mxu0 0
        %3860 = vmatprep.subr.bf16.mxu0 0
        %3861 = vmatpush1.bf16.msra.mxu0 0
        %3862 = vmatprep.mubr.bf16.mxu0 0
        %3863 = vmatmul.mubr.bf16.gmra.mrb[0].mxu0 %v3828
        %v3864 = vpop.f32.mrb[0].mxu0
        %v3865 = vadd.f32 0.0, %v3864
        %v3866 = vpop.f32.mrb[0].mxu0
        %v3867 = vpop.f32.mrb[0].mxu0
        %v3868 = vadd.f32 0.0, %v3867
        %v3869 = vpop.f32.mrb[0].mxu0
        %3870 = vdwg.mxu0
        %v3872 = vsel %vm1193, %v3781, 0
        %3874 = vmatprep.subr.bf16.mxu0 0
        %3875 = vmatpush1.bf16.msra.mxu0 %v1775
        %3876 = vmatprep.subr.bf16.mxu0 0
        %3877 = vmatpush1.bf16.msra.mxu0 0
        %3878 = vmatprep.subr.bf16.mxu0 0
        %3879 = vmatpush1.bf16.msra.mxu0 0
        %3880 = vmatprep.subr.bf16.mxu0 0
        %3881 = vmatpush1.bf16.msra.mxu0 0
        %3882 = vmatprep.subr.bf16.mxu0 0
        %3883 = vmatpush1.bf16.msra.mxu0 0
        %3884 = vmatprep.subr.bf16.mxu0 0
        %3885 = vmatpush1.bf16.msra.mxu0 0
        %3886 = vmatprep.subr.bf16.mxu0 0
        %3887 = vmatpush1.bf16.msra.mxu0 0
        %3888 = vmatprep.subr.bf16.mxu0 0
        %3889 = vmatpush1.bf16.msra.mxu0 0
        %3890 = vmatprep.subr.bf16.mxu0 0
        %3891 = vmatpush1.bf16.msra.mxu0 0
        %3892 = vmatprep.subr.bf16.mxu0 0
        %3893 = vmatpush1.bf16.msra.mxu0 0
        %3894 = vmatprep.subr.bf16.mxu0 0
        %3895 = vmatpush1.bf16.msra.mxu0 0
        %3896 = vmatprep.subr.bf16.mxu0 0
        %3897 = vmatpush1.bf16.msra.mxu0 0
        %3898 = vmatprep.subr.bf16.mxu0 0
        %3899 = vmatpush1.bf16.msra.mxu0 0
        %3900 = vmatprep.subr.bf16.mxu0 0
        %3901 = vmatpush1.bf16.msra.mxu0 0
        %3902 = vmatprep.subr.bf16.mxu0 0
        %3903 = vmatpush1.bf16.msra.mxu0 0
        %3904 = vmatprep.subr.bf16.mxu0 0
        %3905 = vmatpush1.bf16.msra.mxu0 0
        %3906 = vmatprep.mubr.bf16.mxu0 0
        %3907 = vmatmul.mubr.bf16.gmra.mrb[0].mxu0 %v3872
        %v3908 = vpop.f32.mrb[0].mxu0
        %v3909 = vadd.f32 0.0, %v3908
        %v3910 = vpop.f32.mrb[0].mxu0
        %v3911 = vpop.f32.mrb[0].mxu0
        %v3912 = vadd.f32 0.0, %v3911
        %v3913 = vpop.f32.mrb[0].mxu0
        %3914 = vdwg.mxu0
        %v3916 = vsel %vm1193, %v3782, 0
        %3918 = vmatprep.subr.bf16.mxu0 0
        %3919 = vmatpush1.bf16.msra.mxu0 %v1822
        %3920 = vmatprep.subr.bf16.mxu0 0
        %3921 = vmatpush1.bf16.msra.mxu0 0
        %3922 = vmatprep.subr.bf16.mxu0 0
        %3923 = vmatpush1.bf16.msra.mxu0 0
        %3924 = vmatprep.subr.bf16.mxu0 0
        %3925 = vmatpush1.bf16.msra.mxu0 0
        %3926 = vmatprep.subr.bf16.mxu0 0
        %3927 = vmatpush1.bf16.msra.mxu0 0
        %3928 = vmatprep.subr.bf16.mxu0 0
        %3929 = vmatpush1.bf16.msra.mxu0 0
        %3930 = vmatprep.subr.bf16.mxu0 0
        %3931 = vmatpush1.bf16.msra.mxu0 0
        %3932 = vmatprep.subr.bf16.mxu0 0
        %3933 = vmatpush1.bf16.msra.mxu0 0
        %3934 = vmatprep.subr.bf16.mxu0 0
        %3935 = vmatpush1.bf16.msra.mxu0 0
        %3936 = vmatprep.subr.bf16.mxu0 0
        %3937 = vmatpush1.bf16.msra.mxu0 0
        %3938 = vmatprep.subr.bf16.mxu0 0
        %3939 = vmatpush1.bf16.msra.mxu0 0
        %3940 = vmatprep.subr.bf16.mxu0 0
        %3941 = vmatpush1.bf16.msra.mxu0 0
        %3942 = vmatprep.subr.bf16.mxu0 0
        %3943 = vmatpush1.bf16.msra.mxu0 0
        %3944 = vmatprep.subr.bf16.mxu0 0
        %3945 = vmatpush1.bf16.msra.mxu0 0
        %3946 = vmatprep.subr.bf16.mxu0 0
        %3947 = vmatpush1.bf16.msra.mxu0 0
        %3948 = vmatprep.subr.bf16.mxu0 0
        %3949 = vmatpush1.bf16.msra.mxu0 0
        %3950 = vmatprep.mubr.bf16.mxu0 0
        %3951 = vmatmul.mubr.bf16.gmra.mrb[0].mxu0 %v3916
        %v3952 = vpop.f32.mrb[0].mxu0
        %v3953 = vadd.f32 0.0, %v3952
        %v3954 = vpop.f32.mrb[0].mxu0
        %v3955 = vpop.f32.mrb[0].mxu0
        %v3956 = vadd.f32 0.0, %v3955
        %v3957 = vpop.f32.mrb[0].mxu0
        %3958 = vdwg.mxu0
        %v3959 = vsel %vm1084, %v3821, 0.0
        %v3960 = vsel %vm1084, %v3865, 0.0
        %v3961 = vadd.f32 %v3959, %v3960
        %v3962 = vsel %vm1084, %v3909, 0.0
        %v3963 = vadd.f32 %v3961, %v3962
        %v3964 = vsel %vm1084, %v3953, 0.0
        %v3965 = vadd.f32 %v3963, %v3964
        %v3966 = vsel %vm1084, %v3824, 0.0
        %v3967 = vsel %vm1084, %v3868, 0.0
        %v3968 = vadd.f32 %v3966, %v3967
        %v3969 = vsel %vm1084, %v3912, 0.0
        %v3970 = vadd.f32 %v3968, %v3969
        %v3971 = vsel %vm1084, %v3956, 0.0
        %v3972 = vadd.f32 %v3970, %v3971
        %v3973 = vld [vmem:[%s764] sm:$0x1]
        %v3975 = vlaneseq
        %v3976 = vshrl.u32 %v3975, 7
        %v3977 = vsub.s32 0, %v3976
        %v3978 = vrot.slane %v3973, %v3977
        %v3980 = vadd.f32 %v1871, %v3978
        %v3981 = vadd.f32 %v1878, %v3978
        %v3982 = vadd.f32 %v2569, %v3978
        %v3983 = vadd.f32 %v2576, %v3978
        %v3984 = vadd.f32 %v3267, %v3978
        %v3985 = vadd.f32 %v3274, %v3978
        %v3986 = vadd.f32 %v3965, %v3978
        %v3987 = vadd.f32 %v3972, %v3978
        %v3988 = vadd.f32 %v3980, %v1049
        %v3989 = vadd.f32 %v3981, %v1050
        %v3990 = vadd.f32 %v3982, %v1051
        %v3991 = vadd.f32 %v3983, %v1052
        %v3992 = vadd.f32 %v3984, %v1053
        %v3993 = vadd.f32 %v3985, %v1054
        %v3994 = vadd.f32 %v3986, %v1055
        %v3995 = vadd.f32 %v3987, %v1056
        %v3996 = vld [vmem:[%s772] sm:$0x1]
        %v3997 = vld [vmem:[%s780] sm:$0x1]
        %v3998 = vsel %vm1084, %v3988, 0.0
        %3999 = vadd.xlane.f32.xlu0 %v3998
        %v4000 = vpop.xlane.xlu0 %3999
        %v4001 = vsel %vm1084, %v3989, 0.0
        %4002 = vadd.xlane.f32.xlu0 %v4001
        %v4003 = vpop.xlane.xlu0 %4002
        %v4004 = vsel %vm1084, %v3990, 0.0
        %4005 = vadd.xlane.f32.xlu0 %v4004
        %v4006 = vpop.xlane.xlu0 %4005
        %v4007 = vsel %vm1084, %v3991, 0.0
        %4008 = vadd.xlane.f32.xlu0 %v4007
        %v4009 = vpop.xlane.xlu0 %4008
        %v4010 = vsel %vm1084, %v3992, 0.0
        %4011 = vadd.xlane.f32.xlu0 %v4010
        %v4012 = vpop.xlane.xlu0 %4011
        %v4013 = vsel %vm1084, %v3993, 0.0
        %4014 = vadd.xlane.f32.xlu0 %v4013
        %v4015 = vpop.xlane.xlu0 %4014
        %v4016 = vsel %vm1084, %v3994, 0.0
        %4017 = vadd.xlane.f32.xlu0 %v4016
        %v4018 = vpop.xlane.xlu0 %4017
        %v4019 = vsel %vm1084, %v3995, 0.0
        %4020 = vadd.xlane.f32.xlu0 %v4019
        %v4021 = vpop.xlane.xlu0 %4020
        %v4022 = vrcp.pop 32.0
        %v4023 = vmul.f32 %v4000, %v4022
        %v4024 = vmul.f32 %v4003, %v4022
        %v4025 = vmul.f32 %v4006, %v4022
        %v4026 = vmul.f32 %v4009, %v4022
        %v4027 = vmul.f32 %v4012, %v4022
        %v4028 = vmul.f32 %v4015, %v4022
        %v4029 = vmul.f32 %v4018, %v4022
        %v4030 = vmul.f32 %v4021, %v4022
        %v4031 = vsub.f32 %v3988, %v4023
        %v4032 = vsub.f32 %v3989, %v4024
        %v4033 = vsub.f32 %v3990, %v4025
        %v4034 = vsub.f32 %v3991, %v4026
        %v4035 = vsub.f32 %v3992, %v4027
        %v4036 = vsub.f32 %v3993, %v4028
        %v4037 = vsub.f32 %v3994, %v4029
        %v4038 = vsub.f32 %v3995, %v4030
        %v4039 = vmul.f32 %v4031, %v4031
        %v4040 = vmul.f32 %v4032, %v4032
        %v4041 = vmul.f32 %v4033, %v4033
        %v4042 = vmul.f32 %v4034, %v4034
        %v4043 = vmul.f32 %v4035, %v4035
        %v4044 = vmul.f32 %v4036, %v4036
        %v4045 = vmul.f32 %v4037, %v4037
        %v4046 = vmul.f32 %v4038, %v4038
        %v4047 = vsel %vm1084, %v4039, 0.0
        %4048 = vadd.xlane.f32.xlu0 %v4047
        %v4049 = vpop.xlane.xlu0 %4048
        %v4050 = vsel %vm1084, %v4040, 0.0
        %4051 = vadd.xlane.f32.xlu0 %v4050
        %v4052 = vpop.xlane.xlu0 %4051
        %v4053 = vsel %vm1084, %v4041, 0.0
        %4054 = vadd.xlane.f32.xlu0 %v4053
        %v4055 = vpop.xlane.xlu0 %4054
        %v4056 = vsel %vm1084, %v4042, 0.0
        %4057 = vadd.xlane.f32.xlu0 %v4056
        %v4058 = vpop.xlane.xlu0 %4057
        %v4059 = vsel %vm1084, %v4043, 0.0
        %4060 = vadd.xlane.f32.xlu0 %v4059
        %v4061 = vpop.xlane.xlu0 %4060
        %v4062 = vsel %vm1084, %v4044, 0.0
        %4063 = vadd.xlane.f32.xlu0 %v4062
        %v4064 = vpop.xlane.xlu0 %4063
        %v4065 = vsel %vm1084, %v4045, 0.0
        %4066 = vadd.xlane.f32.xlu0 %v4065
        %v4067 = vpop.xlane.xlu0 %4066
        %v4068 = vsel %vm1084, %v4046, 0.0
        %4069 = vadd.xlane.f32.xlu0 %v4068
        %v4070 = vpop.xlane.xlu0 %4069
        %v4071 = vmul.f32 %v4049, %v4022
        %v4072 = vmul.f32 %v4052, %v4022
        %v4073 = vmul.f32 %v4055, %v4022
        %v4074 = vmul.f32 %v4058, %v4022
        %v4075 = vmul.f32 %v4061, %v4022
        %v4076 = vmul.f32 %v4064, %v4022
        %v4077 = vmul.f32 %v4067, %v4022
        %v4078 = vmul.f32 %v4070, %v4022
        %v4079 = vadd.f32 %v4071, 1e-05
        %v4080 = vadd.f32 %v4072, 1e-05
        %v4081 = vadd.f32 %v4073, 1e-05
        %v4082 = vadd.f32 %v4074, 1e-05
        %v4083 = vadd.f32 %v4075, 1e-05
        %v4084 = vadd.f32 %v4076, 1e-05
        %v4085 = vadd.f32 %v4077, 1e-05
        %v4086 = vadd.f32 %v4078, 1e-05
        %v4087 = vrsqrt.pop %v4079
        %v4088 = vrsqrt.pop %v4080
        %v4089 = vrsqrt.pop %v4081
        %v4090 = vrsqrt.pop %v4082
        %v4091 = vrsqrt.pop %v4083
        %v4092 = vrsqrt.pop %v4084
        %v4093 = vrsqrt.pop %v4085
        %v4094 = vrsqrt.pop %v4086
        %v4095 = vmul.f32 %v4031, %v4087
        %v4096 = vmul.f32 %v4032, %v4088
        %v4097 = vmul.f32 %v4033, %v4089
        %v4098 = vmul.f32 %v4034, %v4090
        %v4099 = vmul.f32 %v4035, %v4091
        %v4100 = vmul.f32 %v4036, %v4092
        %v4101 = vmul.f32 %v4037, %v4093
        %v4102 = vmul.f32 %v4038, %v4094
        %v4104 = vlaneseq
        %v4105 = vshrl.u32 %v4104, 7
        %v4106 = vsub.s32 0, %v4105
        %v4107 = vrot.slane %v3996, %v4106
        %v4109 = vmul.f32 %v4095, %v4107
        %v4110 = vmul.f32 %v4096, %v4107
        %v4111 = vmul.f32 %v4097, %v4107
        %v4112 = vmul.f32 %v4098, %v4107
        %v4113 = vmul.f32 %v4099, %v4107
        %v4114 = vmul.f32 %v4100, %v4107
        %v4115 = vmul.f32 %v4101, %v4107
        %v4116 = vmul.f32 %v4102, %v4107
        %v4118 = vlaneseq
        %v4119 = vshrl.u32 %v4118, 7
        %v4120 = vsub.s32 0, %v4119
        %v4121 = vrot.slane %v3997, %v4120
        %v4123 = vadd.f32 %v4109, %v4121
        %v4124 = vadd.f32 %v4110, %v4121
        %v4125 = vadd.f32 %v4111, %v4121
        %v4126 = vadd.f32 %v4112, %v4121
        %v4127 = vadd.f32 %v4113, %v4121
        %v4128 = vadd.f32 %v4114, %v4121
        %v4129 = vadd.f32 %v4115, %v4121
        %v4130 = vadd.f32 %v4116, %v4121
        %v4131 = vld [vmem:[%s789] sm:$0xf]
        %v4132 = vld [vmem:[%s789 + $0x4] sm:$0xf]
        %v4133 = vld [vmem:[%s789 + $0x8] sm:$0xf]
        %v4134 = vld [vmem:[%s789 + $0xc] sm:$0xf]
        %v4135 = vpack.c.bf16 %v4124, %v4123
        %v4136 = vpack.c.bf16 %v4126, %v4125
        %v4137 = vpack.c.bf16 %v4128, %v4127
        %v4138 = vpack.c.bf16 %v4130, %v4129
        %v4139 = vld [vmem:[%s797] sm:$0x1]
        %v4141 = vlaneseq
        %v4142 = vshrl.u32 %v4141, 7
        %v4143 = vsub.s32 0, %v4142
        %v4144 = vrot.slane %v4139, %v4143
        %v4150 = vunpack.c.l.b16 %v4131
        %v4151 = vunpack.c.l.b16 %v4132
        %v4152 = vunpack.c.l.b16 %v4133
        %v4153 = vunpack.c.l.b16 %v4134
        %v4154 = vpack.c.b16 %v4151, %v4150
        %v4155 = vpack.c.b16 %v4153, %v4152
        %v4159 = vsel %vm1084, %v4135, 0
        %v4162 = vsel %vm1084, %v4136, 0
        %v4165 = vsel %vm1084, %v4137, 0
        %v4168 = vsel %vm1084, %v4138, 0
        %4170 = vmatprep.subr.bf16.mxu0 0
        %4171 = vmatpush1.bf16.msra.mxu0 %v4154
        %4172 = vmatprep.subr.bf16.mxu0 0
        %4173 = vmatpush1.bf16.msra.mxu0 %v4155
        %4174 = vmatprep.subr.bf16.mxu0 0
        %4175 = vmatpush1.bf16.msra.mxu0 0
        %4176 = vmatprep.subr.bf16.mxu0 0
        %4177 = vmatpush1.bf16.msra.mxu0 0
        %4178 = vmatprep.subr.bf16.mxu0 0
        %4179 = vmatpush1.bf16.msra.mxu0 0
        %4180 = vmatprep.subr.bf16.mxu0 0
        %4181 = vmatpush1.bf16.msra.mxu0 0
        %4182 = vmatprep.subr.bf16.mxu0 0
        %4183 = vmatpush1.bf16.msra.mxu0 0
        %4184 = vmatprep.subr.bf16.mxu0 0
        %4185 = vmatpush1.bf16.msra.mxu0 0
        %4186 = vmatprep.subr.bf16.mxu0 0
        %4187 = vmatpush1.bf16.msra.mxu0 0
        %4188 = vmatprep.subr.bf16.mxu0 0
        %4189 = vmatpush1.bf16.msra.mxu0 0
        %4190 = vmatprep.subr.bf16.mxu0 0
        %4191 = vmatpush1.bf16.msra.mxu0 0
        %4192 = vmatprep.subr.bf16.mxu0 0
        %4193 = vmatpush1.bf16.msra.mxu0 0
        %4194 = vmatprep.subr.bf16.mxu0 0
        %4195 = vmatpush1.bf16.msra.mxu0 0
        %4196 = vmatprep.subr.bf16.mxu0 0
        %4197 = vmatpush1.bf16.msra.mxu0 0
        %4198 = vmatprep.subr.bf16.mxu0 0
        %4199 = vmatpush1.bf16.msra.mxu0 0
        %4200 = vmatprep.subr.bf16.mxu0 0
        %4201 = vmatpush1.bf16.msra.mxu0 0
        %4202 = vmatprep.mubr.bf16.mxu0 0
        %4203 = vmatmul.mubr.bf16.gmra.mrb[0].mxu0 %v4159
        %v4204 = vpop.f32.mrb[0].mxu0
        %v4205 = vadd.f32 %v4144, %v4204
        %v4206 = vpop.f32.mrb[0].mxu0
        %v4207 = vpop.f32.mrb[0].mxu0
        %v4208 = vadd.f32 %v4144, %v4207
        %v4209 = vpop.f32.mrb[0].mxu0
        %4210 = vmatprep.mubr.bf16.mxu0 0
        %4211 = vmatmul.mubr.bf16.gmra.mrb[0].mxu0 %v4162
        %v4212 = vpop.f32.mrb[0].mxu0
        %v4213 = vadd.f32 %v4144, %v4212
        %v4214 = vpop.f32.mrb[0].mxu0
        %v4215 = vpop.f32.mrb[0].mxu0
        %v4216 = vadd.f32 %v4144, %v4215
        %v4217 = vpop.f32.mrb[0].mxu0
        %4218 = vmatprep.mubr.bf16.mxu0 0
        %4219 = vmatmul.mubr.bf16.gmra.mrb[0].mxu0 %v4165
        %v4220 = vpop.f32.mrb[0].mxu0
        %v4221 = vadd.f32 %v4144, %v4220
        %v4222 = vpop.f32.mrb[0].mxu0
        %v4223 = vpop.f32.mrb[0].mxu0
        %v4224 = vadd.f32 %v4144, %v4223
        %v4225 = vpop.f32.mrb[0].mxu0
        %4226 = vmatprep.mubr.bf16.mxu0 0
        %4227 = vmatmul.mubr.bf16.gmra.mrb[0].mxu0 %v4168
        %v4228 = vpop.f32.mrb[0].mxu0
        %v4229 = vadd.f32 %v4144, %v4228
        %v4230 = vpop.f32.mrb[0].mxu0
        %v4231 = vpop.f32.mrb[0].mxu0
        %v4232 = vadd.f32 %v4144, %v4231
        %v4233 = vpop.f32.mrb[0].mxu0
        %4234 = vdwg.mxu0
        %v4235 = vmax.f32 %v4205, 0.0
        %v4236 = vmax.f32 %v4208, 0.0
        %v4237 = vmax.f32 %v4213, 0.0
        %v4238 = vmax.f32 %v4216, 0.0
        %v4239 = vmax.f32 %v4221, 0.0
        %v4240 = vmax.f32 %v4224, 0.0
        %v4241 = vmax.f32 %v4229, 0.0
        %v4242 = vmax.f32 %v4232, 0.0
        %v4243 = vld [vmem:[%s909] sm:$0xf]
        %v4244 = vld [vmem:[%s909 + $0x4] sm:$0xf]
        %v4245 = vld [vmem:[%s909 + $0x8] sm:$0xf]
        %v4246 = vld [vmem:[%s909 + $0xc] sm:$0xf]
        %v4247 = vld [vmem:[%s909 + $0x10] sm:$0xf]
        %v4248 = vld [vmem:[%s909 + $0x14] sm:$0xf]
        %v4249 = vld [vmem:[%s909 + $0x18] sm:$0xf]
        %v4250 = vld [vmem:[%s909 + $0x1c] sm:$0xf]
        %v4251 = vpack.c.bf16 %v4236, %v4235
        %v4252 = vpack.c.bf16 %v4238, %v4237
        %v4253 = vpack.c.bf16 %v4240, %v4239
        %v4254 = vpack.c.bf16 %v4242, %v4241
        %v4255 = vld [vmem:[%s912] sm:$0x1]
        %v4257 = vlaneseq
        %v4258 = vshrl.u32 %v4257, 7
        %v4259 = vsub.s32 0, %v4258
        %v4260 = vrot.slane %v4255, %v4259
        %v4270 = vunpack.c.l.b16 %v4243
        %v4271 = vunpack.c.l.b16 %v4244
        %v4272 = vunpack.c.l.b16 %v4245
        %v4273 = vunpack.c.l.b16 %v4246
        %v4274 = vunpack.c.l.b16 %v4247
        %v4275 = vunpack.c.l.b16 %v4248
        %v4276 = vunpack.c.l.b16 %v4249
        %v4277 = vunpack.c.l.b16 %v4250
        %v4278 = vpack.c.b16 %v4271, %v4270
        %v4279 = vpack.c.b16 %v4273, %v4272
        %v4280 = vpack.c.b16 %v4275, %v4274
        %v4281 = vpack.c.b16 %v4277, %v4276
        %vm4286 = vcmask 523264
        %v4288 = vsel %vm4286, %v4251, 0
        %v4291 = vsel %vm4286, %v4252, 0
        %v4294 = vsel %vm4286, %v4253, 0
        %v4297 = vsel %vm4286, %v4254, 0
        %4299 = vmatprep.subr.bf16.mxu0 0
        %4300 = vmatpush1.bf16.msra.mxu0 %v4278
        %4301 = vmatprep.subr.bf16.mxu0 0
        %4302 = vmatpush1.bf16.msra.mxu0 %v4279
        %4303 = vmatprep.subr.bf16.mxu0 0
        %4304 = vmatpush1.bf16.msra.mxu0 %v4280
        %4305 = vmatprep.subr.bf16.mxu0 0
        %4306 = vmatpush1.bf16.msra.mxu0 %v4281
        %4307 = vmatprep.subr.bf16.mxu0 0
        %4308 = vmatpush1.bf16.msra.mxu0 0
        %4309 = vmatprep.subr.bf16.mxu0 0
        %4310 = vmatpush1.bf16.msra.mxu0 0
        %4311 = vmatprep.subr.bf16.mxu0 0
        %4312 = vmatpush1.bf16.msra.mxu0 0
        %4313 = vmatprep.subr.bf16.mxu0 0
        %4314 = vmatpush1.bf16.msra.mxu0 0
        %4315 = vmatprep.subr.bf16.mxu0 0
        %4316 = vmatpush1.bf16.msra.mxu0 0
        %4317 = vmatprep.subr.bf16.mxu0 0
        %4318 = vmatpush1.bf16.msra.mxu0 0
        %4319 = vmatprep.subr.bf16.mxu0 0
        %4320 = vmatpush1.bf16.msra.mxu0 0
        %4321 = vmatprep.subr.bf16.mxu0 0
        %4322 = vmatpush1.bf16.msra.mxu0 0
        %4323 = vmatprep.subr.bf16.mxu0 0
        %4324 = vmatpush1.bf16.msra.mxu0 0
        %4325 = vmatprep.subr.bf16.mxu0 0
        %4326 = vmatpush1.bf16.msra.mxu0 0
        %4327 = vmatprep.subr.bf16.mxu0 0
        %4328 = vmatpush1.bf16.msra.mxu0 0
        %4329 = vmatprep.subr.bf16.mxu0 0
        %4330 = vmatpush1.bf16.msra.mxu0 0
        %4331 = vmatprep.mubr.bf16.mxu0 0
        %4332 = vmatmul.mubr.bf16.gmra.mrb[0].mxu0 %v4288
        %v4333 = vpop.f32.mrb[0].mxu0
        %v4334 = vadd.f32 %v4260, %v4333
        %v4335 = vpop.f32.mrb[0].mxu0
        %v4336 = vpop.f32.mrb[0].mxu0
        %v4337 = vadd.f32 %v4260, %v4336
        %v4338 = vpop.f32.mrb[0].mxu0
        %4339 = vmatprep.mubr.bf16.mxu0 0
        %4340 = vmatmul.mubr.bf16.gmra.mrb[0].mxu0 %v4291
        %v4341 = vpop.f32.mrb[0].mxu0
        %v4342 = vadd.f32 %v4260, %v4341
        %v4343 = vpop.f32.mrb[0].mxu0
        %v4344 = vpop.f32.mrb[0].mxu0
        %v4345 = vadd.f32 %v4260, %v4344
        %v4346 = vpop.f32.mrb[0].mxu0
        %4347 = vmatprep.mubr.bf16.mxu0 0
        %4348 = vmatmul.mubr.bf16.gmra.mrb[0].mxu0 %v4294
        %v4349 = vpop.f32.mrb[0].mxu0
        %v4350 = vadd.f32 %v4260, %v4349
        %v4351 = vpop.f32.mrb[0].mxu0
        %v4352 = vpop.f32.mrb[0].mxu0
        %v4353 = vadd.f32 %v4260, %v4352
        %v4354 = vpop.f32.mrb[0].mxu0
        %4355 = vmatprep.mubr.bf16.mxu0 0
        %4356 = vmatmul.mubr.bf16.gmra.mrb[0].mxu0 %v4297
        %v4357 = vpop.f32.mrb[0].mxu0
        %v4358 = vadd.f32 %v4260, %v4357
        %v4359 = vpop.f32.mrb[0].mxu0
        %v4360 = vpop.f32.mrb[0].mxu0
        %v4361 = vadd.f32 %v4260, %v4360
        %v4362 = vpop.f32.mrb[0].mxu0
        %4363 = vdwg.mxu0
        %v4364 = vadd.f32 %v4334, %v4123
        %v4365 = vadd.f32 %v4337, %v4124
        %v4366 = vadd.f32 %v4342, %v4125
        %v4367 = vadd.f32 %v4345, %v4126
        %v4368 = vadd.f32 %v4350, %v4127
        %v4369 = vadd.f32 %v4353, %v4128
        %v4370 = vadd.f32 %v4358, %v4129
        %v4371 = vadd.f32 %v4361, %v4130
        %v4372 = vld [vmem:[%s915] sm:$0x1]
        %v4373 = vld [vmem:[%s918] sm:$0x1]
        %v4374 = vsel %vm1084, %v4364, 0.0
        %4375 = vadd.xlane.f32.xlu0 %v4374
        %v4376 = vpop.xlane.xlu0 %4375
        %v4377 = vsel %vm1084, %v4365, 0.0
        %4378 = vadd.xlane.f32.xlu0 %v4377
        %v4379 = vpop.xlane.xlu0 %4378
        %v4380 = vsel %vm1084, %v4366, 0.0
        %4381 = vadd.xlane.f32.xlu0 %v4380
        %v4382 = vpop.xlane.xlu0 %4381
        %v4383 = vsel %vm1084, %v4367, 0.0
        %4384 = vadd.xlane.f32.xlu0 %v4383
        %v4385 = vpop.xlane.xlu0 %4384
        %v4386 = vsel %vm1084, %v4368, 0.0
        %4387 = vadd.xlane.f32.xlu0 %v4386
        %v4388 = vpop.xlane.xlu0 %4387
        %v4389 = vsel %vm1084, %v4369, 0.0
        %4390 = vadd.xlane.f32.xlu0 %v4389
        %v4391 = vpop.xlane.xlu0 %4390
        %v4392 = vsel %vm1084, %v4370, 0.0
        %4393 = vadd.xlane.f32.xlu0 %v4392
        %v4394 = vpop.xlane.xlu0 %4393
        %v4395 = vsel %vm1084, %v4371, 0.0
        %4396 = vadd.xlane.f32.xlu0 %v4395
        %v4397 = vpop.xlane.xlu0 %4396
        %v4398 = vmul.f32 %v4376, %v4022
        %v4399 = vmul.f32 %v4379, %v4022
        %v4400 = vmul.f32 %v4382, %v4022
        %v4401 = vmul.f32 %v4385, %v4022
        %v4402 = vmul.f32 %v4388, %v4022
        %v4403 = vmul.f32 %v4391, %v4022
        %v4404 = vmul.f32 %v4394, %v4022
        %v4405 = vmul.f32 %v4397, %v4022
        %v4406 = vsub.f32 %v4364, %v4398
        %v4407 = vsub.f32 %v4365, %v4399
        %v4408 = vsub.f32 %v4366, %v4400
        %v4409 = vsub.f32 %v4367, %v4401
        %v4410 = vsub.f32 %v4368, %v4402
        %v4411 = vsub.f32 %v4369, %v4403
        %v4412 = vsub.f32 %v4370, %v4404
        %v4413 = vsub.f32 %v4371, %v4405
        %v4414 = vmul.f32 %v4406, %v4406
        %v4415 = vmul.f32 %v4407, %v4407
        %v4416 = vmul.f32 %v4408, %v4408
        %v4417 = vmul.f32 %v4409, %v4409
        %v4418 = vmul.f32 %v4410, %v4410
        %v4419 = vmul.f32 %v4411, %v4411
        %v4420 = vmul.f32 %v4412, %v4412
        %v4421 = vmul.f32 %v4413, %v4413
        %v4422 = vsel %vm1084, %v4414, 0.0
        %4423 = vadd.xlane.f32.xlu0 %v4422
        %v4424 = vpop.xlane.xlu0 %4423
        %v4425 = vsel %vm1084, %v4415, 0.0
        %4426 = vadd.xlane.f32.xlu0 %v4425
        %v4427 = vpop.xlane.xlu0 %4426
        %v4428 = vsel %vm1084, %v4416, 0.0
        %4429 = vadd.xlane.f32.xlu0 %v4428
        %v4430 = vpop.xlane.xlu0 %4429
        %v4431 = vsel %vm1084, %v4417, 0.0
        %4432 = vadd.xlane.f32.xlu0 %v4431
        %v4433 = vpop.xlane.xlu0 %4432
        %v4434 = vsel %vm1084, %v4418, 0.0
        %4435 = vadd.xlane.f32.xlu0 %v4434
        %v4436 = vpop.xlane.xlu0 %4435
        %v4437 = vsel %vm1084, %v4419, 0.0
        %4438 = vadd.xlane.f32.xlu0 %v4437
        %v4439 = vpop.xlane.xlu0 %4438
        %v4440 = vsel %vm1084, %v4420, 0.0
        %4441 = vadd.xlane.f32.xlu0 %v4440
        %v4442 = vpop.xlane.xlu0 %4441
        %v4443 = vsel %vm1084, %v4421, 0.0
        %4444 = vadd.xlane.f32.xlu0 %v4443
        %v4445 = vpop.xlane.xlu0 %4444
        %v4446 = vmul.f32 %v4424, %v4022
        %v4447 = vmul.f32 %v4427, %v4022
        %v4448 = vmul.f32 %v4430, %v4022
        %v4449 = vmul.f32 %v4433, %v4022
        %v4450 = vmul.f32 %v4436, %v4022
        %v4451 = vmul.f32 %v4439, %v4022
        %v4452 = vmul.f32 %v4442, %v4022
        %v4453 = vmul.f32 %v4445, %v4022
        %v4454 = vadd.f32 %v4446, 1e-05
        %v4455 = vadd.f32 %v4447, 1e-05
        %v4456 = vadd.f32 %v4448, 1e-05
        %v4457 = vadd.f32 %v4449, 1e-05
        %v4458 = vadd.f32 %v4450, 1e-05
        %v4459 = vadd.f32 %v4451, 1e-05
        %v4460 = vadd.f32 %v4452, 1e-05
        %v4461 = vadd.f32 %v4453, 1e-05
        %v4462 = vrsqrt.pop %v4454
        %v4463 = vrsqrt.pop %v4455
        %v4464 = vrsqrt.pop %v4456
        %v4465 = vrsqrt.pop %v4457
        %v4466 = vrsqrt.pop %v4458
        %v4467 = vrsqrt.pop %v4459
        %v4468 = vrsqrt.pop %v4460
        %v4469 = vrsqrt.pop %v4461
        %v4470 = vmul.f32 %v4406, %v4462
        %v4471 = vmul.f32 %v4407, %v4463
        %v4472 = vmul.f32 %v4408, %v4464
        %v4473 = vmul.f32 %v4409, %v4465
        %v4474 = vmul.f32 %v4410, %v4466
        %v4475 = vmul.f32 %v4411, %v4467
        %v4476 = vmul.f32 %v4412, %v4468
        %v4477 = vmul.f32 %v4413, %v4469
        %v4479 = vlaneseq
        %v4480 = vshrl.u32 %v4479, 7
        %v4481 = vsub.s32 0, %v4480
        %v4482 = vrot.slane %v4372, %v4481
        %v4484 = vmul.f32 %v4470, %v4482
        %v4485 = vmul.f32 %v4471, %v4482
        %v4486 = vmul.f32 %v4472, %v4482
        %v4487 = vmul.f32 %v4473, %v4482
        %v4488 = vmul.f32 %v4474, %v4482
        %v4489 = vmul.f32 %v4475, %v4482
        %v4490 = vmul.f32 %v4476, %v4482
        %v4491 = vmul.f32 %v4477, %v4482
        %v4493 = vlaneseq
        %v4494 = vshrl.u32 %v4493, 7
        %v4495 = vsub.s32 0, %v4494
        %v4496 = vrot.slane %v4373, %v4495
        %v4498 = vadd.f32 %v4484, %v4496
        %v4499 = vadd.f32 %v4485, %v4496
        %v4500 = vadd.f32 %v4486, %v4496
        %v4501 = vadd.f32 %v4487, %v4496
        %v4502 = vadd.f32 %v4488, %v4496
        %v4503 = vadd.f32 %v4489, %v4496
        %v4504 = vadd.f32 %v4490, %v4496
        %v4505 = vadd.f32 %v4491, %v4496
        %4506 = vst.msk [vmem:[#allocation2] sm:$0xff] %vm1084, %v4498
        %4507 = vst.msk [vmem:[#allocation2 + $0x8] sm:$0xff] %vm1084, %v4499
        %4508 = vst.msk [vmem:[#allocation2 + $0x10] sm:$0xff] %vm1084, %v4500
        %4509 = vst.msk [vmem:[#allocation2 + $0x18] sm:$0xff] %vm1084, %v4501
        %4510 = vst.msk [vmem:[#allocation2 + $0x20] sm:$0xff] %vm1084, %v4502
        %4511 = vst.msk [vmem:[#allocation2 + $0x28] sm:$0xff] %vm1084, %v4503
        %4512 = vst.msk [vmem:[#allocation2 + $0x30] sm:$0xff] %vm1084, %v4504
        %4513 = vst.msk [vmem:[#allocation2 + $0x38] sm:$0xff] %vm1084, %v4505
        %p4514 = scmp.eq.s32.totalorder %s49, 1
        // Predicated region
        $region129: #{tpu_custom_call.1} parent=87 // pred_check
          %p4515 = pneg %p4514
        $region130: #{tpu_custom_call.1} parent=87 // pred_check_branch
          %4517 = sbr.rel (%p4515) target = $region132
        $region131: #{tpu_custom_call.1} parent=87 // pred_region
          %v4519 = vrot.slane %v4500, 7
          %v4522 = vrot.slane %v4502, 6
          %v4525 = vrot.slane %v4504, 5
          %vm4527 = vcmask 1040384
          %v4528 = vsel %vm4527, %v4498, %v4519
          %vm4529 = vcmask 1041408
          %v4530 = vsel %vm4529, %v4528, %v4522
          %vm4531 = vcmask 1042432
          %v4532 = vsel %vm4531, %v4530, %v4525
          %v4533 = vld [vmem:[%s15] sm:$0xf]
          %v4534 = vld [vmem:[%s15 + $0x4] sm:$0xf]
          %v4535 = vld [vmem:[%s15 + $0x8] sm:$0xf]
          %v4536 = vld [vmem:[%s15 + $0xc] sm:$0xf]
          %v4537 = vpack.c.bf16 %v4532, %v4532
          %v4538 = vld [vmem:[%s16] sm:$0x1]
          %v4540 = vlaneseq
          %v4541 = vshrl.u32 %v4540, 7
          %v4542 = vsub.s32 0, %v4541
          %v4543 = vrot.slane %v4538, %v4542
          %v4549 = vunpack.c.l.b16 %v4533
          %v4550 = vunpack.c.l.b16 %v4534
          %v4551 = vunpack.c.l.b16 %v4535
          %v4552 = vunpack.c.l.b16 %v4536
          %v4553 = vpack.c.b16 %v4550, %v4549
          %v4554 = vpack.c.b16 %v4552, %v4551
          %v4558 = vsel %vm1084, %v4537, 0
          %4560 = vmatprep.subr.bf16.mxu0 0
          %4561 = vmatpush1.bf16.msra.mxu0 %v4553
          %4562 = vmatprep.subr.bf16.mxu0 0
          %4563 = vmatpush1.bf16.msra.mxu0 %v4554
          %4564 = vmatprep.subr.bf16.mxu0 0
          %4565 = vmatpush1.bf16.msra.mxu0 0
          %4566 = vmatprep.subr.bf16.mxu0 0
          %4567 = vmatpush1.bf16.msra.mxu0 0
          %4568 = vmatprep.subr.bf16.mxu0 0
          %4569 = vmatpush1.bf16.msra.mxu0 0
          %4570 = vmatprep.subr.bf16.mxu0 0
          %4571 = vmatpush1.bf16.msra.mxu0 0
          %4572 = vmatprep.subr.bf16.mxu0 0
          %4573 = vmatpush1.bf16.msra.mxu0 0
          %4574 = vmatprep.subr.bf16.mxu0 0
          %4575 = vmatpush1.bf16.msra.mxu0 0
          %4576 = vmatprep.subr.bf16.mxu0 0
          %4577 = vmatpush1.bf16.msra.mxu0 0
          %4578 = vmatprep.subr.bf16.mxu0 0
          %4579 = vmatpush1.bf16.msra.mxu0 0
          %4580 = vmatprep.subr.bf16.mxu0 0
          %4581 = vmatpush1.bf16.msra.mxu0 0
          %4582 = vmatprep.subr.bf16.mxu0 0
          %4583 = vmatpush1.bf16.msra.mxu0 0
          %4584 = vmatprep.subr.bf16.mxu0 0
          %4585 = vmatpush1.bf16.msra.mxu0 0
          %4586 = vmatprep.subr.bf16.mxu0 0
          %4587 = vmatpush1.bf16.msra.mxu0 0
          %4588 = vmatprep.subr.bf16.mxu0 0
          %4589 = vmatpush1.bf16.msra.mxu0 0
          %4590 = vmatprep.subr.bf16.mxu0 0
          %4591 = vmatpush1.bf16.msra.mxu0 0
          %4592 = vmatprep.mubr.bf16.mxu0 0
          %4593 = vmatmul.mubr.bf16.gmra.mrb[0].mxu0 %v4558
          %v4594 = vpop.f32.mrb[0].mxu0
          %v4595 = vadd.f32 %v4543, %v4594
          %v4596 = vpop.f32.mrb[0].mxu0
          %v4597 = vpop.f32.mrb[0].mxu0
          %v4598 = vpop.f32.mrb[0].mxu0
          %4599 = vdwg.mxu0
          %4600 = vst [vmem:[%s897] sm:$0xf] %v4595
        $region132: #{tpu_custom_call.1} parent=87 // pred_fallthru
          _
        %s4601 = sand.u32 %s486, 1
        %s4602 = scalar_lea.sflag [#allocation5], %s4601
        %s4603 = sand.u32 %s486, 1
        %s4604 = smul.addr %s4603, 4
        %s4605 = scalar_lea.vmem [#allocation18], %s4604
        // Predicated region
        $region133: #{tpu_custom_call.1} parent=87 // pred_check
          %p4606 = pneg %p496
        $region134: #{tpu_custom_call.1} parent=87 // pred_check_branch
          %4608 = sbr.rel (%p4606) target = $region136
        $region135: #{tpu_custom_call.1} parent=87 // pred_region
          %s4610 = ssub.s32 64, 64
          %4611 = vsyncadd %s4602, %s4610
          %s4612 = smul.addr %s48, 64
          %s4613 = scalar_lea.hbm %s17, %s4612
          %s4615 = sshll.u32 %s4605, 4
          %s4616 = int_to_ptr.vmem [resolvable:$true] %s4615
          %4618 = dma.vmem_to_hbm [thread:$0]  %s4616, 64, %s4613, %s4602
        $region136: #{tpu_custom_call.1} parent=87 // pred_fallthru
          _
      $region88: #{tpu_custom_call.1} parent=5 // pred_fallthru
        _
      %p4619 = scmp.le.s32.totalorder 2, %s39
      // Predicated region
      $region137: #{tpu_custom_call.1} parent=5 // pred_check
        %p4620 = pneg %p4619
      $region138: #{tpu_custom_call.1} parent=5 // pred_check_branch
        %4622 = sbr.rel (%p4620) target = $region140
      $region139: #{tpu_custom_call.1} parent=5 // pred_region
        %s4623 = ssub.s32 %s39, 2
        // Predicated region
        $region141: #{tpu_custom_call.1} parent=139 // pred_check
          %p4624 = pneg %p502
        $region142: #{tpu_custom_call.1} parent=139 // pred_check_branch
          %4626 = sbr.rel (%p4624) target = $region144
        $region143: #{tpu_custom_call.1} parent=139 // pred_region
          %s4627 = sand.u32 %s487, 1
          %s4628 = scalar_lea.sflag [#allocation5], %s4627
          %s4629 = sand.u32 %s487, 1
          %s4630 = smul.addr %s4629, 4
          %s4631 = scalar_lea.vmem [#allocation18], %s4630
          %4632 = dma.done %s4628, 64
        $region144: #{tpu_custom_call.1} parent=139 // pred_fallthru
          _
      $region140: #{tpu_custom_call.1} parent=5 // pred_fallthru
        _
    $region6: #{tpu_custom_call.1} parent=1 // loop_footer
      %s43 = sadd.s32 1, %s39
    $region7: #{tpu_custom_call.1} parent=1 // loop_footer_branch
      %38 = sbr.rel target = $region3
    $region8: #{tpu_custom_call.1} parent=1 // loop_exit
      _
    %4633 = vsyncpa [#allocation4], 1
    %s4634 = scalar_lea.sflag [#allocation4], 1
    %4635 = vsyncpa %s4634, 1
    %4636 = vsyncpa [#allocation7], 1
    %s4637 = scalar_lea.sflag [#allocation7], 1
    %4638 = vsyncpa %s4637, 1
    %4639 = vsyncpa [#allocation10], 1
    %s4640 = scalar_lea.sflag [#allocation10], 1
    %4641 = vsyncpa %s4640, 1
    %4642 = vsyncpa [#allocation13], 1
    %s4643 = scalar_lea.sflag [#allocation13], 1
    %4644 = vsyncpa %s4643, 1
    %4645 = vsyncpa [#allocation16], 1
    %s4646 = scalar_lea.sflag [#allocation16], 1
    %4647 = vsyncpa %s4646, 1
    %4648 = vsyncpa [#allocation5], 1
    %s4649 = scalar_lea.sflag [#allocation5], 1
    %4650 = vsyncpa %s4649, 1

</llo_original>
